<compile_context>
chip_gen: v7x
topology: tpu7x:2x2x1
jax: 0.10.0
libtpu: 0.0.40
codegen_flags: <defaults>
</compile_context>

<pallas_src>
import functools

import jax
import jax.numpy as jnp
from jax.experimental import pallas as pl
from jax.experimental.pallas import tpu as pltpu


# ------------------------------ fused kernel -------------------------------- #

def _sigmoid(x):
    return 1.0 / (1.0 + jnp.exp(-x))


def _conv_bn_relu(x, w_ref, b_ref, scale_ref, shift_ref, T, BT):
    """Conv1d(kernel=3, padding=1) as one im2col matmul + ReLU + BatchNorm1d(eval).

    x:     (T*BT, Cin) f32, t-major flat (row = t*BT + b), batch zero-padded.
    w_ref: (3*Cin, Cout) bf16, rows grouped [tap(t-1) | tap(t) | tap(t+1)].
    b_ref / scale_ref / shift_ref: (1, Cout) f32.
    Returns (T*BT, Cout) f32.
    """
    Cin = x.shape[1]
    zpad = jnp.zeros((BT, Cin), jnp.float32)
    # Sublane-aligned row shifts (no iota/where masks).
    x_prev = jnp.concatenate([zpad, x[:(T - 1) * BT]], axis=0)   # x[t-1], zeros at t == 0
    x_next = jnp.concatenate([x[BT:], zpad], axis=0)             # x[t+1], zeros at t == T-1
    xcat = jnp.concatenate([x_prev, x, x_next], axis=1)          # (T*BT, 3*Cin) im2col

    acc = jnp.dot(xcat.astype(jnp.bfloat16), w_ref[...],
                  preferred_element_type=jnp.float32)            # bf16 x bf16 -> f32 acc
    acc = acc + b_ref[...]
    acc = jnp.maximum(acc, 0.0)                    # module order: Conv -> ReLU -> BN
    return acc * scale_ref[...] + shift_ref[...]   # BatchNorm1d eval (running stats folded)


def fused_forward_kernel(x_ref,
                         cw0_ref, cb0_ref, cs0_ref, ch0_ref,
                         cw1_ref, cb1_ref, cs1_ref, ch1_ref,
                         cw2_ref, cb2_ref, cs2_ref, ch2_ref,
                         wih_ref, bih_ref, whh_ref,
                         w1_ref, b1_ref, w2_ref, b2_ref,
                         feats_ref, probs_ref,
                         gx_ref,
                         *, T, BT, H):
    # ----------------------------- conv stack (VMEM resident) ----------------------------- #
    h = x_ref[...]                                                    # (T*BT, F) f32
    h = _conv_bn_relu(h, cw0_ref, cb0_ref, cs0_ref, ch0_ref, T, BT)   # (T*BT, 64)
    h = _conv_bn_relu(h, cw1_ref, cb1_ref, cs1_ref, ch1_ref, T, BT)   # (T*BT, 128)
    h = _conv_bn_relu(h, cw2_ref, cb2_ref, cs2_ref, ch2_ref, T, BT)   # (T*BT, 256)

    # -------- BiLSTM: input projection hoisted out of the recurrence, parked in VMEM ------ #
    # gx[:, :4H] = forward gates (i,f,g,o) for time t; gx[:, 4H:] = backward gates for time t.
    gx_ref[...] = (jnp.dot(h.astype(jnp.bfloat16), wih_ref[...],
                           preferred_element_type=jnp.float32) + bih_ref[...])

    whh = whh_ref[...]   # (2H, 8H) bf16 block-diagonal, loaded once, reused every step

    def gate_math(g, c):
        i = _sigmoid(g[:, 0 * H:1 * H])
        f = _sigmoid(g[:, 1 * H:2 * H])
        gg = jnp.tanh(g[:, 2 * H:3 * H])
        o = _sigmoid(g[:, 3 * H:4 * H])
        c_new = f * c + i * gg
        return o * jnp.tanh(c_new), c_new

    h_cat = jnp.zeros((BT, 2 * H), jnp.float32)    # [h_f | h_b]
    c_f = jnp.zeros((BT, H), jnp.float32)
    c_b = jnp.zeros((BT, H), jnp.float32)

    # Fully unrolled time loop (T small); every slice is static and (8,128)-aligned.
    for t in range(T):
        # ONE fused block-diagonal recurrent matmul per step: [h_f|h_b] @ blockdiag(whh_f,whh_b)
        gr = jnp.dot(h_cat.astype(jnp.bfloat16), whh,
                     preferred_element_type=jnp.float32)              # (BT, 8H)
        # Per-step aligned loads from the gx scratch (forward consumes t, backward T-1-t).
        g_f = gx_ref[t * BT:(t + 1) * BT, 0:4 * H] + gr[:, 0:4 * H]
        g_b = gx_ref[(T - 1 - t) * BT:(T - t) * BT, 4 * H:8 * H] + gr[:, 4 * H:8 * H]
        h_f, c_f = gate_math(g_f, c_f)
        h_b, c_b = gate_math(g_b, c_b)
        h_cat = jnp.concatenate([h_f, h_b], axis=1)

    feats_ref[...] = h_cat                         # torch.cat((h[-2], h[-1]), dim=1)

    # ------- classifier: Linear -> ReLU -> Dropout(eval) -> Linear(pad to 128) -> softmax ------- #
    hc = jnp.dot(h_cat.astype(jnp.bfloat16), w1_ref[...],
                 preferred_element_type=jnp.float32) + b1_ref[...]
    hc = jnp.maximum(hc, 0.0)
    # TODO(synk): nn.Dropout is identity in eval/inference mode; training-mode RNG mask omitted.
    logits = jnp.dot(hc.astype(jnp.bfloat16), w2_ref[...],
                     preferred_element_type=jnp.float32) + b2_ref[...]   # pad lanes biased -1e30
    m = jnp.max(logits, axis=1, keepdims=True)
    e = jnp.exp(logits - m)                         # padded lanes underflow to exactly 0
    probs_ref[...] = e / jnp.sum(e, axis=1, keepdims=True)


# -------------------------------- JAX wrapper -------------------------------- #

def _const_index_map(ndim):
    return lambda *_: (0,) * ndim


def cnn_bilstm_forward(x, params):
    """x: (B, T, F) -> {'feats': (B, 2H), 'out': (B, num_classes)} (eval-mode forward)."""
    B, T, Fdim = x.shape
    H = params["H"]
    num_classes = params["num_classes"]
    C_pad = params["cls"]["w2p"].shape[1]

    Bp8 = ((B + 7) // 8) * 8            # sublane multiple
    BT = min(Bp8, 128)                  # batch-tile rows per grid step
    Bp = ((Bp8 + BT - 1) // BT) * BT    # padded batch (multiple of BT)
    n_tiles = Bp // BT

    # Layout plumbing in the wrapper (single HBM pass): (B,T,F) -> per-tile t-major flat rows
    # (n_tiles, T*BT, F), row = t*BT + b_local.
    # TODO(synk): for large B*T*F express this transpose via the BlockSpec index_map instead.
    x_p = jnp.zeros((Bp, T, Fdim), jnp.float32).at[:B].set(x.astype(jnp.float32))
    x_tiles = (x_p.reshape(n_tiles, BT, T, Fdim)
               .transpose(0, 2, 1, 3)
               .reshape(n_tiles, T * BT, Fdim))

    weight_args = []
    for lp in params["conv"]:
        weight_args += [lp["w"], lp["b"], lp["scale"], lp["shift"]]
    weight_args += [params["lstm"]["wih_fb"], params["lstm"]["b_fb"], params["lstm"]["whh_fb"],
                    params["cls"]["w1"], params["cls"]["b1"],
                    params["cls"]["w2p"], params["cls"]["b2p"]]

    in_specs = [pl.BlockSpec((None, T * BT, Fdim), lambda i: (i, 0, 0))]
    # Weights: full-array blocks, constant index_maps -> fetched once per call, not per tile.
    in_specs += [pl.BlockSpec(a.shape, _const_index_map(a.ndim)) for a in weight_args]

    kernel = functools.partial(fused_forward_kernel, T=T, BT=BT, H=H)
    feats_p, probs_p = pl.pallas_call(
        kernel,
        out_shape=(jax.ShapeDtypeStruct((Bp, 2 * H), jnp.float32),
                   jax.ShapeDtypeStruct((Bp, C_pad), jnp.float32)),
        grid_spec=pltpu.PrefetchScalarGridSpec(
            num_scalar_prefetch=0,
            grid=(n_tiles,),
            in_specs=in_specs,
            out_specs=(pl.BlockSpec((BT, 2 * H), lambda i: (i, 0)),
                       pl.BlockSpec((BT, C_pad), lambda i: (i, 0))),
            scratch_shapes=[pltpu.VMEM((T * BT, 8 * H), jnp.float32)],   # gx parking slab
        ),
        compiler_params=pltpu.CompilerParams(
            dimension_semantics=("parallel",),            # batch tiles across TCs (v7x)
            vmem_limit_bytes=32 * 1024 * 1024,            # explicit; well above actual usage
        ),
    )(x_tiles, *weight_args)

    return {"feats": feats_p[:B], "out": probs_p[:B, :num_classes]}


# --------------------------- Parameter construction --------------------------- #

def init_params(key, input_dim, num_classes, hidden=128):
    """Kernel-ready parameter layout.

    If importing from PyTorch:
      * Conv1d weight (Cout, Cin, 3) -> permute(2, 1, 0).reshape(3*Cin, Cout), cast bf16.
      * LSTM weight_ih_l0{,_reverse} (4H, 256) -> transpose to (256, 4H), concat fwd|bwd cols.
      * LSTM weight_hh (4H, H) -> transpose to (H, 4H), placed on the block diagonal below.
      * b_ih + b_hh folded into one bias per direction; gate order (i, f, g, o) preserved.
    """
    keys = iter(jax.random.split(key, 32))
    eps = 1e-5

    conv = []
    for cin, cout in [(input_dim, 64), (64, 128), (128, 256)]:
        w = jax.random.normal(next(keys), (3, cin, cout), jnp.float32) / jnp.sqrt(3.0 * cin)
        w_flat = w.reshape(3 * cin, cout).astype(jnp.bfloat16)     # rows: tap(t-1)|tap(t)|tap(t+1)
        b = jax.random.normal(next(keys), (1, cout), jnp.float32) * 0.01
        # Fresh nn.BatchNorm1d: gamma=1, beta=0, running_mean=0, running_var=1 (eval mode).
        gamma = jnp.ones((1, cout), jnp.float32)
        beta = jnp.zeros((1, cout), jnp.float32)
        rmean = jnp.zeros((1, cout), jnp.float32)
        rvar = jnp.ones((1, cout), jnp.float32)
        scale = gamma / jnp.sqrt(rvar + eps)
        shift = beta - rmean * scale
        conv.append(dict(w=w_flat, b=b, scale=scale, shift=shift))

    H = hidden

    def lstm_direction():
        wih = jax.random.normal(next(keys), (256, 4 * H), jnp.float32) / jnp.sqrt(256.0)
        whh = jax.random.normal(next(keys), (H, 4 * H), jnp.float32) / jnp.sqrt(float(H))
        b = jax.random.normal(next(keys), (1, 4 * H), jnp.float32) * 0.01  # b_ih + b_hh folded
        return wih, whh, b

    wih_f, whh_f, b_f = lstm_direction()
    wih_b, whh_b, b_b = lstm_direction()
    # Input projection: (256, 8H), cols = [fwd i,f,g,o | bwd i,f,g,o].
    wih_fb = jnp.concatenate([wih_f, wih_b], axis=1).astype(jnp.bfloat16)
    b_fb = jnp.concatenate([b_f, b_b], axis=1)                              # (1, 8H) f32
    # Fused recurrent weight: block-diagonal (2H, 8H) so [h_f|h_b] @ whh_fb does both directions.
    whh_fb = jnp.zeros((2 * H, 8 * H), jnp.float32)
    whh_fb = whh_fb.at[0:H, 0:4 * H].set(whh_f).at[H:2 * H, 4 * H:8 * H].set(whh_b)
    lstm = dict(wih_fb=wih_fb, b_fb=b_fb, whh_fb=whh_fb.astype(jnp.bfloat16))

    # Classifier; final layer padded to a lane-dense 128-wide output (pad cols 0, pad bias -1e30).
    C_pad = max(128, ((num_classes + 127) // 128) * 128)
    w1 = (jax.random.normal(next(keys), (2 * H, 128), jnp.float32)
          / jnp.sqrt(2.0 * H)).astype(jnp.bfloat16)
    b1 = jnp.zeros((1, 128), jnp.float32)
    w2 = jax.random.normal(next(keys), (128, num_classes), jnp.float32) / jnp.sqrt(128.0)
    w2p = jnp.zeros((128, C_pad), jnp.float32).at[:, :num_classes].set(w2).astype(jnp.bfloat16)
    b2p = jnp.full((1, C_pad), -1e30, jnp.float32).at[:, :num_classes].set(0.0)
    cls = dict(w1=w1, b1=b1, w2p=w2p, b2p=b2p)

    return dict(conv=conv, lstm=lstm, cls=cls, H=H, num_classes=num_classes)


# ------------------------------------ Main ------------------------------------ #

if __name__ == "__main__":
    B, T, F_DIM, NUM_CLASSES = 2, 8, 16, 5

    key = jax.random.PRNGKey(0)
    k_x, k_p = jax.random.split(key)
    x = jax.random.normal(k_x, (B, T, F_DIM), jnp.float32)
    params = init_params(k_p, F_DIM, NUM_CLASSES)

    fwd = jax.jit(functools.partial(cnn_bilstm_forward, params=params))
    out = fwd(x)
    jax.block_until_ready(out)

    assert out["feats"].shape == (B, 256)
    assert out["out"].shape == (B, NUM_CLASSES)
    assert bool(jnp.all(jnp.isfinite(out["feats"])))
    assert bool(jnp.all(jnp.isfinite(out["out"])))
    assert bool(jnp.allclose(jnp.sum(out["out"], axis=1), 1.0, atol=1e-5))

    print("KERNEL_OK")
</pallas_src>

<mosaic_0001>
module attributes {stable_mosaic.version = 11 : i64} {
  func.func @fused_forward_kernel(%arg0: i32, %arg1: memref<1x64x16xf32, #tpu.memory_space<vmem>>, %arg2: memref<48x64xbf16, #tpu.memory_space<vmem>>, %arg3: memref<1x64xf32, #tpu.memory_space<vmem>>, %arg4: memref<1x64xf32, #tpu.memory_space<vmem>>, %arg5: memref<1x64xf32, #tpu.memory_space<vmem>>, %arg6: memref<192x128xbf16, #tpu.memory_space<vmem>>, %arg7: memref<1x128xf32, #tpu.memory_space<vmem>>, %arg8: memref<1x128xf32, #tpu.memory_space<vmem>>, %arg9: memref<1x128xf32, #tpu.memory_space<vmem>>, %arg10: memref<384x256xbf16, #tpu.memory_space<vmem>>, %arg11: memref<1x256xf32, #tpu.memory_space<vmem>>, %arg12: memref<1x256xf32, #tpu.memory_space<vmem>>, %arg13: memref<1x256xf32, #tpu.memory_space<vmem>>, %arg14: memref<256x1024xbf16, #tpu.memory_space<vmem>>, %arg15: memref<1x1024xf32, #tpu.memory_space<vmem>>, %arg16: memref<256x1024xbf16, #tpu.memory_space<vmem>>, %arg17: memref<256x128xbf16, #tpu.memory_space<vmem>>, %arg18: memref<1x128xf32, #tpu.memory_space<vmem>>, %arg19: memref<128x128xbf16, #tpu.memory_space<vmem>>, %arg20: memref<1x128xf32, #tpu.memory_space<vmem>>, %arg21: memref<8x256xf32, #tpu.memory_space<vmem>>, %arg22: memref<8x128xf32, #tpu.memory_space<vmem>>, %arg23: memref<64x1024xf32, #tpu.memory_space<vmem>>) attributes {dimension_semantics = [#tpu.dimension_semantics<parallel>], iteration_bounds = array<i64: 1>, scalar_prefetch = 0 : i64, scratch_operands = 1 : i64, tpu.core_type = #tpu.core_type<tc>, window_params = [{transform_indices = @transform_0, window_bounds = array<i64: 1, 64, 16>}, {pipeline_mode = #tpu.pipeline_mode<synchronous>, transform_indices = @transform_1, window_bounds = array<i64: 48, 64>}, {pipeline_mode = #tpu.pipeline_mode<synchronous>, transform_indices = @transform_2, window_bounds = array<i64: 1, 64>}, {pipeline_mode = #tpu.pipeline_mode<synchronous>, transform_indices = @transform_3, window_bounds = array<i64: 1, 64>}, {pipeline_mode = #tpu.pipeline_mode<synchronous>, transform_indices = @transform_4, window_bounds = array<i64: 1, 64>}, {pipeline_mode = #tpu.pipeline_mode<synchronous>, transform_indices = @transform_5, window_bounds = array<i64: 192, 128>}, {pipeline_mode = #tpu.pipeline_mode<synchronous>, transform_indices = @transform_6, window_bounds = array<i64: 1, 128>}, {pipeline_mode = #tpu.pipeline_mode<synchronous>, transform_indices = @transform_7, window_bounds = array<i64: 1, 128>}, {pipeline_mode = #tpu.pipeline_mode<synchronous>, transform_indices = @transform_8, window_bounds = array<i64: 1, 128>}, {pipeline_mode = #tpu.pipeline_mode<synchronous>, transform_indices = @transform_9, window_bounds = array<i64: 384, 256>}, {pipeline_mode = #tpu.pipeline_mode<synchronous>, transform_indices = @transform_10, window_bounds = array<i64: 1, 256>}, {pipeline_mode = #tpu.pipeline_mode<synchronous>, transform_indices = @transform_11, window_bounds = array<i64: 1, 256>}, {pipeline_mode = #tpu.pipeline_mode<synchronous>, transform_indices = @transform_12, window_bounds = array<i64: 1, 256>}, {pipeline_mode = #tpu.pipeline_mode<synchronous>, transform_indices = @transform_13, window_bounds = array<i64: 256, 1024>}, {pipeline_mode = #tpu.pipeline_mode<synchronous>, transform_indices = @transform_14, window_bounds = array<i64: 1, 1024>}, {pipeline_mode = #tpu.pipeline_mode<synchronous>, transform_indices = @transform_15, window_bounds = array<i64: 256, 1024>}, {pipeline_mode = #tpu.pipeline_mode<synchronous>, transform_indices = @transform_16, window_bounds = array<i64: 256, 128>}, {pipeline_mode = #tpu.pipeline_mode<synchronous>, transform_indices = @transform_17, window_bounds = array<i64: 1, 128>}, {pipeline_mode = #tpu.pipeline_mode<synchronous>, transform_indices = @transform_18, window_bounds = array<i64: 128, 128>}, {pipeline_mode = #tpu.pipeline_mode<synchronous>, transform_indices = @transform_19, window_bounds = array<i64: 1, 128>}, {transform_indices = @transform_20, window_bounds = array<i64: 8, 256>}, {transform_indices = @transform_21, window_bounds = array<i64: 8, 128>}]} {
    %c0 = arith.constant 0 : index
    %c0_0 = arith.constant 0 : index
    %c0_1 = arith.constant 0 : index
    %0 = vector.load %arg1[%c0, %c0_0, %c0_1] : memref<1x64x16xf32, #tpu.memory_space<vmem>>, vector<1x64x16xf32>
    %1 = vector.shape_cast %0 : vector<1x64x16xf32> to vector<64x16xf32>
    %cst = arith.constant 0.000000e+00 : f32
    %2 = vector.broadcast %cst : f32 to vector<8x16xf32>
    %3 = vector.extract_strided_slice %1 {offsets = [0, 0], sizes = [56, 16], strides = [1, 1]} : vector<64x16xf32> to vector<56x16xf32>
    %4 = tpu.concatenate %2, %3 in 0 : vector<8x16xf32>, vector<56x16xf32> -> vector<64x16xf32>
    %5 = vector.extract_strided_slice %1 {offsets = [8, 0], sizes = [56, 16], strides = [1, 1]} : vector<64x16xf32> to vector<56x16xf32>
    %6 = tpu.concatenate %5, %2 in 0 : vector<56x16xf32>, vector<8x16xf32> -> vector<64x16xf32>
    %7 = tpu.concatenate %4, %1, %6 in 1 : vector<64x16xf32>, vector<64x16xf32>, vector<64x16xf32> -> vector<64x48xf32>
    %8 = arith.truncf %7 : vector<64x48xf32> to vector<64x48xbf16>
    %c0_2 = arith.constant 0 : index
    %c0_3 = arith.constant 0 : index
    %9 = vector.load %arg2[%c0_2, %c0_3] : memref<48x64xbf16, #tpu.memory_space<vmem>>, vector<48x64xbf16>
    %cst_4 = arith.constant dense<0.000000e+00> : vector<64x64xf32>
    %10 = tpu.matmul %8, %9, %cst_4 {dimension_numbers = #tpu.dot_dimension_numbers<[1], [0], [0], [1], [0, 0, 1, 1], [], []>} : vector<64x48xbf16>, vector<48x64xbf16>, vector<64x64xf32> -> vector<64x64xf32>
    %c0_5 = arith.constant 0 : index
    %c0_6 = arith.constant 0 : index
    %11 = vector.load %arg3[%c0_5, %c0_6] : memref<1x64xf32, #tpu.memory_space<vmem>>, vector<1x64xf32>
    %12 = vector.broadcast %11 : vector<1x64xf32> to vector<64x64xf32>
    %13 = arith.addf %10, %12 : vector<64x64xf32>
    %cst_7 = arith.constant 0.000000e+00 : f32
    %14 = vector.broadcast %cst_7 : f32 to vector<64x64xf32>
    %15 = arith.maximumf %13, %14 : vector<64x64xf32>
    %c0_8 = arith.constant 0 : index
    %c0_9 = arith.constant 0 : index
    %16 = vector.load %arg4[%c0_8, %c0_9] : memref<1x64xf32, #tpu.memory_space<vmem>>, vector<1x64xf32>
    %17 = vector.broadcast %16 : vector<1x64xf32> to vector<64x64xf32>
    %18 = arith.mulf %15, %17 : vector<64x64xf32>
    %c0_10 = arith.constant 0 : index
    %c0_11 = arith.constant 0 : index
    %19 = vector.load %arg5[%c0_10, %c0_11] : memref<1x64xf32, #tpu.memory_space<vmem>>, vector<1x64xf32>
    %20 = vector.broadcast %19 : vector<1x64xf32> to vector<64x64xf32>
    %21 = arith.addf %18, %20 : vector<64x64xf32>
    %cst_12 = arith.constant 0.000000e+00 : f32
    %22 = vector.broadcast %cst_12 : f32 to vector<8x64xf32>
    %23 = vector.extract_strided_slice %21 {offsets = [0, 0], sizes = [56, 64], strides = [1, 1]} : vector<64x64xf32> to vector<56x64xf32>
    %24 = tpu.concatenate %22, %23 in 0 : vector<8x64xf32>, vector<56x64xf32> -> vector<64x64xf32>
    %25 = vector.extract_strided_slice %21 {offsets = [8, 0], sizes = [56, 64], strides = [1, 1]} : vector<64x64xf32> to vector<56x64xf32>
    %26 = tpu.concatenate %25, %22 in 0 : vector<56x64xf32>, vector<8x64xf32> -> vector<64x64xf32>
    %27 = tpu.concatenate %24, %21, %26 in 1 : vector<64x64xf32>, vector<64x64xf32>, vector<64x64xf32> -> vector<64x192xf32>
    %28 = arith.truncf %27 : vector<64x192xf32> to vector<64x192xbf16>
    %c0_13 = arith.constant 0 : index
    %c0_14 = arith.constant 0 : index
    %29 = vector.load %arg6[%c0_13, %c0_14] : memref<192x128xbf16, #tpu.memory_space<vmem>>, vector<192x128xbf16>
    %cst_15 = arith.constant dense<0.000000e+00> : vector<64x128xf32>
    %30 = tpu.matmul %28, %29, %cst_15 {dimension_numbers = #tpu.dot_dimension_numbers<[1], [0], [0], [1], [0, 0, 1, 1], [], []>} : vector<64x192xbf16>, vector<192x128xbf16>, vector<64x128xf32> -> vector<64x128xf32>
    %c0_16 = arith.constant 0 : index
    %c0_17 = arith.constant 0 : index
    %31 = vector.load %arg7[%c0_16, %c0_17] : memref<1x128xf32, #tpu.memory_space<vmem>>, vector<1x128xf32>
    %32 = vector.broadcast %31 : vector<1x128xf32> to vector<64x128xf32>
    %33 = arith.addf %30, %32 : vector<64x128xf32>
    %cst_18 = arith.constant 0.000000e+00 : f32
    %34 = vector.broadcast %cst_18 : f32 to vector<64x128xf32>
    %35 = arith.maximumf %33, %34 : vector<64x128xf32>
    %c0_19 = arith.constant 0 : index
    %c0_20 = arith.constant 0 : index
    %36 = vector.load %arg8[%c0_19, %c0_20] : memref<1x128xf32, #tpu.memory_space<vmem>>, vector<1x128xf32>
    %37 = vector.broadcast %36 : vector<1x128xf32> to vector<64x128xf32>
    %38 = arith.mulf %35, %37 : vector<64x128xf32>
    %c0_21 = arith.constant 0 : index
    %c0_22 = arith.constant 0 : index
    %39 = vector.load %arg9[%c0_21, %c0_22] : memref<1x128xf32, #tpu.memory_space<vmem>>, vector<1x128xf32>
    %40 = vector.broadcast %39 : vector<1x128xf32> to vector<64x128xf32>
    %41 = arith.addf %38, %40 : vector<64x128xf32>
    %cst_23 = arith.constant 0.000000e+00 : f32
    %42 = vector.broadcast %cst_23 : f32 to vector<8x128xf32>
    %43 = vector.extract_strided_slice %41 {offsets = [0, 0], sizes = [56, 128], strides = [1, 1]} : vector<64x128xf32> to vector<56x128xf32>
    %44 = tpu.concatenate %42, %43 in 0 : vector<8x128xf32>, vector<56x128xf32> -> vector<64x128xf32>
    %45 = vector.extract_strided_slice %41 {offsets = [8, 0], sizes = [56, 128], strides = [1, 1]} : vector<64x128xf32> to vector<56x128xf32>
    %46 = tpu.concatenate %45, %42 in 0 : vector<56x128xf32>, vector<8x128xf32> -> vector<64x128xf32>
    %47 = tpu.concatenate %44, %41, %46 in 1 : vector<64x128xf32>, vector<64x128xf32>, vector<64x128xf32> -> vector<64x384xf32>
    %48 = arith.truncf %47 : vector<64x384xf32> to vector<64x384xbf16>
    %c0_24 = arith.constant 0 : index
    %c0_25 = arith.constant 0 : index
    %49 = vector.load %arg10[%c0_24, %c0_25] : memref<384x256xbf16, #tpu.memory_space<vmem>>, vector<384x256xbf16>
    %cst_26 = arith.constant dense<0.000000e+00> : vector<64x256xf32>
    %50 = tpu.matmul %48, %49, %cst_26 {dimension_numbers = #tpu.dot_dimension_numbers<[1], [0], [0], [1], [0, 0, 1, 1], [], []>} : vector<64x384xbf16>, vector<384x256xbf16>, vector<64x256xf32> -> vector<64x256xf32>
    %c0_27 = arith.constant 0 : index
    %c0_28 = arith.constant 0 : index
    %51 = vector.load %arg11[%c0_27, %c0_28] : memref<1x256xf32, #tpu.memory_space<vmem>>, vector<1x256xf32>
    %52 = vector.broadcast %51 : vector<1x256xf32> to vector<64x256xf32>
    %53 = arith.addf %50, %52 : vector<64x256xf32>
    %cst_29 = arith.constant 0.000000e+00 : f32
    %54 = vector.broadcast %cst_29 : f32 to vector<64x256xf32>
    %55 = arith.maximumf %53, %54 : vector<64x256xf32>
    %c0_30 = arith.constant 0 : index
    %c0_31 = arith.constant 0 : index
    %56 = vector.load %arg12[%c0_30, %c0_31] : memref<1x256xf32, #tpu.memory_space<vmem>>, vector<1x256xf32>
    %57 = vector.broadcast %56 : vector<1x256xf32> to vector<64x256xf32>
    %58 = arith.mulf %55, %57 : vector<64x256xf32>
    %c0_32 = arith.constant 0 : index
    %c0_33 = arith.constant 0 : index
    %59 = vector.load %arg13[%c0_32, %c0_33] : memref<1x256xf32, #tpu.memory_space<vmem>>, vector<1x256xf32>
    %60 = vector.broadcast %59 : vector<1x256xf32> to vector<64x256xf32>
    %61 = arith.addf %58, %60 : vector<64x256xf32>
    %62 = arith.truncf %61 : vector<64x256xf32> to vector<64x256xbf16>
    %c0_34 = arith.constant 0 : index
    %c0_35 = arith.constant 0 : index
    %63 = vector.load %arg14[%c0_34, %c0_35] : memref<256x1024xbf16, #tpu.memory_space<vmem>>, vector<256x1024xbf16>
    %cst_36 = arith.constant dense<0.000000e+00> : vector<64x1024xf32>
    %64 = tpu.matmul %62, %63, %cst_36 {dimension_numbers = #tpu.dot_dimension_numbers<[1], [0], [0], [1], [0, 0, 1, 1], [], []>} : vector<64x256xbf16>, vector<256x1024xbf16>, vector<64x1024xf32> -> vector<64x1024xf32>
    %c0_37 = arith.constant 0 : index
    %c0_38 = arith.constant 0 : index
    %65 = vector.load %arg15[%c0_37, %c0_38] : memref<1x1024xf32, #tpu.memory_space<vmem>>, vector<1x1024xf32>
    %66 = vector.broadcast %65 : vector<1x1024xf32> to vector<64x1024xf32>
    %67 = arith.addf %64, %66 : vector<64x1024xf32>
    %c0_39 = arith.constant 0 : index
    %c0_40 = arith.constant 0 : index
    %68 = vector.load %arg23[%c0_39, %c0_40] : memref<64x1024xf32, #tpu.memory_space<vmem>>, vector<64x1024xf32>
    tpu.vector_store %arg23[%c0_39, %c0_40], %67 {strides = array<i32>} : memref<64x1024xf32, #tpu.memory_space<vmem>>, vector<64x1024xf32>,
    %c0_41 = arith.constant 0 : index
    %c0_42 = arith.constant 0 : index
    %69 = vector.load %arg16[%c0_41, %c0_42] : memref<256x1024xbf16, #tpu.memory_space<vmem>>, vector<256x1024xbf16>
    %cst_43 = arith.constant 0.000000e+00 : f32
    %70 = vector.broadcast %cst_43 : f32 to vector<8x256xf32>
    %cst_44 = arith.constant 0.000000e+00 : f32
    %71 = vector.broadcast %cst_44 : f32 to vector<8x128xf32>
    %cst_45 = arith.constant 0.000000e+00 : f32
    %72 = vector.broadcast %cst_45 : f32 to vector<8x128xf32>
    %73 = arith.truncf %70 : vector<8x256xf32> to vector<8x256xbf16>
    %cst_46 = arith.constant dense<0.000000e+00> : vector<8x1024xf32>
    %74 = tpu.matmul %73, %69, %cst_46 {dimension_numbers = #tpu.dot_dimension_numbers<[1], [0], [0], [1], [0, 0, 1, 1], [], []>} : vector<8x256xbf16>, vector<256x1024xbf16>, vector<8x1024xf32> -> vector<8x1024xf32>
    %c0_47 = arith.constant 0 : index
    %c0_48 = arith.constant 0 : index
    %75 = vector.load %arg23[%c0_47, %c0_48] : memref<64x1024xf32, #tpu.memory_space<vmem>>, vector<8x512xf32>
    %76 = vector.extract_strided_slice %74 {offsets = [0, 0], sizes = [8, 512], strides = [1, 1]} : vector<8x1024xf32> to vector<8x512xf32>
    %77 = arith.addf %75, %76 : vector<8x512xf32>
    %c56 = arith.constant 56 : index
    %c512 = arith.constant 512 : index
    %78 = vector.load %arg23[%c56, %c512] : memref<64x1024xf32, #tpu.memory_space<vmem>>, vector<8x512xf32>
    %79 = vector.extract_strided_slice %74 {offsets = [0, 512], sizes = [8, 512], strides = [1, 1]} : vector<8x1024xf32> to vector<8x512xf32>
    %80 = arith.addf %78, %79 : vector<8x512xf32>
    %81 = vector.extract_strided_slice %77 {offsets = [0, 0], sizes = [8, 128], strides = [1, 1]} : vector<8x512xf32> to vector<8x128xf32>
    %cst_49 = arith.constant 0.000000e+00 : f32
    %82 = vector.broadcast %cst_49 : f32 to vector<8x128xf32>
    %83 = arith.subf %82, %81 : vector<8x128xf32>
    %84 = math.exp %83 : vector<8x128xf32>
    %cst_50 = arith.constant 1.000000e+00 : f32
    %85 = vector.broadcast %cst_50 : f32 to vector<8x128xf32>
    %86 = arith.addf %85, %84 : vector<8x128xf32>
    %cst_51 = arith.constant 1.000000e+00 : f32
    %87 = vector.broadcast %cst_51 : f32 to vector<8x128xf32>
    %88 = arith.divf %87, %86 : vector<8x128xf32>
    %89 = vector.extract_strided_slice %77 {offsets = [0, 128], sizes = [8, 128], strides = [1, 1]} : vector<8x512xf32> to vector<8x128xf32>
    %cst_52 = arith.constant 0.000000e+00 : f32
    %90 = vector.broadcast %cst_52 : f32 to vector<8x128xf32>
    %91 = arith.subf %90, %89 : vector<8x128xf32>
    %92 = math.exp %91 : vector<8x128xf32>
    %cst_53 = arith.constant 1.000000e+00 : f32
    %93 = vector.broadcast %cst_53 : f32 to vector<8x128xf32>
    %94 = arith.addf %93, %92 : vector<8x128xf32>
    %cst_54 = arith.constant 1.000000e+00 : f32
    %95 = vector.broadcast %cst_54 : f32 to vector<8x128xf32>
    %96 = arith.divf %95, %94 : vector<8x128xf32>
    %97 = vector.extract_strided_slice %77 {offsets = [0, 256], sizes = [8, 128], strides = [1, 1]} : vector<8x512xf32> to vector<8x128xf32>
    %98 = math.tanh %97 : vector<8x128xf32>
    %99 = vector.extract_strided_slice %77 {offsets = [0, 384], sizes = [8, 128], strides = [1, 1]} : vector<8x512xf32> to vector<8x128xf32>
    %cst_55 = arith.constant 0.000000e+00 : f32
    %100 = vector.broadcast %cst_55 : f32 to vector<8x128xf32>
    %101 = arith.subf %100, %99 : vector<8x128xf32>
    %102 = math.exp %101 : vector<8x128xf32>
    %cst_56 = arith.constant 1.000000e+00 : f32
    %103 = vector.broadcast %cst_56 : f32 to vector<8x128xf32>
    %104 = arith.addf %103, %102 : vector<8x128xf32>
    %cst_57 = arith.constant 1.000000e+00 : f32
    %105 = vector.broadcast %cst_57 : f32 to vector<8x128xf32>
    %106 = arith.divf %105, %104 : vector<8x128xf32>
    %107 = arith.mulf %96, %71 : vector<8x128xf32>
    %108 = arith.mulf %88, %98 : vector<8x128xf32>
    %109 = arith.addf %107, %108 : vector<8x128xf32>
    %110 = math.tanh %109 : vector<8x128xf32>
    %111 = arith.mulf %106, %110 : vector<8x128xf32>
    %112 = vector.extract_strided_slice %80 {offsets = [0, 0], sizes = [8, 128], strides = [1, 1]} : vector<8x512xf32> to vector<8x128xf32>
    %cst_58 = arith.constant 0.000000e+00 : f32
    %113 = vector.broadcast %cst_58 : f32 to vector<8x128xf32>
    %114 = arith.subf %113, %112 : vector<8x128xf32>
    %115 = math.exp %114 : vector<8x128xf32>
    %cst_59 = arith.constant 1.000000e+00 : f32
    %116 = vector.broadcast %cst_59 : f32 to vector<8x128xf32>
    %117 = arith.addf %116, %115 : vector<8x128xf32>
    %cst_60 = arith.constant 1.000000e+00 : f32
    %118 = vector.broadcast %cst_60 : f32 to vector<8x128xf32>
    %119 = arith.divf %118, %117 : vector<8x128xf32>
    %120 = vector.extract_strided_slice %80 {offsets = [0, 128], sizes = [8, 128], strides = [1, 1]} : vector<8x512xf32> to vector<8x128xf32>
    %cst_61 = arith.constant 0.000000e+00 : f32
    %121 = vector.broadcast %cst_61 : f32 to vector<8x128xf32>
    %122 = arith.subf %121, %120 : vector<8x128xf32>
    %123 = math.exp %122 : vector<8x128xf32>
    %cst_62 = arith.constant 1.000000e+00 : f32
    %124 = vector.broadcast %cst_62 : f32 to vector<8x128xf32>
    %125 = arith.addf %124, %123 : vector<8x128xf32>
    %cst_63 = arith.constant 1.000000e+00 : f32
    %126 = vector.broadcast %cst_63 : f32 to vector<8x128xf32>
    %127 = arith.divf %126, %125 : vector<8x128xf32>
    %128 = vector.extract_strided_slice %80 {offsets = [0, 256], sizes = [8, 128], strides = [1, 1]} : vector<8x512xf32> to vector<8x128xf32>
    %129 = math.tanh %128 : vector<8x128xf32>
    %130 = vector.extract_strided_slice %80 {offsets = [0, 384], sizes = [8, 128], strides = [1, 1]} : vector<8x512xf32> to vector<8x128xf32>
    %cst_64 = arith.constant 0.000000e+00 : f32
    %131 = vector.broadcast %cst_64 : f32 to vector<8x128xf32>
    %132 = arith.subf %131, %130 : vector<8x128xf32>
    %133 = math.exp %132 : vector<8x128xf32>
    %cst_65 = arith.constant 1.000000e+00 : f32
    %134 = vector.broadcast %cst_65 : f32 to vector<8x128xf32>
    %135 = arith.addf %134, %133 : vector<8x128xf32>
    %cst_66 = arith.constant 1.000000e+00 : f32
    %136 = vector.broadcast %cst_66 : f32 to vector<8x128xf32>
    %137 = arith.divf %136, %135 : vector<8x128xf32>
    %138 = arith.mulf %127, %72 : vector<8x128xf32>
    %139 = arith.mulf %119, %129 : vector<8x128xf32>
    %140 = arith.addf %138, %139 : vector<8x128xf32>
    %141 = math.tanh %140 : vector<8x128xf32>
    %142 = arith.mulf %137, %141 : vector<8x128xf32>
    %143 = tpu.concatenate %111, %142 in 1 : vector<8x128xf32>, vector<8x128xf32> -> vector<8x256xf32>
    %144 = arith.truncf %143 : vector<8x256xf32> to vector<8x256xbf16>
    %cst_67 = arith.constant dense<0.000000e+00> : vector<8x1024xf32>
    %145 = tpu.matmul %144, %69, %cst_67 {dimension_numbers = #tpu.dot_dimension_numbers<[1], [0], [0], [1], [0, 0, 1, 1], [], []>} : vector<8x256xbf16>, vector<256x1024xbf16>, vector<8x1024xf32> -> vector<8x1024xf32>
    %c8 = arith.constant 8 : index
    %c0_68 = arith.constant 0 : index
    %146 = vector.load %arg23[%c8, %c0_68] : memref<64x1024xf32, #tpu.memory_space<vmem>>, vector<8x512xf32>
    %147 = vector.extract_strided_slice %145 {offsets = [0, 0], sizes = [8, 512], strides = [1, 1]} : vector<8x1024xf32> to vector<8x512xf32>
    %148 = arith.addf %146, %147 : vector<8x512xf32>
    %c48 = arith.constant 48 : index
    %c512_69 = arith.constant 512 : index
    %149 = vector.load %arg23[%c48, %c512_69] : memref<64x1024xf32, #tpu.memory_space<vmem>>, vector<8x512xf32>
    %150 = vector.extract_strided_slice %145 {offsets = [0, 512], sizes = [8, 512], strides = [1, 1]} : vector<8x1024xf32> to vector<8x512xf32>
    %151 = arith.addf %149, %150 : vector<8x512xf32>
    %152 = vector.extract_strided_slice %148 {offsets = [0, 0], sizes = [8, 128], strides = [1, 1]} : vector<8x512xf32> to vector<8x128xf32>
    %cst_70 = arith.constant 0.000000e+00 : f32
    %153 = vector.broadcast %cst_70 : f32 to vector<8x128xf32>
    %154 = arith.subf %153, %152 : vector<8x128xf32>
    %155 = math.exp %154 : vector<8x128xf32>
    %cst_71 = arith.constant 1.000000e+00 : f32
    %156 = vector.broadcast %cst_71 : f32 to vector<8x128xf32>
    %157 = arith.addf %156, %155 : vector<8x128xf32>
    %cst_72 = arith.constant 1.000000e+00 : f32
    %158 = vector.broadcast %cst_72 : f32 to vector<8x128xf32>
    %159 = arith.divf %158, %157 : vector<8x128xf32>
    %160 = vector.extract_strided_slice %148 {offsets = [0, 128], sizes = [8, 128], strides = [1, 1]} : vector<8x512xf32> to vector<8x128xf32>
    %cst_73 = arith.constant 0.000000e+00 : f32
    %161 = vector.broadcast %cst_73 : f32 to vector<8x128xf32>
    %162 = arith.subf %161, %160 : vector<8x128xf32>
    %163 = math.exp %162 : vector<8x128xf32>
    %cst_74 = arith.constant 1.000000e+00 : f32
    %164 = vector.broadcast %cst_74 : f32 to vector<8x128xf32>
    %165 = arith.addf %164, %163 : vector<8x128xf32>
    %cst_75 = arith.constant 1.000000e+00 : f32
    %166 = vector.broadcast %cst_75 : f32 to vector<8x128xf32>
    %167 = arith.divf %166, %165 : vector<8x128xf32>
    %168 = vector.extract_strided_slice %148 {offsets = [0, 256], sizes = [8, 128], strides = [1, 1]} : vector<8x512xf32> to vector<8x128xf32>
    %169 = math.tanh %168 : vector<8x128xf32>
    %170 = vector.extract_strided_slice %148 {offsets = [0, 384], sizes = [8, 128], strides = [1, 1]} : vector<8x512xf32> to vector<8x128xf32>
    %cst_76 = arith.constant 0.000000e+00 : f32
    %171 = vector.broadcast %cst_76 : f32 to vector<8x128xf32>
    %172 = arith.subf %171, %170 : vector<8x128xf32>
    %173 = math.exp %172 : vector<8x128xf32>
    %cst_77 = arith.constant 1.000000e+00 : f32
    %174 = vector.broadcast %cst_77 : f32 to vector<8x128xf32>
    %175 = arith.addf %174, %173 : vector<8x128xf32>
    %cst_78 = arith.constant 1.000000e+00 : f32
    %176 = vector.broadcast %cst_78 : f32 to vector<8x128xf32>
    %177 = arith.divf %176, %175 : vector<8x128xf32>
    %178 = arith.mulf %167, %109 : vector<8x128xf32>
    %179 = arith.mulf %159, %169 : vector<8x128xf32>
    %180 = arith.addf %178, %179 : vector<8x128xf32>
    %181 = math.tanh %180 : vector<8x128xf32>
    %182 = arith.mulf %177, %181 : vector<8x128xf32>
    %183 = vector.extract_strided_slice %151 {offsets = [0, 0], sizes = [8, 128], strides = [1, 1]} : vector<8x512xf32> to vector<8x128xf32>
    %cst_79 = arith.constant 0.000000e+00 : f32
    %184 = vector.broadcast %cst_79 : f32 to vector<8x128xf32>
    %185 = arith.subf %184, %183 : vector<8x128xf32>
    %186 = math.exp %185 : vector<8x128xf32>
    %cst_80 = arith.constant 1.000000e+00 : f32
    %187 = vector.broadcast %cst_80 : f32 to vector<8x128xf32>
    %188 = arith.addf %187, %186 : vector<8x128xf32>
    %cst_81 = arith.constant 1.000000e+00 : f32
    %189 = vector.broadcast %cst_81 : f32 to vector<8x128xf32>
    %190 = arith.divf %189, %188 : vector<8x128xf32>
    %191 = vector.extract_strided_slice %151 {offsets = [0, 128], sizes = [8, 128], strides = [1, 1]} : vector<8x512xf32> to vector<8x128xf32>
    %cst_82 = arith.constant 0.000000e+00 : f32
    %192 = vector.broadcast %cst_82 : f32 to vector<8x128xf32>
    %193 = arith.subf %192, %191 : vector<8x128xf32>
    %194 = math.exp %193 : vector<8x128xf32>
    %cst_83 = arith.constant 1.000000e+00 : f32
    %195 = vector.broadcast %cst_83 : f32 to vector<8x128xf32>
    %196 = arith.addf %195, %194 : vector<8x128xf32>
    %cst_84 = arith.constant 1.000000e+00 : f32
    %197 = vector.broadcast %cst_84 : f32 to vector<8x128xf32>
    %198 = arith.divf %197, %196 : vector<8x128xf32>
    %199 = vector.extract_strided_slice %151 {offsets = [0, 256], sizes = [8, 128], strides = [1, 1]} : vector<8x512xf32> to vector<8x128xf32>
    %200 = math.tanh %199 : vector<8x128xf32>
    %201 = vector.extract_strided_slice %151 {offsets = [0, 384], sizes = [8, 128], strides = [1, 1]} : vector<8x512xf32> to vector<8x128xf32>
    %cst_85 = arith.constant 0.000000e+00 : f32
    %202 = vector.broadcast %cst_85 : f32 to vector<8x128xf32>
    %203 = arith.subf %202, %201 : vector<8x128xf32>
    %204 = math.exp %203 : vector<8x128xf32>
    %cst_86 = arith.constant 1.000000e+00 : f32
    %205 = vector.broadcast %cst_86 : f32 to vector<8x128xf32>
    %206 = arith.addf %205, %204 : vector<8x128xf32>
    %cst_87 = arith.constant 1.000000e+00 : f32
    %207 = vector.broadcast %cst_87 : f32 to vector<8x128xf32>
    %208 = arith.divf %207, %206 : vector<8x128xf32>
    %209 = arith.mulf %198, %140 : vector<8x128xf32>
    %210 = arith.mulf %190, %200 : vector<8x128xf32>
    %211 = arith.addf %209, %210 : vector<8x128xf32>
    %212 = math.tanh %211 : vector<8x128xf32>
    %213 = arith.mulf %208, %212 : vector<8x128xf32>
    %214 = tpu.concatenate %182, %213 in 1 : vector<8x128xf32>, vector<8x128xf32> -> vector<8x256xf32>
    %215 = arith.truncf %214 : vector<8x256xf32> to vector<8x256xbf16>
    %cst_88 = arith.constant dense<0.000000e+00> : vector<8x1024xf32>
    %216 = tpu.matmul %215, %69, %cst_88 {dimension_numbers = #tpu.dot_dimension_numbers<[1], [0], [0], [1], [0, 0, 1, 1], [], []>} : vector<8x256xbf16>, vector<256x1024xbf16>, vector<8x1024xf32> -> vector<8x1024xf32>
    %c16 = arith.constant 16 : index
    %c0_89 = arith.constant 0 : index
    %217 = vector.load %arg23[%c16, %c0_89] : memref<64x1024xf32, #tpu.memory_space<vmem>>, vector<8x512xf32>
    %218 = vector.extract_strided_slice %216 {offsets = [0, 0], sizes = [8, 512], strides = [1, 1]} : vector<8x1024xf32> to vector<8x512xf32>
    %219 = arith.addf %217, %218 : vector<8x512xf32>
    %c40 = arith.constant 40 : index
    %c512_90 = arith.constant 512 : index
    %220 = vector.load %arg23[%c40, %c512_90] : memref<64x1024xf32, #tpu.memory_space<vmem>>, vector<8x512xf32>
    %221 = vector.extract_strided_slice %216 {offsets = [0, 512], sizes = [8, 512], strides = [1, 1]} : vector<8x1024xf32> to vector<8x512xf32>
    %222 = arith.addf %220, %221 : vector<8x512xf32>
    %223 = vector.extract_strided_slice %219 {offsets = [0, 0], sizes = [8, 128], strides = [1, 1]} : vector<8x512xf32> to vector<8x128xf32>
    %cst_91 = arith.constant 0.000000e+00 : f32
    %224 = vector.broadcast %cst_91 : f32 to vector<8x128xf32>
    %225 = arith.subf %224, %223 : vector<8x128xf32>
    %226 = math.exp %225 : vector<8x128xf32>
    %cst_92 = arith.constant 1.000000e+00 : f32
    %227 = vector.broadcast %cst_92 : f32 to vector<8x128xf32>
    %228 = arith.addf %227, %226 : vector<8x128xf32>
    %cst_93 = arith.constant 1.000000e+00 : f32
    %229 = vector.broadcast %cst_93 : f32 to vector<8x128xf32>
    %230 = arith.divf %229, %228 : vector<8x128xf32>
    %231 = vector.extract_strided_slice %219 {offsets = [0, 128], sizes = [8, 128], strides = [1, 1]} : vector<8x512xf32> to vector<8x128xf32>
    %cst_94 = arith.constant 0.000000e+00 : f32
    %232 = vector.broadcast %cst_94 : f32 to vector<8x128xf32>
    %233 = arith.subf %232, %231 : vector<8x128xf32>
    %234 = math.exp %233 : vector<8x128xf32>
    %cst_95 = arith.constant 1.000000e+00 : f32
    %235 = vector.broadcast %cst_95 : f32 to vector<8x128xf32>
    %236 = arith.addf %235, %234 : vector<8x128xf32>
    %cst_96 = arith.constant 1.000000e+00 : f32
    %237 = vector.broadcast %cst_96 : f32 to vector<8x128xf32>
    %238 = arith.divf %237, %236 : vector<8x128xf32>
    %239 = vector.extract_strided_slice %219 {offsets = [0, 256], sizes = [8, 128], strides = [1, 1]} : vector<8x512xf32> to vector<8x128xf32>
    %240 = math.tanh %239 : vector<8x128xf32>
    %241 = vector.extract_strided_slice %219 {offsets = [0, 384], sizes = [8, 128], strides = [1, 1]} : vector<8x512xf32> to vector<8x128xf32>
    %cst_97 = arith.constant 0.000000e+00 : f32
    %242 = vector.broadcast %cst_97 : f32 to vector<8x128xf32>
    %243 = arith.subf %242, %241 : vector<8x128xf32>
    %244 = math.exp %243 : vector<8x128xf32>
    %cst_98 = arith.constant 1.000000e+00 : f32
    %245 = vector.broadcast %cst_98 : f32 to vector<8x128xf32>
    %246 = arith.addf %245, %244 : vector<8x128xf32>
    %cst_99 = arith.constant 1.000000e+00 : f32
    %247 = vector.broadcast %cst_99 : f32 to vector<8x128xf32>
    %248 = arith.divf %247, %246 : vector<8x128xf32>
    %249 = arith.mulf %238, %180 : vector<8x128xf32>
    %250 = arith.mulf %230, %240 : vector<8x128xf32>
    %251 = arith.addf %249, %250 : vector<8x128xf32>
    %252 = math.tanh %251 : vector<8x128xf32>
    %253 = arith.mulf %248, %252 : vector<8x128xf32>
    %254 = vector.extract_strided_slice %222 {offsets = [0, 0], sizes = [8, 128], strides = [1, 1]} : vector<8x512xf32> to vector<8x128xf32>
    %cst_100 = arith.constant 0.000000e+00 : f32
    %255 = vector.broadcast %cst_100 : f32 to vector<8x128xf32>
    %256 = arith.subf %255, %254 : vector<8x128xf32>
    %257 = math.exp %256 : vector<8x128xf32>
    %cst_101 = arith.constant 1.000000e+00 : f32
    %258 = vector.broadcast %cst_101 : f32 to vector<8x128xf32>
    %259 = arith.addf %258, %257 : vector<8x128xf32>
    %cst_102 = arith.constant 1.000000e+00 : f32
    %260 = vector.broadcast %cst_102 : f32 to vector<8x128xf32>
    %261 = arith.divf %260, %259 : vector<8x128xf32>
    %262 = vector.extract_strided_slice %222 {offsets = [0, 128], sizes = [8, 128], strides = [1, 1]} : vector<8x512xf32> to vector<8x128xf32>
    %cst_103 = arith.constant 0.000000e+00 : f32
    %263 = vector.broadcast %cst_103 : f32 to vector<8x128xf32>
    %264 = arith.subf %263, %262 : vector<8x128xf32>
    %265 = math.exp %264 : vector<8x128xf32>
    %cst_104 = arith.constant 1.000000e+00 : f32
    %266 = vector.broadcast %cst_104 : f32 to vector<8x128xf32>
    %267 = arith.addf %266, %265 : vector<8x128xf32>
    %cst_105 = arith.constant 1.000000e+00 : f32
    %268 = vector.broadcast %cst_105 : f32 to vector<8x128xf32>
    %269 = arith.divf %268, %267 : vector<8x128xf32>
    %270 = vector.extract_strided_slice %222 {offsets = [0, 256], sizes = [8, 128], strides = [1, 1]} : vector<8x512xf32> to vector<8x128xf32>
    %271 = math.tanh %270 : vector<8x128xf32>
    %272 = vector.extract_strided_slice %222 {offsets = [0, 384], sizes = [8, 128], strides = [1, 1]} : vector<8x512xf32> to vector<8x128xf32>
    %cst_106 = arith.constant 0.000000e+00 : f32
    %273 = vector.broadcast %cst_106 : f32 to vector<8x128xf32>
    %274 = arith.subf %273, %272 : vector<8x128xf32>
    %275 = math.exp %274 : vector<8x128xf32>
    %cst_107 = arith.constant 1.000000e+00 : f32
    %276 = vector.broadcast %cst_107 : f32 to vector<8x128xf32>
    %277 = arith.addf %276, %275 : vector<8x128xf32>
    %cst_108 = arith.constant 1.000000e+00 : f32
    %278 = vector.broadcast %cst_108 : f32 to vector<8x128xf32>
    %279 = arith.divf %278, %277 : vector<8x128xf32>
    %280 = arith.mulf %269, %211 : vector<8x128xf32>
    %281 = arith.mulf %261, %271 : vector<8x128xf32>
    %282 = arith.addf %280, %281 : vector<8x128xf32>
    %283 = math.tanh %282 : vector<8x128xf32>
    %284 = arith.mulf %279, %283 : vector<8x128xf32>
    %285 = tpu.concatenate %253, %284 in 1 : vector<8x128xf32>, vector<8x128xf32> -> vector<8x256xf32>
    %286 = arith.truncf %285 : vector<8x256xf32> to vector<8x256xbf16>
    %cst_109 = arith.constant dense<0.000000e+00> : vector<8x1024xf32>
    %287 = tpu.matmul %286, %69, %cst_109 {dimension_numbers = #tpu.dot_dimension_numbers<[1], [0], [0], [1], [0, 0, 1, 1], [], []>} : vector<8x256xbf16>, vector<256x1024xbf16>, vector<8x1024xf32> -> vector<8x1024xf32>
    %c24 = arith.constant 24 : index
    %c0_110 = arith.constant 0 : index
    %288 = vector.load %arg23[%c24, %c0_110] : memref<64x1024xf32, #tpu.memory_space<vmem>>, vector<8x512xf32>
    %289 = vector.extract_strided_slice %287 {offsets = [0, 0], sizes = [8, 512], strides = [1, 1]} : vector<8x1024xf32> to vector<8x512xf32>
    %290 = arith.addf %288, %289 : vector<8x512xf32>
    %c32 = arith.constant 32 : index
    %c512_111 = arith.constant 512 : index
    %291 = vector.load %arg23[%c32, %c512_111] : memref<64x1024xf32, #tpu.memory_space<vmem>>, vector<8x512xf32>
    %292 = vector.extract_strided_slice %287 {offsets = [0, 512], sizes = [8, 512], strides = [1, 1]} : vector<8x1024xf32> to vector<8x512xf32>
    %293 = arith.addf %291, %292 : vector<8x512xf32>
    %294 = vector.extract_strided_slice %290 {offsets = [0, 0], sizes = [8, 128], strides = [1, 1]} : vector<8x512xf32> to vector<8x128xf32>
    %cst_112 = arith.constant 0.000000e+00 : f32
    %295 = vector.broadcast %cst_112 : f32 to vector<8x128xf32>
    %296 = arith.subf %295, %294 : vector<8x128xf32>
    %297 = math.exp %296 : vector<8x128xf32>
    %cst_113 = arith.constant 1.000000e+00 : f32
    %298 = vector.broadcast %cst_113 : f32 to vector<8x128xf32>
    %299 = arith.addf %298, %297 : vector<8x128xf32>
    %cst_114 = arith.constant 1.000000e+00 : f32
    %300 = vector.broadcast %cst_114 : f32 to vector<8x128xf32>
    %301 = arith.divf %300, %299 : vector<8x128xf32>
    %302 = vector.extract_strided_slice %290 {offsets = [0, 128], sizes = [8, 128], strides = [1, 1]} : vector<8x512xf32> to vector<8x128xf32>
    %cst_115 = arith.constant 0.000000e+00 : f32
    %303 = vector.broadcast %cst_115 : f32 to vector<8x128xf32>
    %304 = arith.subf %303, %302 : vector<8x128xf32>
    %305 = math.exp %304 : vector<8x128xf32>
    %cst_116 = arith.constant 1.000000e+00 : f32
    %306 = vector.broadcast %cst_116 : f32 to vector<8x128xf32>
    %307 = arith.addf %306, %305 : vector<8x128xf32>
    %cst_117 = arith.constant 1.000000e+00 : f32
    %308 = vector.broadcast %cst_117 : f32 to vector<8x128xf32>
    %309 = arith.divf %308, %307 : vector<8x128xf32>
    %310 = vector.extract_strided_slice %290 {offsets = [0, 256], sizes = [8, 128], strides = [1, 1]} : vector<8x512xf32> to vector<8x128xf32>
    %311 = math.tanh %310 : vector<8x128xf32>
    %312 = vector.extract_strided_slice %290 {offsets = [0, 384], sizes = [8, 128], strides = [1, 1]} : vector<8x512xf32> to vector<8x128xf32>
    %cst_118 = arith.constant 0.000000e+00 : f32
    %313 = vector.broadcast %cst_118 : f32 to vector<8x128xf32>
    %314 = arith.subf %313, %312 : vector<8x128xf32>
    %315 = math.exp %314 : vector<8x128xf32>
    %cst_119 = arith.constant 1.000000e+00 : f32
    %316 = vector.broadcast %cst_119 : f32 to vector<8x128xf32>
    %317 = arith.addf %316, %315 : vector<8x128xf32>
    %cst_120 = arith.constant 1.000000e+00 : f32
    %318 = vector.broadcast %cst_120 : f32 to vector<8x128xf32>
    %319 = arith.divf %318, %317 : vector<8x128xf32>
    %320 = arith.mulf %309, %251 : vector<8x128xf32>
    %321 = arith.mulf %301, %311 : vector<8x128xf32>
    %322 = arith.addf %320, %321 : vector<8x128xf32>
    %323 = math.tanh %322 : vector<8x128xf32>
    %324 = arith.mulf %319, %323 : vector<8x128xf32>
    %325 = vector.extract_strided_slice %293 {offsets = [0, 0], sizes = [8, 128], strides = [1, 1]} : vector<8x512xf32> to vector<8x128xf32>
    %cst_121 = arith.constant 0.000000e+00 : f32
    %326 = vector.broadcast %cst_121 : f32 to vector<8x128xf32>
    %327 = arith.subf %326, %325 : vector<8x128xf32>
    %328 = math.exp %327 : vector<8x128xf32>
    %cst_122 = arith.constant 1.000000e+00 : f32
    %329 = vector.broadcast %cst_122 : f32 to vector<8x128xf32>
    %330 = arith.addf %329, %328 : vector<8x128xf32>
    %cst_123 = arith.constant 1.000000e+00 : f32
    %331 = vector.broadcast %cst_123 : f32 to vector<8x128xf32>
    %332 = arith.divf %331, %330 : vector<8x128xf32>
    %333 = vector.extract_strided_slice %293 {offsets = [0, 128], sizes = [8, 128], strides = [1, 1]} : vector<8x512xf32> to vector<8x128xf32>
    %cst_124 = arith.constant 0.000000e+00 : f32
    %334 = vector.broadcast %cst_124 : f32 to vector<8x128xf32>
    %335 = arith.subf %334, %333 : vector<8x128xf32>
    %336 = math.exp %335 : vector<8x128xf32>
    %cst_125 = arith.constant 1.000000e+00 : f32
    %337 = vector.broadcast %cst_125 : f32 to vector<8x128xf32>
    %338 = arith.addf %337, %336 : vector<8x128xf32>
    %cst_126 = arith.constant 1.000000e+00 : f32
    %339 = vector.broadcast %cst_126 : f32 to vector<8x128xf32>
    %340 = arith.divf %339, %338 : vector<8x128xf32>
    %341 = vector.extract_strided_slice %293 {offsets = [0, 256], sizes = [8, 128], strides = [1, 1]} : vector<8x512xf32> to vector<8x128xf32>
    %342 = math.tanh %341 : vector<8x128xf32>
    %343 = vector.extract_strided_slice %293 {offsets = [0, 384], sizes = [8, 128], strides = [1, 1]} : vector<8x512xf32> to vector<8x128xf32>
    %cst_127 = arith.constant 0.000000e+00 : f32
    %344 = vector.broadcast %cst_127 : f32 to vector<8x128xf32>
    %345 = arith.subf %344, %343 : vector<8x128xf32>
    %346 = math.exp %345 : vector<8x128xf32>
    %cst_128 = arith.constant 1.000000e+00 : f32
    %347 = vector.broadcast %cst_128 : f32 to vector<8x128xf32>
    %348 = arith.addf %347, %346 : vector<8x128xf32>
    %cst_129 = arith.constant 1.000000e+00 : f32
    %349 = vector.broadcast %cst_129 : f32 to vector<8x128xf32>
    %350 = arith.divf %349, %348 : vector<8x128xf32>
    %351 = arith.mulf %340, %282 : vector<8x128xf32>
    %352 = arith.mulf %332, %342 : vector<8x128xf32>
    %353 = arith.addf %351, %352 : vector<8x128xf32>
    %354 = math.tanh %353 : vector<8x128xf32>
    %355 = arith.mulf %350, %354 : vector<8x128xf32>
    %356 = tpu.concatenate %324, %355 in 1 : vector<8x128xf32>, vector<8x128xf32> -> vector<8x256xf32>
    %357 = arith.truncf %356 : vector<8x256xf32> to vector<8x256xbf16>
    %cst_130 = arith.constant dense<0.000000e+00> : vector<8x1024xf32>
    %358 = tpu.matmul %357, %69, %cst_130 {dimension_numbers = #tpu.dot_dimension_numbers<[1], [0], [0], [1], [0, 0, 1, 1], [], []>} : vector<8x256xbf16>, vector<256x1024xbf16>, vector<8x1024xf32> -> vector<8x1024xf32>
    %c32_131 = arith.constant 32 : index
    %c0_132 = arith.constant 0 : index
    %359 = vector.load %arg23[%c32_131, %c0_132] : memref<64x1024xf32, #tpu.memory_space<vmem>>, vector<8x512xf32>
    %360 = vector.extract_strided_slice %358 {offsets = [0, 0], sizes = [8, 512], strides = [1, 1]} : vector<8x1024xf32> to vector<8x512xf32>
    %361 = arith.addf %359, %360 : vector<8x512xf32>
    %c24_133 = arith.constant 24 : index
    %c512_134 = arith.constant 512 : index
    %362 = vector.load %arg23[%c24_133, %c512_134] : memref<64x1024xf32, #tpu.memory_space<vmem>>, vector<8x512xf32>
    %363 = vector.extract_strided_slice %358 {offsets = [0, 512], sizes = [8, 512], strides = [1, 1]} : vector<8x1024xf32> to vector<8x512xf32>
    %364 = arith.addf %362, %363 : vector<8x512xf32>
    %365 = vector.extract_strided_slice %361 {offsets = [0, 0], sizes = [8, 128], strides = [1, 1]} : vector<8x512xf32> to vector<8x128xf32>
    %cst_135 = arith.constant 0.000000e+00 : f32
    %366 = vector.broadcast %cst_135 : f32 to vector<8x128xf32>
    %367 = arith.subf %366, %365 : vector<8x128xf32>
    %368 = math.exp %367 : vector<8x128xf32>
    %cst_136 = arith.constant 1.000000e+00 : f32
    %369 = vector.broadcast %cst_136 : f32 to vector<8x128xf32>
    %370 = arith.addf %369, %368 : vector<8x128xf32>
    %cst_137 = arith.constant 1.000000e+00 : f32
    %371 = vector.broadcast %cst_137 : f32 to vector<8x128xf32>
    %372 = arith.divf %371, %370 : vector<8x128xf32>
    %373 = vector.extract_strided_slice %361 {offsets = [0, 128], sizes = [8, 128], strides = [1, 1]} : vector<8x512xf32> to vector<8x128xf32>
    %cst_138 = arith.constant 0.000000e+00 : f32
    %374 = vector.broadcast %cst_138 : f32 to vector<8x128xf32>
    %375 = arith.subf %374, %373 : vector<8x128xf32>
    %376 = math.exp %375 : vector<8x128xf32>
    %cst_139 = arith.constant 1.000000e+00 : f32
    %377 = vector.broadcast %cst_139 : f32 to vector<8x128xf32>
    %378 = arith.addf %377, %376 : vector<8x128xf32>
    %cst_140 = arith.constant 1.000000e+00 : f32
    %379 = vector.broadcast %cst_140 : f32 to vector<8x128xf32>
    %380 = arith.divf %379, %378 : vector<8x128xf32>
    %381 = vector.extract_strided_slice %361 {offsets = [0, 256], sizes = [8, 128], strides = [1, 1]} : vector<8x512xf32> to vector<8x128xf32>
    %382 = math.tanh %381 : vector<8x128xf32>
    %383 = vector.extract_strided_slice %361 {offsets = [0, 384], sizes = [8, 128], strides = [1, 1]} : vector<8x512xf32> to vector<8x128xf32>
    %cst_141 = arith.constant 0.000000e+00 : f32
    %384 = vector.broadcast %cst_141 : f32 to vector<8x128xf32>
    %385 = arith.subf %384, %383 : vector<8x128xf32>
    %386 = math.exp %385 : vector<8x128xf32>
    %cst_142 = arith.constant 1.000000e+00 : f32
    %387 = vector.broadcast %cst_142 : f32 to vector<8x128xf32>
    %388 = arith.addf %387, %386 : vector<8x128xf32>
    %cst_143 = arith.constant 1.000000e+00 : f32
    %389 = vector.broadcast %cst_143 : f32 to vector<8x128xf32>
    %390 = arith.divf %389, %388 : vector<8x128xf32>
    %391 = arith.mulf %380, %322 : vector<8x128xf32>
    %392 = arith.mulf %372, %382 : vector<8x128xf32>
    %393 = arith.addf %391, %392 : vector<8x128xf32>
    %394 = math.tanh %393 : vector<8x128xf32>
    %395 = arith.mulf %390, %394 : vector<8x128xf32>
    %396 = vector.extract_strided_slice %364 {offsets = [0, 0], sizes = [8, 128], strides = [1, 1]} : vector<8x512xf32> to vector<8x128xf32>
    %cst_144 = arith.constant 0.000000e+00 : f32
    %397 = vector.broadcast %cst_144 : f32 to vector<8x128xf32>
    %398 = arith.subf %397, %396 : vector<8x128xf32>
    %399 = math.exp %398 : vector<8x128xf32>
    %cst_145 = arith.constant 1.000000e+00 : f32
    %400 = vector.broadcast %cst_145 : f32 to vector<8x128xf32>
    %401 = arith.addf %400, %399 : vector<8x128xf32>
    %cst_146 = arith.constant 1.000000e+00 : f32
    %402 = vector.broadcast %cst_146 : f32 to vector<8x128xf32>
    %403 = arith.divf %402, %401 : vector<8x128xf32>
    %404 = vector.extract_strided_slice %364 {offsets = [0, 128], sizes = [8, 128], strides = [1, 1]} : vector<8x512xf32> to vector<8x128xf32>
    %cst_147 = arith.constant 0.000000e+00 : f32
    %405 = vector.broadcast %cst_147 : f32 to vector<8x128xf32>
    %406 = arith.subf %405, %404 : vector<8x128xf32>
    %407 = math.exp %406 : vector<8x128xf32>
    %cst_148 = arith.constant 1.000000e+00 : f32
    %408 = vector.broadcast %cst_148 : f32 to vector<8x128xf32>
    %409 = arith.addf %408, %407 : vector<8x128xf32>
    %cst_149 = arith.constant 1.000000e+00 : f32
    %410 = vector.broadcast %cst_149 : f32 to vector<8x128xf32>
    %411 = arith.divf %410, %409 : vector<8x128xf32>
    %412 = vector.extract_strided_slice %364 {offsets = [0, 256], sizes = [8, 128], strides = [1, 1]} : vector<8x512xf32> to vector<8x128xf32>
    %413 = math.tanh %412 : vector<8x128xf32>
    %414 = vector.extract_strided_slice %364 {offsets = [0, 384], sizes = [8, 128], strides = [1, 1]} : vector<8x512xf32> to vector<8x128xf32>
    %cst_150 = arith.constant 0.000000e+00 : f32
    %415 = vector.broadcast %cst_150 : f32 to vector<8x128xf32>
    %416 = arith.subf %415, %414 : vector<8x128xf32>
    %417 = math.exp %416 : vector<8x128xf32>
    %cst_151 = arith.constant 1.000000e+00 : f32
    %418 = vector.broadcast %cst_151 : f32 to vector<8x128xf32>
    %419 = arith.addf %418, %417 : vector<8x128xf32>
    %cst_152 = arith.constant 1.000000e+00 : f32
    %420 = vector.broadcast %cst_152 : f32 to vector<8x128xf32>
    %421 = arith.divf %420, %419 : vector<8x128xf32>
    %422 = arith.mulf %411, %353 : vector<8x128xf32>
    %423 = arith.mulf %403, %413 : vector<8x128xf32>
    %424 = arith.addf %422, %423 : vector<8x128xf32>
    %425 = math.tanh %424 : vector<8x128xf32>
    %426 = arith.mulf %421, %425 : vector<8x128xf32>
    %427 = tpu.concatenate %395, %426 in 1 : vector<8x128xf32>, vector<8x128xf32> -> vector<8x256xf32>
    %428 = arith.truncf %427 : vector<8x256xf32> to vector<8x256xbf16>
    %cst_153 = arith.constant dense<0.000000e+00> : vector<8x1024xf32>
    %429 = tpu.matmul %428, %69, %cst_153 {dimension_numbers = #tpu.dot_dimension_numbers<[1], [0], [0], [1], [0, 0, 1, 1], [], []>} : vector<8x256xbf16>, vector<256x1024xbf16>, vector<8x1024xf32> -> vector<8x1024xf32>
    %c40_154 = arith.constant 40 : index
    %c0_155 = arith.constant 0 : index
    %430 = vector.load %arg23[%c40_154, %c0_155] : memref<64x1024xf32, #tpu.memory_space<vmem>>, vector<8x512xf32>
    %431 = vector.extract_strided_slice %429 {offsets = [0, 0], sizes = [8, 512], strides = [1, 1]} : vector<8x1024xf32> to vector<8x512xf32>
    %432 = arith.addf %430, %431 : vector<8x512xf32>
    %c16_156 = arith.constant 16 : index
    %c512_157 = arith.constant 512 : index
    %433 = vector.load %arg23[%c16_156, %c512_157] : memref<64x1024xf32, #tpu.memory_space<vmem>>, vector<8x512xf32>
    %434 = vector.extract_strided_slice %429 {offsets = [0, 512], sizes = [8, 512], strides = [1, 1]} : vector<8x1024xf32> to vector<8x512xf32>
    %435 = arith.addf %433, %434 : vector<8x512xf32>
    %436 = vector.extract_strided_slice %432 {offsets = [0, 0], sizes = [8, 128], strides = [1, 1]} : vector<8x512xf32> to vector<8x128xf32>
    %cst_158 = arith.constant 0.000000e+00 : f32
    %437 = vector.broadcast %cst_158 : f32 to vector<8x128xf32>
    %438 = arith.subf %437, %436 : vector<8x128xf32>
    %439 = math.exp %438 : vector<8x128xf32>
    %cst_159 = arith.constant 1.000000e+00 : f32
    %440 = vector.broadcast %cst_159 : f32 to vector<8x128xf32>
    %441 = arith.addf %440, %439 : vector<8x128xf32>
    %cst_160 = arith.constant 1.000000e+00 : f32
    %442 = vector.broadcast %cst_160 : f32 to vector<8x128xf32>
    %443 = arith.divf %442, %441 : vector<8x128xf32>
    %444 = vector.extract_strided_slice %432 {offsets = [0, 128], sizes = [8, 128], strides = [1, 1]} : vector<8x512xf32> to vector<8x128xf32>
    %cst_161 = arith.constant 0.000000e+00 : f32
    %445 = vector.broadcast %cst_161 : f32 to vector<8x128xf32>
    %446 = arith.subf %445, %444 : vector<8x128xf32>
    %447 = math.exp %446 : vector<8x128xf32>
    %cst_162 = arith.constant 1.000000e+00 : f32
    %448 = vector.broadcast %cst_162 : f32 to vector<8x128xf32>
    %449 = arith.addf %448, %447 : vector<8x128xf32>
    %cst_163 = arith.constant 1.000000e+00 : f32
    %450 = vector.broadcast %cst_163 : f32 to vector<8x128xf32>
    %451 = arith.divf %450, %449 : vector<8x128xf32>
    %452 = vector.extract_strided_slice %432 {offsets = [0, 256], sizes = [8, 128], strides = [1, 1]} : vector<8x512xf32> to vector<8x128xf32>
    %453 = math.tanh %452 : vector<8x128xf32>
    %454 = vector.extract_strided_slice %432 {offsets = [0, 384], sizes = [8, 128], strides = [1, 1]} : vector<8x512xf32> to vector<8x128xf32>
    %cst_164 = arith.constant 0.000000e+00 : f32
    %455 = vector.broadcast %cst_164 : f32 to vector<8x128xf32>
    %456 = arith.subf %455, %454 : vector<8x128xf32>
    %457 = math.exp %456 : vector<8x128xf32>
    %cst_165 = arith.constant 1.000000e+00 : f32
    %458 = vector.broadcast %cst_165 : f32 to vector<8x128xf32>
    %459 = arith.addf %458, %457 : vector<8x128xf32>
    %cst_166 = arith.constant 1.000000e+00 : f32
    %460 = vector.broadcast %cst_166 : f32 to vector<8x128xf32>
    %461 = arith.divf %460, %459 : vector<8x128xf32>
    %462 = arith.mulf %451, %393 : vector<8x128xf32>
    %463 = arith.mulf %443, %453 : vector<8x128xf32>
    %464 = arith.addf %462, %463 : vector<8x128xf32>
    %465 = math.tanh %464 : vector<8x128xf32>
    %466 = arith.mulf %461, %465 : vector<8x128xf32>
    %467 = vector.extract_strided_slice %435 {offsets = [0, 0], sizes = [8, 128], strides = [1, 1]} : vector<8x512xf32> to vector<8x128xf32>
    %cst_167 = arith.constant 0.000000e+00 : f32
    %468 = vector.broadcast %cst_167 : f32 to vector<8x128xf32>
    %469 = arith.subf %468, %467 : vector<8x128xf32>
    %470 = math.exp %469 : vector<8x128xf32>
    %cst_168 = arith.constant 1.000000e+00 : f32
    %471 = vector.broadcast %cst_168 : f32 to vector<8x128xf32>
    %472 = arith.addf %471, %470 : vector<8x128xf32>
    %cst_169 = arith.constant 1.000000e+00 : f32
    %473 = vector.broadcast %cst_169 : f32 to vector<8x128xf32>
    %474 = arith.divf %473, %472 : vector<8x128xf32>
    %475 = vector.extract_strided_slice %435 {offsets = [0, 128], sizes = [8, 128], strides = [1, 1]} : vector<8x512xf32> to vector<8x128xf32>
    %cst_170 = arith.constant 0.000000e+00 : f32
    %476 = vector.broadcast %cst_170 : f32 to vector<8x128xf32>
    %477 = arith.subf %476, %475 : vector<8x128xf32>
    %478 = math.exp %477 : vector<8x128xf32>
    %cst_171 = arith.constant 1.000000e+00 : f32
    %479 = vector.broadcast %cst_171 : f32 to vector<8x128xf32>
    %480 = arith.addf %479, %478 : vector<8x128xf32>
    %cst_172 = arith.constant 1.000000e+00 : f32
    %481 = vector.broadcast %cst_172 : f32 to vector<8x128xf32>
    %482 = arith.divf %481, %480 : vector<8x128xf32>
    %483 = vector.extract_strided_slice %435 {offsets = [0, 256], sizes = [8, 128], strides = [1, 1]} : vector<8x512xf32> to vector<8x128xf32>
    %484 = math.tanh %483 : vector<8x128xf32>
    %485 = vector.extract_strided_slice %435 {offsets = [0, 384], sizes = [8, 128], strides = [1, 1]} : vector<8x512xf32> to vector<8x128xf32>
    %cst_173 = arith.constant 0.000000e+00 : f32
    %486 = vector.broadcast %cst_173 : f32 to vector<8x128xf32>
    %487 = arith.subf %486, %485 : vector<8x128xf32>
    %488 = math.exp %487 : vector<8x128xf32>
    %cst_174 = arith.constant 1.000000e+00 : f32
    %489 = vector.broadcast %cst_174 : f32 to vector<8x128xf32>
    %490 = arith.addf %489, %488 : vector<8x128xf32>
    %cst_175 = arith.constant 1.000000e+00 : f32
    %491 = vector.broadcast %cst_175 : f32 to vector<8x128xf32>
    %492 = arith.divf %491, %490 : vector<8x128xf32>
    %493 = arith.mulf %482, %424 : vector<8x128xf32>
    %494 = arith.mulf %474, %484 : vector<8x128xf32>
    %495 = arith.addf %493, %494 : vector<8x128xf32>
    %496 = math.tanh %495 : vector<8x128xf32>
    %497 = arith.mulf %492, %496 : vector<8x128xf32>
    %498 = tpu.concatenate %466, %497 in 1 : vector<8x128xf32>, vector<8x128xf32> -> vector<8x256xf32>
    %499 = arith.truncf %498 : vector<8x256xf32> to vector<8x256xbf16>
    %cst_176 = arith.constant dense<0.000000e+00> : vector<8x1024xf32>
    %500 = tpu.matmul %499, %69, %cst_176 {dimension_numbers = #tpu.dot_dimension_numbers<[1], [0], [0], [1], [0, 0, 1, 1], [], []>} : vector<8x256xbf16>, vector<256x1024xbf16>, vector<8x1024xf32> -> vector<8x1024xf32>
    %c48_177 = arith.constant 48 : index
    %c0_178 = arith.constant 0 : index
    %501 = vector.load %arg23[%c48_177, %c0_178] : memref<64x1024xf32, #tpu.memory_space<vmem>>, vector<8x512xf32>
    %502 = vector.extract_strided_slice %500 {offsets = [0, 0], sizes = [8, 512], strides = [1, 1]} : vector<8x1024xf32> to vector<8x512xf32>
    %503 = arith.addf %501, %502 : vector<8x512xf32>
    %c8_179 = arith.constant 8 : index
    %c512_180 = arith.constant 512 : index
    %504 = vector.load %arg23[%c8_179, %c512_180] : memref<64x1024xf32, #tpu.memory_space<vmem>>, vector<8x512xf32>
    %505 = vector.extract_strided_slice %500 {offsets = [0, 512], sizes = [8, 512], strides = [1, 1]} : vector<8x1024xf32> to vector<8x512xf32>
    %506 = arith.addf %504, %505 : vector<8x512xf32>
    %507 = vector.extract_strided_slice %503 {offsets = [0, 0], sizes = [8, 128], strides = [1, 1]} : vector<8x512xf32> to vector<8x128xf32>
    %cst_181 = arith.constant 0.000000e+00 : f32
    %508 = vector.broadcast %cst_181 : f32 to vector<8x128xf32>
    %509 = arith.subf %508, %507 : vector<8x128xf32>
    %510 = math.exp %509 : vector<8x128xf32>
    %cst_182 = arith.constant 1.000000e+00 : f32
    %511 = vector.broadcast %cst_182 : f32 to vector<8x128xf32>
    %512 = arith.addf %511, %510 : vector<8x128xf32>
    %cst_183 = arith.constant 1.000000e+00 : f32
    %513 = vector.broadcast %cst_183 : f32 to vector<8x128xf32>
    %514 = arith.divf %513, %512 : vector<8x128xf32>
    %515 = vector.extract_strided_slice %503 {offsets = [0, 128], sizes = [8, 128], strides = [1, 1]} : vector<8x512xf32> to vector<8x128xf32>
    %cst_184 = arith.constant 0.000000e+00 : f32
    %516 = vector.broadcast %cst_184 : f32 to vector<8x128xf32>
    %517 = arith.subf %516, %515 : vector<8x128xf32>
    %518 = math.exp %517 : vector<8x128xf32>
    %cst_185 = arith.constant 1.000000e+00 : f32
    %519 = vector.broadcast %cst_185 : f32 to vector<8x128xf32>
    %520 = arith.addf %519, %518 : vector<8x128xf32>
    %cst_186 = arith.constant 1.000000e+00 : f32
    %521 = vector.broadcast %cst_186 : f32 to vector<8x128xf32>
    %522 = arith.divf %521, %520 : vector<8x128xf32>
    %523 = vector.extract_strided_slice %503 {offsets = [0, 256], sizes = [8, 128], strides = [1, 1]} : vector<8x512xf32> to vector<8x128xf32>
    %524 = math.tanh %523 : vector<8x128xf32>
    %525 = vector.extract_strided_slice %503 {offsets = [0, 384], sizes = [8, 128], strides = [1, 1]} : vector<8x512xf32> to vector<8x128xf32>
    %cst_187 = arith.constant 0.000000e+00 : f32
    %526 = vector.broadcast %cst_187 : f32 to vector<8x128xf32>
    %527 = arith.subf %526, %525 : vector<8x128xf32>
    %528 = math.exp %527 : vector<8x128xf32>
    %cst_188 = arith.constant 1.000000e+00 : f32
    %529 = vector.broadcast %cst_188 : f32 to vector<8x128xf32>
    %530 = arith.addf %529, %528 : vector<8x128xf32>
    %cst_189 = arith.constant 1.000000e+00 : f32
    %531 = vector.broadcast %cst_189 : f32 to vector<8x128xf32>
    %532 = arith.divf %531, %530 : vector<8x128xf32>
    %533 = arith.mulf %522, %464 : vector<8x128xf32>
    %534 = arith.mulf %514, %524 : vector<8x128xf32>
    %535 = arith.addf %533, %534 : vector<8x128xf32>
    %536 = math.tanh %535 : vector<8x128xf32>
    %537 = arith.mulf %532, %536 : vector<8x128xf32>
    %538 = vector.extract_strided_slice %506 {offsets = [0, 0], sizes = [8, 128], strides = [1, 1]} : vector<8x512xf32> to vector<8x128xf32>
    %cst_190 = arith.constant 0.000000e+00 : f32
    %539 = vector.broadcast %cst_190 : f32 to vector<8x128xf32>
    %540 = arith.subf %539, %538 : vector<8x128xf32>
    %541 = math.exp %540 : vector<8x128xf32>
    %cst_191 = arith.constant 1.000000e+00 : f32
    %542 = vector.broadcast %cst_191 : f32 to vector<8x128xf32>
    %543 = arith.addf %542, %541 : vector<8x128xf32>
    %cst_192 = arith.constant 1.000000e+00 : f32
    %544 = vector.broadcast %cst_192 : f32 to vector<8x128xf32>
    %545 = arith.divf %544, %543 : vector<8x128xf32>
    %546 = vector.extract_strided_slice %506 {offsets = [0, 128], sizes = [8, 128], strides = [1, 1]} : vector<8x512xf32> to vector<8x128xf32>
    %cst_193 = arith.constant 0.000000e+00 : f32
    %547 = vector.broadcast %cst_193 : f32 to vector<8x128xf32>
    %548 = arith.subf %547, %546 : vector<8x128xf32>
    %549 = math.exp %548 : vector<8x128xf32>
    %cst_194 = arith.constant 1.000000e+00 : f32
    %550 = vector.broadcast %cst_194 : f32 to vector<8x128xf32>
    %551 = arith.addf %550, %549 : vector<8x128xf32>
    %cst_195 = arith.constant 1.000000e+00 : f32
    %552 = vector.broadcast %cst_195 : f32 to vector<8x128xf32>
    %553 = arith.divf %552, %551 : vector<8x128xf32>
    %554 = vector.extract_strided_slice %506 {offsets = [0, 256], sizes = [8, 128], strides = [1, 1]} : vector<8x512xf32> to vector<8x128xf32>
    %555 = math.tanh %554 : vector<8x128xf32>
    %556 = vector.extract_strided_slice %506 {offsets = [0, 384], sizes = [8, 128], strides = [1, 1]} : vector<8x512xf32> to vector<8x128xf32>
    %cst_196 = arith.constant 0.000000e+00 : f32
    %557 = vector.broadcast %cst_196 : f32 to vector<8x128xf32>
    %558 = arith.subf %557, %556 : vector<8x128xf32>
    %559 = math.exp %558 : vector<8x128xf32>
    %cst_197 = arith.constant 1.000000e+00 : f32
    %560 = vector.broadcast %cst_197 : f32 to vector<8x128xf32>
    %561 = arith.addf %560, %559 : vector<8x128xf32>
    %cst_198 = arith.constant 1.000000e+00 : f32
    %562 = vector.broadcast %cst_198 : f32 to vector<8x128xf32>
    %563 = arith.divf %562, %561 : vector<8x128xf32>
    %564 = arith.mulf %553, %495 : vector<8x128xf32>
    %565 = arith.mulf %545, %555 : vector<8x128xf32>
    %566 = arith.addf %564, %565 : vector<8x128xf32>
    %567 = math.tanh %566 : vector<8x128xf32>
    %568 = arith.mulf %563, %567 : vector<8x128xf32>
    %569 = tpu.concatenate %537, %568 in 1 : vector<8x128xf32>, vector<8x128xf32> -> vector<8x256xf32>
    %570 = arith.truncf %569 : vector<8x256xf32> to vector<8x256xbf16>
    %cst_199 = arith.constant dense<0.000000e+00> : vector<8x1024xf32>
    %571 = tpu.matmul %570, %69, %cst_199 {dimension_numbers = #tpu.dot_dimension_numbers<[1], [0], [0], [1], [0, 0, 1, 1], [], []>} : vector<8x256xbf16>, vector<256x1024xbf16>, vector<8x1024xf32> -> vector<8x1024xf32>
    %c56_200 = arith.constant 56 : index
    %c0_201 = arith.constant 0 : index
    %572 = vector.load %arg23[%c56_200, %c0_201] : memref<64x1024xf32, #tpu.memory_space<vmem>>, vector<8x512xf32>
    %573 = vector.extract_strided_slice %571 {offsets = [0, 0], sizes = [8, 512], strides = [1, 1]} : vector<8x1024xf32> to vector<8x512xf32>
    %574 = arith.addf %572, %573 : vector<8x512xf32>
    %c0_202 = arith.constant 0 : index
    %c512_203 = arith.constant 512 : index
    %575 = vector.load %arg23[%c0_202, %c512_203] : memref<64x1024xf32, #tpu.memory_space<vmem>>, vector<8x512xf32>
    %576 = vector.extract_strided_slice %571 {offsets = [0, 512], sizes = [8, 512], strides = [1, 1]} : vector<8x1024xf32> to vector<8x512xf32>
    %577 = arith.addf %575, %576 : vector<8x512xf32>
    %578 = vector.extract_strided_slice %574 {offsets = [0, 0], sizes = [8, 128], strides = [1, 1]} : vector<8x512xf32> to vector<8x128xf32>
    %cst_204 = arith.constant 0.000000e+00 : f32
    %579 = vector.broadcast %cst_204 : f32 to vector<8x128xf32>
    %580 = arith.subf %579, %578 : vector<8x128xf32>
    %581 = math.exp %580 : vector<8x128xf32>
    %cst_205 = arith.constant 1.000000e+00 : f32
    %582 = vector.broadcast %cst_205 : f32 to vector<8x128xf32>
    %583 = arith.addf %582, %581 : vector<8x128xf32>
    %cst_206 = arith.constant 1.000000e+00 : f32
    %584 = vector.broadcast %cst_206 : f32 to vector<8x128xf32>
    %585 = arith.divf %584, %583 : vector<8x128xf32>
    %586 = vector.extract_strided_slice %574 {offsets = [0, 128], sizes = [8, 128], strides = [1, 1]} : vector<8x512xf32> to vector<8x128xf32>
    %cst_207 = arith.constant 0.000000e+00 : f32
    %587 = vector.broadcast %cst_207 : f32 to vector<8x128xf32>
    %588 = arith.subf %587, %586 : vector<8x128xf32>
    %589 = math.exp %588 : vector<8x128xf32>
    %cst_208 = arith.constant 1.000000e+00 : f32
    %590 = vector.broadcast %cst_208 : f32 to vector<8x128xf32>
    %591 = arith.addf %590, %589 : vector<8x128xf32>
    %cst_209 = arith.constant 1.000000e+00 : f32
    %592 = vector.broadcast %cst_209 : f32 to vector<8x128xf32>
    %593 = arith.divf %592, %591 : vector<8x128xf32>
    %594 = vector.extract_strided_slice %574 {offsets = [0, 256], sizes = [8, 128], strides = [1, 1]} : vector<8x512xf32> to vector<8x128xf32>
    %595 = math.tanh %594 : vector<8x128xf32>
    %596 = vector.extract_strided_slice %574 {offsets = [0, 384], sizes = [8, 128], strides = [1, 1]} : vector<8x512xf32> to vector<8x128xf32>
    %cst_210 = arith.constant 0.000000e+00 : f32
    %597 = vector.broadcast %cst_210 : f32 to vector<8x128xf32>
    %598 = arith.subf %597, %596 : vector<8x128xf32>
    %599 = math.exp %598 : vector<8x128xf32>
    %cst_211 = arith.constant 1.000000e+00 : f32
    %600 = vector.broadcast %cst_211 : f32 to vector<8x128xf32>
    %601 = arith.addf %600, %599 : vector<8x128xf32>
    %cst_212 = arith.constant 1.000000e+00 : f32
    %602 = vector.broadcast %cst_212 : f32 to vector<8x128xf32>
    %603 = arith.divf %602, %601 : vector<8x128xf32>
    %604 = arith.mulf %593, %535 : vector<8x128xf32>
    %605 = arith.mulf %585, %595 : vector<8x128xf32>
    %606 = arith.addf %604, %605 : vector<8x128xf32>
    %607 = math.tanh %606 : vector<8x128xf32>
    %608 = arith.mulf %603, %607 : vector<8x128xf32>
    %609 = vector.extract_strided_slice %577 {offsets = [0, 0], sizes = [8, 128], strides = [1, 1]} : vector<8x512xf32> to vector<8x128xf32>
    %cst_213 = arith.constant 0.000000e+00 : f32
    %610 = vector.broadcast %cst_213 : f32 to vector<8x128xf32>
    %611 = arith.subf %610, %609 : vector<8x128xf32>
    %612 = math.exp %611 : vector<8x128xf32>
    %cst_214 = arith.constant 1.000000e+00 : f32
    %613 = vector.broadcast %cst_214 : f32 to vector<8x128xf32>
    %614 = arith.addf %613, %612 : vector<8x128xf32>
    %cst_215 = arith.constant 1.000000e+00 : f32
    %615 = vector.broadcast %cst_215 : f32 to vector<8x128xf32>
    %616 = arith.divf %615, %614 : vector<8x128xf32>
    %617 = vector.extract_strided_slice %577 {offsets = [0, 128], sizes = [8, 128], strides = [1, 1]} : vector<8x512xf32> to vector<8x128xf32>
    %cst_216 = arith.constant 0.000000e+00 : f32
    %618 = vector.broadcast %cst_216 : f32 to vector<8x128xf32>
    %619 = arith.subf %618, %617 : vector<8x128xf32>
    %620 = math.exp %619 : vector<8x128xf32>
    %cst_217 = arith.constant 1.000000e+00 : f32
    %621 = vector.broadcast %cst_217 : f32 to vector<8x128xf32>
    %622 = arith.addf %621, %620 : vector<8x128xf32>
    %cst_218 = arith.constant 1.000000e+00 : f32
    %623 = vector.broadcast %cst_218 : f32 to vector<8x128xf32>
    %624 = arith.divf %623, %622 : vector<8x128xf32>
    %625 = vector.extract_strided_slice %577 {offsets = [0, 256], sizes = [8, 128], strides = [1, 1]} : vector<8x512xf32> to vector<8x128xf32>
    %626 = math.tanh %625 : vector<8x128xf32>
    %627 = vector.extract_strided_slice %577 {offsets = [0, 384], sizes = [8, 128], strides = [1, 1]} : vector<8x512xf32> to vector<8x128xf32>
    %cst_219 = arith.constant 0.000000e+00 : f32
    %628 = vector.broadcast %cst_219 : f32 to vector<8x128xf32>
    %629 = arith.subf %628, %627 : vector<8x128xf32>
    %630 = math.exp %629 : vector<8x128xf32>
    %cst_220 = arith.constant 1.000000e+00 : f32
    %631 = vector.broadcast %cst_220 : f32 to vector<8x128xf32>
    %632 = arith.addf %631, %630 : vector<8x128xf32>
    %cst_221 = arith.constant 1.000000e+00 : f32
    %633 = vector.broadcast %cst_221 : f32 to vector<8x128xf32>
    %634 = arith.divf %633, %632 : vector<8x128xf32>
    %635 = arith.mulf %624, %566 : vector<8x128xf32>
    %636 = arith.mulf %616, %626 : vector<8x128xf32>
    %637 = arith.addf %635, %636 : vector<8x128xf32>
    %638 = math.tanh %637 : vector<8x128xf32>
    %639 = arith.mulf %634, %638 : vector<8x128xf32>
    %640 = tpu.concatenate %608, %639 in 1 : vector<8x128xf32>, vector<8x128xf32> -> vector<8x256xf32>
    %c0_222 = arith.constant 0 : index
    %c0_223 = arith.constant 0 : index
    %641 = vector.load %arg21[%c0_222, %c0_223] : memref<8x256xf32, #tpu.memory_space<vmem>>, vector<8x256xf32>
    tpu.vector_store %arg21[%c0_222, %c0_223], %640 {strides = array<i32>} : memref<8x256xf32, #tpu.memory_space<vmem>>, vector<8x256xf32>,
    %642 = arith.truncf %640 : vector<8x256xf32> to vector<8x256xbf16>
    %c0_224 = arith.constant 0 : index
    %c0_225 = arith.constant 0 : index
    %643 = vector.load %arg17[%c0_224, %c0_225] : memref<256x128xbf16, #tpu.memory_space<vmem>>, vector<256x128xbf16>
    %cst_226 = arith.constant dense<0.000000e+00> : vector<8x128xf32>
    %644 = tpu.matmul %642, %643, %cst_226 {dimension_numbers = #tpu.dot_dimension_numbers<[1], [0], [0], [1], [0, 0, 1, 1], [], []>} : vector<8x256xbf16>, vector<256x128xbf16>, vector<8x128xf32> -> vector<8x128xf32>
    %c0_227 = arith.constant 0 : index
    %c0_228 = arith.constant 0 : index
    %645 = vector.load %arg18[%c0_227, %c0_228] : memref<1x128xf32, #tpu.memory_space<vmem>>, vector<1x128xf32>
    %646 = vector.broadcast %645 : vector<1x128xf32> to vector<8x128xf32>
    %647 = arith.addf %644, %646 : vector<8x128xf32>
    %cst_229 = arith.constant 0.000000e+00 : f32
    %648 = vector.broadcast %cst_229 : f32 to vector<8x128xf32>
    %649 = arith.maximumf %647, %648 : vector<8x128xf32>
    %650 = arith.truncf %649 : vector<8x128xf32> to vector<8x128xbf16>
    %c0_230 = arith.constant 0 : index
    %c0_231 = arith.constant 0 : index
    %651 = vector.load %arg19[%c0_230, %c0_231] : memref<128x128xbf16, #tpu.memory_space<vmem>>, vector<128x128xbf16>
    %cst_232 = arith.constant dense<0.000000e+00> : vector<8x128xf32>
    %652 = tpu.matmul %650, %651, %cst_232 {dimension_numbers = #tpu.dot_dimension_numbers<[1], [0], [0], [1], [0, 0, 1, 1], [], []>} : vector<8x128xbf16>, vector<128x128xbf16>, vector<8x128xf32> -> vector<8x128xf32>
    %c0_233 = arith.constant 0 : index
    %c0_234 = arith.constant 0 : index
    %653 = vector.load %arg20[%c0_233, %c0_234] : memref<1x128xf32, #tpu.memory_space<vmem>>, vector<1x128xf32>
    %654 = vector.broadcast %653 : vector<1x128xf32> to vector<8x128xf32>
    %655 = arith.addf %652, %654 : vector<8x128xf32>
    %cst_235 = arith.constant dense<0xFF800000> : vector<8xf32>
    %656 = vector.multi_reduction <maximumf>, %655, %cst_235 [1] : vector<8x128xf32> to vector<8xf32>
    %657 = vector.shape_cast %656 : vector<8xf32> to vector<8x1xf32>
    %658 = vector.broadcast %657 : vector<8x1xf32> to vector<8x128xf32>
    %659 = arith.subf %655, %658 : vector<8x128xf32>
    %660 = math.exp %659 : vector<8x128xf32>
    %cst_236 = arith.constant dense<0.000000e+00> : vector<8xf32>
    %661 = vector.multi_reduction <add>, %660, %cst_236 [1] : vector<8x128xf32> to vector<8xf32>
    %662 = vector.shape_cast %661 : vector<8xf32> to vector<8x1xf32>
    %663 = vector.broadcast %662 : vector<8x1xf32> to vector<8x128xf32>
    %664 = arith.divf %660, %663 : vector<8x128xf32>
    %c0_237 = arith.constant 0 : index
    %c0_238 = arith.constant 0 : index
    %665 = vector.load %arg22[%c0_237, %c0_238] : memref<8x128xf32, #tpu.memory_space<vmem>>, vector<8x128xf32>
    tpu.vector_store %arg22[%c0_237, %c0_238], %664 {strides = array<i32>} : memref<8x128xf32, #tpu.memory_space<vmem>>, vector<8x128xf32>,
    return
  }
  func.func @transform_0(%arg0: i32) -> (i32, i32, i32) {
    %c0_i32 = arith.constant 0 : i32
    %c0_i32_0 = arith.constant 0 : i32
    %c0_i32_1 = arith.constant 0 : i32
    return %arg0, %c0_i32, %c0_i32_0 : i32, i32, i32
  }
  func.func @transform_1(%arg0: i32) -> (i32, i32) {
    %c0_i32 = arith.constant 0 : i32
    %c0_i32_0 = arith.constant 0 : i32
    %c0_i32_1 = arith.constant 0 : i32
    return %c0_i32, %c0_i32_0 : i32, i32
  }
  func.func @transform_2(%arg0: i32) -> (i32, i32) {
    %c0_i32 = arith.constant 0 : i32
    %c0_i32_0 = arith.constant 0 : i32
    %c0_i32_1 = arith.constant 0 : i32
    return %c0_i32, %c0_i32_0 : i32, i32
  }
  func.func @transform_3(%arg0: i32) -> (i32, i32) {
    %c0_i32 = arith.constant 0 : i32
    %c0_i32_0 = arith.constant 0 : i32
    %c0_i32_1 = arith.constant 0 : i32
    return %c0_i32, %c0_i32_0 : i32, i32
  }
  func.func @transform_4(%arg0: i32) -> (i32, i32) {
    %c0_i32 = arith.constant 0 : i32
    %c0_i32_0 = arith.constant 0 : i32
    %c0_i32_1 = arith.constant 0 : i32
    return %c0_i32, %c0_i32_0 : i32, i32
  }
  func.func @transform_5(%arg0: i32) -> (i32, i32) {
    %c0_i32 = arith.constant 0 : i32
    %c0_i32_0 = arith.constant 0 : i32
    %c0_i32_1 = arith.constant 0 : i32
    return %c0_i32, %c0_i32_0 : i32, i32
  }
  func.func @transform_6(%arg0: i32) -> (i32, i32) {
    %c0_i32 = arith.constant 0 : i32
    %c0_i32_0 = arith.constant 0 : i32
    %c0_i32_1 = arith.constant 0 : i32
    return %c0_i32, %c0_i32_0 : i32, i32
  }
  func.func @transform_7(%arg0: i32) -> (i32, i32) {
    %c0_i32 = arith.constant 0 : i32
    %c0_i32_0 = arith.constant 0 : i32
    %c0_i32_1 = arith.constant 0 : i32
    return %c0_i32, %c0_i32_0 : i32, i32
  }
  func.func @transform_8(%arg0: i32) -> (i32, i32) {
    %c0_i32 = arith.constant 0 : i32
    %c0_i32_0 = arith.constant 0 : i32
    %c0_i32_1 = arith.constant 0 : i32
    return %c0_i32, %c0_i32_0 : i32, i32
  }
  func.func @transform_9(%arg0: i32) -> (i32, i32) {
    %c0_i32 = arith.constant 0 : i32
    %c0_i32_0 = arith.constant 0 : i32
    %c0_i32_1 = arith.constant 0 : i32
    return %c0_i32, %c0_i32_0 : i32, i32
  }
  func.func @transform_10(%arg0: i32) -> (i32, i32) {
    %c0_i32 = arith.constant 0 : i32
    %c0_i32_0 = arith.constant 0 : i32
    %c0_i32_1 = arith.constant 0 : i32
    return %c0_i32, %c0_i32_0 : i32, i32
  }
  func.func @transform_11(%arg0: i32) -> (i32, i32) {
    %c0_i32 = arith.constant 0 : i32
    %c0_i32_0 = arith.constant 0 : i32
    %c0_i32_1 = arith.constant 0 : i32
    return %c0_i32, %c0_i32_0 : i32, i32
  }
  func.func @transform_12(%arg0: i32) -> (i32, i32) {
    %c0_i32 = arith.constant 0 : i32
    %c0_i32_0 = arith.constant 0 : i32
    %c0_i32_1 = arith.constant 0 : i32
    return %c0_i32, %c0_i32_0 : i32, i32
  }
  func.func @transform_13(%arg0: i32) -> (i32, i32) {
    %c0_i32 = arith.constant 0 : i32
    %c0_i32_0 = arith.constant 0 : i32
    %c0_i32_1 = arith.constant 0 : i32
    return %c0_i32, %c0_i32_0 : i32, i32
  }
  func.func @transform_14(%arg0: i32) -> (i32, i32) {
    %c0_i32 = arith.constant 0 : i32
    %c0_i32_0 = arith.constant 0 : i32
    %c0_i32_1 = arith.constant 0 : i32
    return %c0_i32, %c0_i32_0 : i32, i32
  }
  func.func @transform_15(%arg0: i32) -> (i32, i32) {
    %c0_i32 = arith.constant 0 : i32
    %c0_i32_0 = arith.constant 0 : i32
    %c0_i32_1 = arith.constant 0 : i32
    return %c0_i32, %c0_i32_0 : i32, i32
  }
  func.func @transform_16(%arg0: i32) -> (i32, i32) {
    %c0_i32 = arith.constant 0 : i32
    %c0_i32_0 = arith.constant 0 : i32
    %c0_i32_1 = arith.constant 0 : i32
    return %c0_i32, %c0_i32_0 : i32, i32
  }
  func.func @transform_17(%arg0: i32) -> (i32, i32) {
    %c0_i32 = arith.constant 0 : i32
    %c0_i32_0 = arith.constant 0 : i32
    %c0_i32_1 = arith.constant 0 : i32
    return %c0_i32, %c0_i32_0 : i32, i32
  }
  func.func @transform_18(%arg0: i32) -> (i32, i32) {
    %c0_i32 = arith.constant 0 : i32
    %c0_i32_0 = arith.constant 0 : i32
    %c0_i32_1 = arith.constant 0 : i32
    return %c0_i32, %c0_i32_0 : i32, i32
  }
  func.func @transform_19(%arg0: i32) -> (i32, i32) {
    %c0_i32 = arith.constant 0 : i32
    %c0_i32_0 = arith.constant 0 : i32
    %c0_i32_1 = arith.constant 0 : i32
    return %c0_i32, %c0_i32_0 : i32, i32
  }
  func.func @transform_20(%arg0: i32) -> (i32, i32) {
    %c0_i32 = arith.constant 0 : i32
    %c0_i32_0 = arith.constant 0 : i32
    return %arg0, %c0_i32 : i32, i32
  }
  func.func @transform_21(%arg0: i32) -> (i32, i32) {
    %c0_i32 = arith.constant 0 : i32
    %c0_i32_0 = arith.constant 0 : i32
    return %arg0, %c0_i32 : i32, i32
  }
}

</mosaic_0001>

<llo_original>
// kernel: cnn_bilstm_forward.1
$region0: #{cnn_bilstm_forward.1}
  #allocation0 [shape = 'u32[]', space=smem, size = 0x4, offset = 0x4, fixed_abs, tag = 'smem constant byte address 0x4 - core index']
  #allocation1 [shape = 'u32[144,128]{1,0:T(1,128)}', space=vmem, size = 0x12000, scoped, tag = 'internal scratch']
  #allocation2 [shape = 'f32[64,1024]{1,0:T(8,128)}', space=vmem, size = 0x40000, scoped, tag = 'scratch operand']
  %s0 = inlined_call_operand.vmem [shape: f32[1,64,16], index: 0, kind: input, shape index: {}]
  %s1 = inlined_call_operand.vmem [shape: bf16[48,64], index: 1, kind: input, shape index: {}]
  %s2 = inlined_call_operand.vmem [shape: f32[1,64], index: 2, kind: input, shape index: {}]
  %s3 = inlined_call_operand.vmem [shape: f32[1,64], index: 3, kind: input, shape index: {}]
  %s4 = inlined_call_operand.vmem [shape: f32[1,64], index: 4, kind: input, shape index: {}]
  %s5 = inlined_call_operand.vmem [shape: bf16[192,128], index: 5, kind: input, shape index: {}]
  %s6 = inlined_call_operand.vmem [shape: f32[1,128], index: 6, kind: input, shape index: {}]
  %s7 = inlined_call_operand.vmem [shape: f32[1,128], index: 7, kind: input, shape index: {}]
  %s8 = inlined_call_operand.vmem [shape: f32[1,128], index: 8, kind: input, shape index: {}, may-alias: {8,17}]
  %s9 = inlined_call_operand.vmem [shape: bf16[384,256], index: 9, kind: input, shape index: {}]
  %s10 = inlined_call_operand.vmem [shape: f32[1,256], index: 10, kind: input, shape index: {}]
  %s11 = inlined_call_operand.vmem [shape: f32[1,256], index: 11, kind: input, shape index: {}]
  %s12 = inlined_call_operand.vmem [shape: f32[1,256], index: 12, kind: input, shape index: {}]
  %s13 = inlined_call_operand.vmem [shape: bf16[256,1024], index: 13, kind: input, shape index: {}]
  %s14 = inlined_call_operand.vmem [shape: f32[1,1024], index: 14, kind: input, shape index: {}]
  %s15 = inlined_call_operand.vmem [shape: bf16[256,1024], index: 15, kind: input, shape index: {}]
  %s16 = inlined_call_operand.vmem [shape: bf16[256,128], index: 16, kind: input, shape index: {}]
  %s17 = inlined_call_operand.vmem [shape: f32[1,128], index: 17, kind: input, shape index: {}, may-alias: {8,17}]
  %s18 = inlined_call_operand.vmem [shape: bf16[128,128], index: 18, kind: input, shape index: {}]
  %s19 = inlined_call_operand.vmem [shape: f32[1,128], index: 19, kind: input, shape index: {}]
  %s20 = inlined_call_operand.vmem [shape: f32[8,256], index: 20, kind: output, shape index: {0}]
  %s21 = inlined_call_operand.vmem [shape: f32[8,128], index: 21, kind: output, shape index: {1}]
  %22 = xla_tuple %s20, %s21
  %s23 = sld [smem:[#allocation0]]
  $region98: #{cnn_bilstm_forward.1} parent=0
    _
  %s25 = ssub.s32 1, %s23
  %s26 = scalar_select 0, %s25, %s23
  // Predicated region
  $region2: #{cnn_bilstm_forward.1} parent=0 // pred_check
    _
  $region3: #{cnn_bilstm_forward.1} parent=0 // pred_check_branch
    %28 = sbr.rel (0) target = $region5
  $region4: #{cnn_bilstm_forward.1} parent=0 // pred_region
    _
  $region5: #{cnn_bilstm_forward.1} parent=0 // pred_fallthru
    _
  // Predicated region
  $region6: #{cnn_bilstm_forward.1} parent=0 // pred_check
    _
  $region7: #{cnn_bilstm_forward.1} parent=0 // pred_check_branch
    %30 = sbr.rel (0) target = $region9
  $region8: #{cnn_bilstm_forward.1} parent=0 // pred_region
    _
  $region9: #{cnn_bilstm_forward.1} parent=0 // pred_fallthru
    _
  // Predicated region
  $region10: #{cnn_bilstm_forward.1} parent=0 // pred_check
    _
  $region11: #{cnn_bilstm_forward.1} parent=0 // pred_check_branch
    %32 = sbr.rel (0) target = $region13
  $region12: #{cnn_bilstm_forward.1} parent=0 // pred_region
    _
  $region13: #{cnn_bilstm_forward.1} parent=0 // pred_fallthru
    _
  // Predicated region
  $region14: #{cnn_bilstm_forward.1} parent=0 // pred_check
    _
  $region15: #{cnn_bilstm_forward.1} parent=0 // pred_check_branch
    %34 = sbr.rel (0) target = $region17
  $region16: #{cnn_bilstm_forward.1} parent=0 // pred_region
    _
  $region17: #{cnn_bilstm_forward.1} parent=0 // pred_fallthru
    _
  // Predicated region
  $region18: #{cnn_bilstm_forward.1} parent=0 // pred_check
    _
  $region19: #{cnn_bilstm_forward.1} parent=0 // pred_check_branch
    %36 = sbr.rel (0) target = $region21
  $region20: #{cnn_bilstm_forward.1} parent=0 // pred_region
    _
  $region21: #{cnn_bilstm_forward.1} parent=0 // pred_fallthru
    _
  // Predicated region
  $region22: #{cnn_bilstm_forward.1} parent=0 // pred_check
    _
  $region23: #{cnn_bilstm_forward.1} parent=0 // pred_check_branch
    %38 = sbr.rel (0) target = $region25
  $region24: #{cnn_bilstm_forward.1} parent=0 // pred_region
    _
  $region25: #{cnn_bilstm_forward.1} parent=0 // pred_fallthru
    _
  // Predicated region
  $region26: #{cnn_bilstm_forward.1} parent=0 // pred_check
    _
  $region27: #{cnn_bilstm_forward.1} parent=0 // pred_check_branch
    %40 = sbr.rel (0) target = $region29
  $region28: #{cnn_bilstm_forward.1} parent=0 // pred_region
    _
  $region29: #{cnn_bilstm_forward.1} parent=0 // pred_fallthru
    _
  // Predicated region
  $region30: #{cnn_bilstm_forward.1} parent=0 // pred_check
    _
  $region31: #{cnn_bilstm_forward.1} parent=0 // pred_check_branch
    %42 = sbr.rel (0) target = $region33
  $region32: #{cnn_bilstm_forward.1} parent=0 // pred_region
    _
  $region33: #{cnn_bilstm_forward.1} parent=0 // pred_fallthru
    _
  // Predicated region
  $region34: #{cnn_bilstm_forward.1} parent=0 // pred_check
    _
  $region35: #{cnn_bilstm_forward.1} parent=0 // pred_check_branch
    %44 = sbr.rel (0) target = $region37
  $region36: #{cnn_bilstm_forward.1} parent=0 // pred_region
    _
  $region37: #{cnn_bilstm_forward.1} parent=0 // pred_fallthru
    _
  // Predicated region
  $region38: #{cnn_bilstm_forward.1} parent=0 // pred_check
    _
  $region39: #{cnn_bilstm_forward.1} parent=0 // pred_check_branch
    %46 = sbr.rel (0) target = $region41
  $region40: #{cnn_bilstm_forward.1} parent=0 // pred_region
    _
  $region41: #{cnn_bilstm_forward.1} parent=0 // pred_fallthru
    _
  // Predicated region
  $region42: #{cnn_bilstm_forward.1} parent=0 // pred_check
    _
  $region43: #{cnn_bilstm_forward.1} parent=0 // pred_check_branch
    %48 = sbr.rel (0) target = $region45
  $region44: #{cnn_bilstm_forward.1} parent=0 // pred_region
    _
  $region45: #{cnn_bilstm_forward.1} parent=0 // pred_fallthru
    _
  // Predicated region
  $region46: #{cnn_bilstm_forward.1} parent=0 // pred_check
    _
  $region47: #{cnn_bilstm_forward.1} parent=0 // pred_check_branch
    %50 = sbr.rel (0) target = $region49
  $region48: #{cnn_bilstm_forward.1} parent=0 // pred_region
    _
  $region49: #{cnn_bilstm_forward.1} parent=0 // pred_fallthru
    _
  // Predicated region
  $region50: #{cnn_bilstm_forward.1} parent=0 // pred_check
    _
  $region51: #{cnn_bilstm_forward.1} parent=0 // pred_check_branch
    %52 = sbr.rel (0) target = $region53
  $region52: #{cnn_bilstm_forward.1} parent=0 // pred_region
    _
  $region53: #{cnn_bilstm_forward.1} parent=0 // pred_fallthru
    _
  // Predicated region
  $region54: #{cnn_bilstm_forward.1} parent=0 // pred_check
    _
  $region55: #{cnn_bilstm_forward.1} parent=0 // pred_check_branch
    %54 = sbr.rel (0) target = $region57
  $region56: #{cnn_bilstm_forward.1} parent=0 // pred_region
    _
  $region57: #{cnn_bilstm_forward.1} parent=0 // pred_fallthru
    _
  // Predicated region
  $region58: #{cnn_bilstm_forward.1} parent=0 // pred_check
    _
  $region59: #{cnn_bilstm_forward.1} parent=0 // pred_check_branch
    %56 = sbr.rel (0) target = $region61
  $region60: #{cnn_bilstm_forward.1} parent=0 // pred_region
    _
  $region61: #{cnn_bilstm_forward.1} parent=0 // pred_fallthru
    _
  // Predicated region
  $region62: #{cnn_bilstm_forward.1} parent=0 // pred_check
    _
  $region63: #{cnn_bilstm_forward.1} parent=0 // pred_check_branch
    %58 = sbr.rel (0) target = $region65
  $region64: #{cnn_bilstm_forward.1} parent=0 // pred_region
    _
  $region65: #{cnn_bilstm_forward.1} parent=0 // pred_fallthru
    _
  // Predicated region
  $region66: #{cnn_bilstm_forward.1} parent=0 // pred_check
    _
  $region67: #{cnn_bilstm_forward.1} parent=0 // pred_check_branch
    %60 = sbr.rel (0) target = $region69
  $region68: #{cnn_bilstm_forward.1} parent=0 // pred_region
    _
  $region69: #{cnn_bilstm_forward.1} parent=0 // pred_fallthru
    _
  // Predicated region
  $region70: #{cnn_bilstm_forward.1} parent=0 // pred_check
    _
  $region71: #{cnn_bilstm_forward.1} parent=0 // pred_check_branch
    %62 = sbr.rel (0) target = $region73
  $region72: #{cnn_bilstm_forward.1} parent=0 // pred_region
    _
  $region73: #{cnn_bilstm_forward.1} parent=0 // pred_fallthru
    _
  // Predicated region
  $region74: #{cnn_bilstm_forward.1} parent=0 // pred_check
    _
  $region75: #{cnn_bilstm_forward.1} parent=0 // pred_check_branch
    %64 = sbr.rel (0) target = $region77
  $region76: #{cnn_bilstm_forward.1} parent=0 // pred_region
    _
  $region77: #{cnn_bilstm_forward.1} parent=0 // pred_fallthru
    _
  // Predicated region
  $region78: #{cnn_bilstm_forward.1} parent=0 // pred_check
    _
  $region79: #{cnn_bilstm_forward.1} parent=0 // pred_check_branch
    %66 = sbr.rel (0) target = $region81
  $region80: #{cnn_bilstm_forward.1} parent=0 // pred_region
    _
  $region81: #{cnn_bilstm_forward.1} parent=0 // pred_fallthru
    _
  %v68 = vld [vmem:[%s0] sm:$0xff]
  %v69 = vld [vmem:[%s0 + $0x8] sm:$0xff]
  %v70 = vld [vmem:[%s0 + $0x10] sm:$0xff]
  %v71 = vld [vmem:[%s0 + $0x18] sm:$0xff]
  %v72 = vld [vmem:[%s0 + $0x20] sm:$0xff]
  %v73 = vld [vmem:[%s0 + $0x28] sm:$0xff]
  %v74 = vld [vmem:[%s0 + $0x30] sm:$0xff]
  %v75 = vld [vmem:[%s0 + $0x38] sm:$0xff]
  %84 = vrot.lane.b32.xlu0 %v68, 16
  %v85 = vpop.permute.xlu0 %84
  %86 = vrot.lane.b32.xlu0 %v69, 16
  %v87 = vpop.permute.xlu0 %86
  %88 = vrot.lane.b32.xlu0 %v70, 16
  %v89 = vpop.permute.xlu0 %88
  %90 = vrot.lane.b32.xlu0 %v71, 16
  %v91 = vpop.permute.xlu0 %90
  %92 = vrot.lane.b32.xlu0 %v72, 16
  %v93 = vpop.permute.xlu0 %92
  %94 = vrot.lane.b32.xlu0 %v73, 16
  %v95 = vpop.permute.xlu0 %94
  %96 = vrot.lane.b32.xlu0 %v74, 16
  %v97 = vpop.permute.xlu0 %96
  %98 = vrot.lane.b32.xlu0 %v75, 16
  %v99 = vpop.permute.xlu0 %98
  %109 = vrot.lane.b32.xlu0 %v69, 32
  %v110 = vpop.permute.xlu0 %109
  %111 = vrot.lane.b32.xlu0 %v70, 32
  %v112 = vpop.permute.xlu0 %111
  %113 = vrot.lane.b32.xlu0 %v71, 32
  %v114 = vpop.permute.xlu0 %113
  %115 = vrot.lane.b32.xlu0 %v72, 32
  %v116 = vpop.permute.xlu0 %115
  %117 = vrot.lane.b32.xlu0 %v73, 32
  %v118 = vpop.permute.xlu0 %117
  %119 = vrot.lane.b32.xlu0 %v74, 32
  %v120 = vpop.permute.xlu0 %119
  %121 = vrot.lane.b32.xlu0 %v75, 32
  %v122 = vpop.permute.xlu0 %121
  %123 = vrot.lane.b32.xlu0 0.0, 32
  %v124 = vpop.permute.xlu0 %123
  %vm133 = vcmask 130048
  %v134 = vsel %vm133, 0.0, %v85
  %v135 = vsel %vm133, %v68, %v87
  %v136 = vsel %vm133, %v69, %v89
  %v137 = vsel %vm133, %v70, %v91
  %v138 = vsel %vm133, %v71, %v93
  %v139 = vsel %vm133, %v72, %v95
  %v140 = vsel %vm133, %v73, %v97
  %v141 = vsel %vm133, %v74, %v99
  %vm142 = vcmask 261120
  %v143 = vsel %vm142, %v134, %v110
  %v144 = vsel %vm142, %v135, %v112
  %v145 = vsel %vm142, %v136, %v114
  %v146 = vsel %vm142, %v137, %v116
  %v147 = vsel %vm142, %v138, %v118
  %v148 = vsel %vm142, %v139, %v120
  %v149 = vsel %vm142, %v140, %v122
  %v150 = vsel %vm142, %v141, %v124
  %v151 = vpack.c.bf16 %v144, %v143
  %v152 = vpack.c.bf16 %v146, %v145
  %v153 = vpack.c.bf16 %v148, %v147
  %v154 = vpack.c.bf16 %v150, %v149
  %v155 = vld [vmem:[%s1] sm:$0xf]
  %v156 = vld [vmem:[%s1 + $0x4] sm:$0xf]
  %v157 = vld [vmem:[%s1 + $0x8] sm:$0xf]
  %v158 = vld [vmem:[%s1 + $0xc] sm:$0xf]
  %v159 = vld [vmem:[%s1 + $0x10] sm:$0xf]
  %v160 = vld [vmem:[%s1 + $0x14] sm:$0xf]
  %v161 = vld [vmem:[%s2] sm:$0x1]
  %v163 = vlaneseq
  %v164 = vshrl.u32 %v163, 7
  %v165 = vsub.s32 0, %v164
  %v166 = vrot.slane %v161, %v165
  %v174 = vunpack.c.l.b16 %v155
  %v175 = vunpack.c.l.b16 %v156
  %v176 = vunpack.c.l.b16 %v157
  %v177 = vunpack.c.l.b16 %v158
  %v178 = vunpack.c.l.b16 %v159
  %v179 = vunpack.c.l.b16 %v160
  %v180 = vpack.c.b16 %v175, %v174
  %v181 = vpack.c.b16 %v177, %v176
  %v182 = vpack.c.b16 %v179, %v178
  %vm186 = vcmask 392192
  %v188 = vsel %vm186, %v151, 0
  %v191 = vsel %vm186, %v152, 0
  %v194 = vsel %vm186, %v153, 0
  %v197 = vsel %vm186, %v154, 0
  %199 = vmatprep.subr.bf16.mxu0 0
  %200 = vmatpush1.bf16.msra.mxu0 %v180
  %201 = vmatprep.subr.bf16.mxu0 0
  %202 = vmatpush1.bf16.msra.mxu0 %v181
  %203 = vmatprep.subr.bf16.mxu0 0
  %204 = vmatpush1.bf16.msra.mxu0 %v182
  %205 = vmatprep.subr.bf16.mxu0 0
  %206 = vmatpush1.bf16.msra.mxu0 0
  %207 = vmatprep.subr.bf16.mxu0 0
  %208 = vmatpush1.bf16.msra.mxu0 0
  %209 = vmatprep.subr.bf16.mxu0 0
  %210 = vmatpush1.bf16.msra.mxu0 0
  %211 = vmatprep.subr.bf16.mxu0 0
  %212 = vmatpush1.bf16.msra.mxu0 0
  %213 = vmatprep.subr.bf16.mxu0 0
  %214 = vmatpush1.bf16.msra.mxu0 0
  %215 = vmatprep.subr.bf16.mxu0 0
  %216 = vmatpush1.bf16.msra.mxu0 0
  %217 = vmatprep.subr.bf16.mxu0 0
  %218 = vmatpush1.bf16.msra.mxu0 0
  %219 = vmatprep.subr.bf16.mxu0 0
  %220 = vmatpush1.bf16.msra.mxu0 0
  %221 = vmatprep.subr.bf16.mxu0 0
  %222 = vmatpush1.bf16.msra.mxu0 0
  %223 = vmatprep.subr.bf16.mxu0 0
  %224 = vmatpush1.bf16.msra.mxu0 0
  %225 = vmatprep.subr.bf16.mxu0 0
  %226 = vmatpush1.bf16.msra.mxu0 0
  %227 = vmatprep.subr.bf16.mxu0 0
  %228 = vmatpush1.bf16.msra.mxu0 0
  %229 = vmatprep.subr.bf16.mxu0 0
  %230 = vmatpush1.bf16.msra.mxu0 0
  %231 = vmatprep.mubr.bf16.mxu0 0
  %232 = vmatmul.mubr.bf16.gmra.mrb[0].mxu0 %v188
  %v233 = vpop.f32.mrb[0].mxu0
  %v234 = vadd.f32 %v166, %v233
  %v235 = vpop.f32.mrb[0].mxu0
  %v236 = vpop.f32.mrb[0].mxu0
  %v237 = vadd.f32 %v166, %v236
  %v238 = vpop.f32.mrb[0].mxu0
  %239 = vmatprep.mubr.bf16.mxu0 0
  %240 = vmatmul.mubr.bf16.gmra.mrb[0].mxu0 %v191
  %v241 = vpop.f32.mrb[0].mxu0
  %v242 = vadd.f32 %v166, %v241
  %v243 = vpop.f32.mrb[0].mxu0
  %v244 = vpop.f32.mrb[0].mxu0
  %v245 = vadd.f32 %v166, %v244
  %v246 = vpop.f32.mrb[0].mxu0
  %247 = vmatprep.mubr.bf16.mxu0 0
  %248 = vmatmul.mubr.bf16.gmra.mrb[0].mxu0 %v194
  %v249 = vpop.f32.mrb[0].mxu0
  %v250 = vadd.f32 %v166, %v249
  %v251 = vpop.f32.mrb[0].mxu0
  %v252 = vpop.f32.mrb[0].mxu0
  %v253 = vadd.f32 %v166, %v252
  %v254 = vpop.f32.mrb[0].mxu0
  %255 = vmatprep.mubr.bf16.mxu0 0
  %256 = vmatmul.mubr.bf16.gmra.mrb[0].mxu0 %v197
  %v257 = vpop.f32.mrb[0].mxu0
  %v258 = vadd.f32 %v166, %v257
  %v259 = vpop.f32.mrb[0].mxu0
  %v260 = vpop.f32.mrb[0].mxu0
  %v261 = vadd.f32 %v166, %v260
  %v262 = vpop.f32.mrb[0].mxu0
  %263 = vdwg.mxu0
  %v264 = vmax.f32 %v234, 0.0
  %v265 = vmax.f32 %v237, 0.0
  %v266 = vmax.f32 %v242, 0.0
  %v267 = vmax.f32 %v245, 0.0
  %v268 = vmax.f32 %v250, 0.0
  %v269 = vmax.f32 %v253, 0.0
  %v270 = vmax.f32 %v258, 0.0
  %v271 = vmax.f32 %v261, 0.0
  %v272 = vld [vmem:[%s3] sm:$0x1]
  %v274 = vlaneseq
  %v275 = vshrl.u32 %v274, 7
  %v276 = vsub.s32 0, %v275
  %v277 = vrot.slane %v272, %v276
  %v279 = vmul.f32 %v264, %v277
  %v280 = vmul.f32 %v265, %v277
  %v281 = vmul.f32 %v266, %v277
  %v282 = vmul.f32 %v267, %v277
  %v283 = vmul.f32 %v268, %v277
  %v284 = vmul.f32 %v269, %v277
  %v285 = vmul.f32 %v270, %v277
  %v286 = vmul.f32 %v271, %v277
  %v287 = vld [vmem:[%s4] sm:$0x1]
  %v289 = vlaneseq
  %v290 = vshrl.u32 %v289, 7
  %v291 = vsub.s32 0, %v290
  %v292 = vrot.slane %v287, %v291
  %v294 = vadd.f32 %v279, %v292
  %v295 = vadd.f32 %v280, %v292
  %v296 = vadd.f32 %v281, %v292
  %v297 = vadd.f32 %v282, %v292
  %v298 = vadd.f32 %v283, %v292
  %v299 = vadd.f32 %v284, %v292
  %v300 = vadd.f32 %v285, %v292
  %v301 = vadd.f32 %v286, %v292
  %310 = vrot.lane.b32.xlu0 %v294, 64
  %v311 = vpop.permute.xlu0 %310
  %312 = vrot.lane.b32.xlu0 %v295, 64
  %v313 = vpop.permute.xlu0 %312
  %314 = vrot.lane.b32.xlu0 %v296, 64
  %v315 = vpop.permute.xlu0 %314
  %316 = vrot.lane.b32.xlu0 %v297, 64
  %v317 = vpop.permute.xlu0 %316
  %318 = vrot.lane.b32.xlu0 %v298, 64
  %v319 = vpop.permute.xlu0 %318
  %320 = vrot.lane.b32.xlu0 %v299, 64
  %v321 = vpop.permute.xlu0 %320
  %322 = vrot.lane.b32.xlu0 %v300, 64
  %v323 = vpop.permute.xlu0 %322
  %324 = vrot.lane.b32.xlu0 %v301, 64
  %v325 = vpop.permute.xlu0 %324
  %vm334 = vcmask 523264
  %v335 = vsel %vm334, 0.0, %v311
  %v336 = vsel %vm334, %v294, %v313
  %v337 = vsel %vm334, %v295, %v315
  %v338 = vsel %vm334, %v296, %v317
  %v339 = vsel %vm334, %v297, %v319
  %v340 = vsel %vm334, %v298, %v321
  %v341 = vsel %vm334, %v299, %v323
  %v342 = vsel %vm334, %v300, %v325
  %v343 = vpack.c.bf16 %v336, %v335
  %v344 = vpack.c.bf16 %v296, %v295
  %v345 = vpack.c.bf16 %v338, %v337
  %v346 = vpack.c.bf16 %v298, %v297
  %v347 = vpack.c.bf16 %v340, %v339
  %v348 = vpack.c.bf16 %v300, %v299
  %v349 = vpack.c.bf16 %v342, %v341
  %v350 = vpack.c.bf16 0.0, %v301
  %v351 = vld [vmem:[%s5] sm:$0xf]
  %v352 = vld [vmem:[%s5 + $0x4] sm:$0xf]
  %v353 = vld [vmem:[%s5 + $0x8] sm:$0xf]
  %v354 = vld [vmem:[%s5 + $0xc] sm:$0xf]
  %v355 = vld [vmem:[%s5 + $0x10] sm:$0xf]
  %v356 = vld [vmem:[%s5 + $0x14] sm:$0xf]
  %v357 = vld [vmem:[%s5 + $0x18] sm:$0xf]
  %v358 = vld [vmem:[%s5 + $0x1c] sm:$0xf]
  %v359 = vld [vmem:[%s5 + $0x20] sm:$0xf]
  %v360 = vld [vmem:[%s5 + $0x24] sm:$0xf]
  %v361 = vld [vmem:[%s5 + $0x28] sm:$0xf]
  %v362 = vld [vmem:[%s5 + $0x2c] sm:$0xf]
  %v363 = vld [vmem:[%s5 + $0x30] sm:$0xf]
  %v364 = vld [vmem:[%s5 + $0x34] sm:$0xf]
  %v365 = vld [vmem:[%s5 + $0x38] sm:$0xf]
  %v366 = vld [vmem:[%s5 + $0x3c] sm:$0xf]
  %v367 = vld [vmem:[%s5 + $0x40] sm:$0xf]
  %v368 = vld [vmem:[%s5 + $0x44] sm:$0xf]
  %v369 = vld [vmem:[%s5 + $0x48] sm:$0xf]
  %v370 = vld [vmem:[%s5 + $0x4c] sm:$0xf]
  %v371 = vld [vmem:[%s5 + $0x50] sm:$0xf]
  %v372 = vld [vmem:[%s5 + $0x54] sm:$0xf]
  %v373 = vld [vmem:[%s5 + $0x58] sm:$0xf]
  %v374 = vld [vmem:[%s5 + $0x5c] sm:$0xf]
  %v375 = vld [vmem:[%s6] sm:$0x1]
  %v377 = vlaneseq
  %v378 = vshrl.u32 %v377, 7
  %v379 = vsub.s32 0, %v378
  %v380 = vrot.slane %v375, %v379
  %v406 = vunpack.c.l.b16 %v351
  %v407 = vunpack.c.l.b16 %v352
  %v408 = vunpack.c.l.b16 %v353
  %v409 = vunpack.c.l.b16 %v354
  %v410 = vunpack.c.l.b16 %v355
  %v411 = vunpack.c.l.b16 %v356
  %v412 = vunpack.c.l.b16 %v357
  %v413 = vunpack.c.l.b16 %v358
  %v414 = vunpack.c.l.b16 %v359
  %v415 = vunpack.c.l.b16 %v360
  %v416 = vunpack.c.l.b16 %v361
  %v417 = vunpack.c.l.b16 %v362
  %v418 = vunpack.c.l.b16 %v363
  %v419 = vunpack.c.l.b16 %v364
  %v420 = vunpack.c.l.b16 %v365
  %v421 = vunpack.c.l.b16 %v366
  %v422 = vunpack.c.l.b16 %v367
  %v423 = vunpack.c.l.b16 %v368
  %v424 = vunpack.c.l.b16 %v369
  %v425 = vunpack.c.l.b16 %v370
  %v426 = vunpack.c.l.b16 %v371
  %v427 = vunpack.c.l.b16 %v372
  %v428 = vunpack.c.l.b16 %v373
  %v429 = vunpack.c.l.b16 %v374
  %v430 = vpack.c.b16 %v407, %v406
  %v431 = vpack.c.b16 %v409, %v408
  %v432 = vpack.c.b16 %v411, %v410
  %v433 = vpack.c.b16 %v413, %v412
  %v434 = vpack.c.b16 %v415, %v414
  %v435 = vpack.c.b16 %v417, %v416
  %v436 = vpack.c.b16 %v419, %v418
  %v437 = vpack.c.b16 %v421, %v420
  %v438 = vpack.c.b16 %v423, %v422
  %v439 = vpack.c.b16 %v425, %v424
  %v440 = vpack.c.b16 %v427, %v426
  %v441 = vpack.c.b16 %v429, %v428
  %v455 = vsel %vm334, %v344, 0
  %v458 = vsel %vm334, %v346, 0
  %v461 = vsel %vm334, %v348, 0
  %v464 = vsel %vm334, %v350, 0
  %466 = vmatprep.subr.bf16.mxu0 0
  %467 = vmatpush1.bf16.msra.mxu0 %v430
  %468 = vmatprep.subr.bf16.mxu0 0
  %469 = vmatpush1.bf16.msra.mxu0 %v431
  %470 = vmatprep.subr.bf16.mxu0 0
  %471 = vmatpush1.bf16.msra.mxu0 %v432
  %472 = vmatprep.subr.bf16.mxu0 0
  %473 = vmatpush1.bf16.msra.mxu0 %v433
  %474 = vmatprep.subr.bf16.mxu0 0
  %475 = vmatpush1.bf16.msra.mxu0 %v434
  %476 = vmatprep.subr.bf16.mxu0 0
  %477 = vmatpush1.bf16.msra.mxu0 %v435
  %478 = vmatprep.subr.bf16.mxu0 0
  %479 = vmatpush1.bf16.msra.mxu0 %v436
  %480 = vmatprep.subr.bf16.mxu0 0
  %481 = vmatpush1.bf16.msra.mxu0 %v437
  %482 = vmatprep.subr.bf16.mxu0 0
  %483 = vmatpush1.bf16.msra.mxu0 %v438
  %484 = vmatprep.subr.bf16.mxu0 0
  %485 = vmatpush1.bf16.msra.mxu0 %v439
  %486 = vmatprep.subr.bf16.mxu0 0
  %487 = vmatpush1.bf16.msra.mxu0 %v440
  %488 = vmatprep.subr.bf16.mxu0 0
  %489 = vmatpush1.bf16.msra.mxu0 %v441
  %490 = vmatprep.subr.bf16.mxu0 0
  %491 = vmatpush1.bf16.msra.mxu0 0
  %492 = vmatprep.subr.bf16.mxu0 0
  %493 = vmatpush1.bf16.msra.mxu0 0
  %494 = vmatprep.subr.bf16.mxu0 0
  %495 = vmatpush1.bf16.msra.mxu0 0
  %496 = vmatprep.subr.bf16.mxu0 0
  %497 = vmatpush1.bf16.msra.mxu0 0
  %498 = vmatprep.mubr.bf16.mxu0 %v455
  %499 = vmatmul.mubr.bf16.gmra.mrb[0].mxu0 %v343
  %v500 = vpop.f32.mrb[0].mxu0
  %v501 = vadd.f32 %v380, %v500
  %v502 = vpop.f32.mrb[0].mxu0
  %v503 = vpop.f32.mrb[0].mxu0
  %v504 = vadd.f32 %v380, %v503
  %v505 = vpop.f32.mrb[0].mxu0
  %506 = vmatprep.mubr.bf16.mxu0 %v458
  %507 = vmatmul.mubr.bf16.gmra.mrb[0].mxu0 %v345
  %v508 = vpop.f32.mrb[0].mxu0
  %v509 = vadd.f32 %v380, %v508
  %v510 = vpop.f32.mrb[0].mxu0
  %v511 = vpop.f32.mrb[0].mxu0
  %v512 = vadd.f32 %v380, %v511
  %v513 = vpop.f32.mrb[0].mxu0
  %514 = vmatprep.mubr.bf16.mxu0 %v461
  %515 = vmatmul.mubr.bf16.gmra.mrb[0].mxu0 %v347
  %v516 = vpop.f32.mrb[0].mxu0
  %v517 = vadd.f32 %v380, %v516
  %v518 = vpop.f32.mrb[0].mxu0
  %v519 = vpop.f32.mrb[0].mxu0
  %v520 = vadd.f32 %v380, %v519
  %v521 = vpop.f32.mrb[0].mxu0
  %522 = vmatprep.mubr.bf16.mxu0 %v464
  %523 = vmatmul.mubr.bf16.gmra.mrb[0].mxu0 %v349
  %v524 = vpop.f32.mrb[0].mxu0
  %v525 = vadd.f32 %v380, %v524
  %v526 = vpop.f32.mrb[0].mxu0
  %v527 = vpop.f32.mrb[0].mxu0
  %v528 = vadd.f32 %v380, %v527
  %v529 = vpop.f32.mrb[0].mxu0
  %530 = vdwg.mxu0
  %v531 = vmax.f32 %v501, 0.0
  %v532 = vmax.f32 %v504, 0.0
  %v533 = vmax.f32 %v509, 0.0
  %v534 = vmax.f32 %v512, 0.0
  %v535 = vmax.f32 %v517, 0.0
  %v536 = vmax.f32 %v520, 0.0
  %v537 = vmax.f32 %v525, 0.0
  %v538 = vmax.f32 %v528, 0.0
  %v539 = vld [vmem:[%s7] sm:$0x1]
  %v541 = vlaneseq
  %v542 = vshrl.u32 %v541, 7
  %v543 = vsub.s32 0, %v542
  %v544 = vrot.slane %v539, %v543
  %v546 = vmul.f32 %v531, %v544
  %v547 = vmul.f32 %v532, %v544
  %v548 = vmul.f32 %v533, %v544
  %v549 = vmul.f32 %v534, %v544
  %v550 = vmul.f32 %v535, %v544
  %v551 = vmul.f32 %v536, %v544
  %v552 = vmul.f32 %v537, %v544
  %v553 = vmul.f32 %v538, %v544
  %v554 = vld [vmem:[%s8] sm:$0x1]
  %v556 = vlaneseq
  %v557 = vshrl.u32 %v556, 7
  %v558 = vsub.s32 0, %v557
  %v559 = vrot.slane %v554, %v558
  %v561 = vadd.f32 %v546, %v559
  %v562 = vadd.f32 %v547, %v559
  %v563 = vadd.f32 %v548, %v559
  %v564 = vadd.f32 %v549, %v559
  %v565 = vadd.f32 %v550, %v559
  %v566 = vadd.f32 %v551, %v559
  %v567 = vadd.f32 %v552, %v559
  %v568 = vadd.f32 %v553, %v559
  %v569 = vpack.c.bf16 %v561, 0.0
  %v570 = vpack.c.bf16 %v562, %v561
  %v571 = vpack.c.bf16 %v563, %v562
  %v572 = vpack.c.bf16 %v564, %v563
  %v573 = vpack.c.bf16 %v565, %v564
  %v574 = vpack.c.bf16 %v566, %v565
  %v575 = vpack.c.bf16 %v567, %v566
  %v576 = vpack.c.bf16 %v568, %v567
  %v577 = vpack.c.bf16 0.0, %v568
  %v578 = vld [vmem:[%s9] sm:$0xff]
  %v579 = vld [vmem:[%s9 + $0x8] sm:$0xff]
  %v580 = vld [vmem:[%s9 + $0x10] sm:$0xff]
  %v581 = vld [vmem:[%s9 + $0x18] sm:$0xff]
  %v582 = vld [vmem:[%s9 + $0x20] sm:$0xff]
  %v583 = vld [vmem:[%s9 + $0x28] sm:$0xff]
  %v584 = vld [vmem:[%s9 + $0x30] sm:$0xff]
  %v585 = vld [vmem:[%s9 + $0x38] sm:$0xff]
  %v586 = vld [vmem:[%s9 + $0x40] sm:$0xff]
  %v587 = vld [vmem:[%s9 + $0x48] sm:$0xff]
  %v588 = vld [vmem:[%s9 + $0x50] sm:$0xff]
  %v589 = vld [vmem:[%s9 + $0x58] sm:$0xff]
  %v590 = vld [vmem:[%s9 + $0x60] sm:$0xff]
  %v591 = vld [vmem:[%s9 + $0x68] sm:$0xff]
  %v592 = vld [vmem:[%s9 + $0x70] sm:$0xff]
  %v593 = vld [vmem:[%s9 + $0x78] sm:$0xff]
  %v594 = vld [vmem:[%s9 + $0x80] sm:$0xff]
  %v595 = vld [vmem:[%s9 + $0x88] sm:$0xff]
  %v596 = vld [vmem:[%s9 + $0x90] sm:$0xff]
  %v597 = vld [vmem:[%s9 + $0x98] sm:$0xff]
  %v598 = vld [vmem:[%s9 + $0xa0] sm:$0xff]
  %v599 = vld [vmem:[%s9 + $0xa8] sm:$0xff]
  %v600 = vld [vmem:[%s9 + $0xb0] sm:$0xff]
  %v601 = vld [vmem:[%s9 + $0xb8] sm:$0xff]
  %v602 = vld [vmem:[%s9 + $0xc0] sm:$0xff]
  %v603 = vld [vmem:[%s9 + $0xc8] sm:$0xff]
  %v604 = vld [vmem:[%s9 + $0xd0] sm:$0xff]
  %v605 = vld [vmem:[%s9 + $0xd8] sm:$0xff]
  %v606 = vld [vmem:[%s9 + $0xe0] sm:$0xff]
  %v607 = vld [vmem:[%s9 + $0xe8] sm:$0xff]
  %v608 = vld [vmem:[%s9 + $0xf0] sm:$0xff]
  %v609 = vld [vmem:[%s9 + $0xf8] sm:$0xff]
  %v610 = vld [vmem:[%s9 + $0x100] sm:$0xff]
  %v611 = vld [vmem:[%s9 + $0x108] sm:$0xff]
  %v612 = vld [vmem:[%s9 + $0x110] sm:$0xff]
  %v613 = vld [vmem:[%s9 + $0x118] sm:$0xff]
  %v614 = vld [vmem:[%s9 + $0x120] sm:$0xff]
  %v615 = vld [vmem:[%s9 + $0x128] sm:$0xff]
  %v616 = vld [vmem:[%s9 + $0x130] sm:$0xff]
  %v617 = vld [vmem:[%s9 + $0x138] sm:$0xff]
  %v618 = vld [vmem:[%s9 + $0x140] sm:$0xff]
  %v619 = vld [vmem:[%s9 + $0x148] sm:$0xff]
  %v620 = vld [vmem:[%s9 + $0x150] sm:$0xff]
  %v621 = vld [vmem:[%s9 + $0x158] sm:$0xff]
  %v622 = vld [vmem:[%s9 + $0x160] sm:$0xff]
  %v623 = vld [vmem:[%s9 + $0x168] sm:$0xff]
  %v624 = vld [vmem:[%s9 + $0x170] sm:$0xff]
  %v625 = vld [vmem:[%s9 + $0x178] sm:$0xff]
  %v626 = vld [vmem:[%s10] sm:$0x3]
  %v628 = vlaneseq
  %v629 = vshrl.u32 %v628, 7
  %v630 = vsub.s32 0, %v629
  %v631 = vrot.slane %v626, %v630
  %v632 = vlaneseq
  %v633 = vshrl.u32 %v632, 7
  %v634 = vsub.s32 1, %v633
  %v635 = vrot.slane %v626, %v634
  %v686 = vunpack.c.l.b16 %v578
  %v687 = vunpack.c.h.b16 %v578
  %v688 = vunpack.c.l.b16 %v579
  %v689 = vunpack.c.h.b16 %v579
  %v690 = vunpack.c.l.b16 %v580
  %v691 = vunpack.c.h.b16 %v580
  %v692 = vunpack.c.l.b16 %v581
  %v693 = vunpack.c.h.b16 %v581
  %v694 = vunpack.c.l.b16 %v582
  %v695 = vunpack.c.h.b16 %v582
  %v696 = vunpack.c.l.b16 %v583
  %v697 = vunpack.c.h.b16 %v583
  %v698 = vunpack.c.l.b16 %v584
  %v699 = vunpack.c.h.b16 %v584
  %v700 = vunpack.c.l.b16 %v585
  %v701 = vunpack.c.h.b16 %v585
  %v702 = vunpack.c.l.b16 %v586
  %v703 = vunpack.c.h.b16 %v586
  %v704 = vunpack.c.l.b16 %v587
  %v705 = vunpack.c.h.b16 %v587
  %v706 = vunpack.c.l.b16 %v588
  %v707 = vunpack.c.h.b16 %v588
  %v708 = vunpack.c.l.b16 %v589
  %v709 = vunpack.c.h.b16 %v589
  %v710 = vunpack.c.l.b16 %v590
  %v711 = vunpack.c.h.b16 %v590
  %v712 = vunpack.c.l.b16 %v591
  %v713 = vunpack.c.h.b16 %v591
  %v714 = vunpack.c.l.b16 %v592
  %v715 = vunpack.c.h.b16 %v592
  %v716 = vunpack.c.l.b16 %v593
  %v717 = vunpack.c.h.b16 %v593
  %v718 = vunpack.c.l.b16 %v594
  %v719 = vunpack.c.h.b16 %v594
  %v720 = vunpack.c.l.b16 %v595
  %v721 = vunpack.c.h.b16 %v595
  %v722 = vunpack.c.l.b16 %v596
  %v723 = vunpack.c.h.b16 %v596
  %v724 = vunpack.c.l.b16 %v597
  %v725 = vunpack.c.h.b16 %v597
  %v726 = vunpack.c.l.b16 %v598
  %v727 = vunpack.c.h.b16 %v598
  %v728 = vunpack.c.l.b16 %v599
  %v729 = vunpack.c.h.b16 %v599
  %v730 = vunpack.c.l.b16 %v600
  %v731 = vunpack.c.h.b16 %v600
  %v732 = vunpack.c.l.b16 %v601
  %v733 = vunpack.c.h.b16 %v601
  %v734 = vunpack.c.l.b16 %v602
  %v735 = vunpack.c.h.b16 %v602
  %v736 = vunpack.c.l.b16 %v603
  %v737 = vunpack.c.h.b16 %v603
  %v738 = vunpack.c.l.b16 %v604
  %v739 = vunpack.c.h.b16 %v604
  %v740 = vunpack.c.l.b16 %v605
  %v741 = vunpack.c.h.b16 %v605
  %v742 = vunpack.c.l.b16 %v606
  %v743 = vunpack.c.h.b16 %v606
  %v744 = vunpack.c.l.b16 %v607
  %v745 = vunpack.c.h.b16 %v607
  %v746 = vunpack.c.l.b16 %v608
  %v747 = vunpack.c.h.b16 %v608
  %v748 = vunpack.c.l.b16 %v609
  %v749 = vunpack.c.h.b16 %v609
  %v750 = vunpack.c.l.b16 %v610
  %v751 = vunpack.c.h.b16 %v610
  %v752 = vunpack.c.l.b16 %v611
  %v753 = vunpack.c.h.b16 %v611
  %v754 = vunpack.c.l.b16 %v612
  %v755 = vunpack.c.h.b16 %v612
  %v756 = vunpack.c.l.b16 %v613
  %v757 = vunpack.c.h.b16 %v613
  %v758 = vunpack.c.l.b16 %v614
  %v759 = vunpack.c.h.b16 %v614
  %v760 = vunpack.c.l.b16 %v615
  %v761 = vunpack.c.h.b16 %v615
  %v762 = vunpack.c.l.b16 %v616
  %v763 = vunpack.c.h.b16 %v616
  %v764 = vunpack.c.l.b16 %v617
  %v765 = vunpack.c.h.b16 %v617
  %v766 = vunpack.c.l.b16 %v618
  %v767 = vunpack.c.h.b16 %v618
  %v768 = vunpack.c.l.b16 %v619
  %v769 = vunpack.c.h.b16 %v619
  %v770 = vunpack.c.l.b16 %v620
  %v771 = vunpack.c.h.b16 %v620
  %v772 = vunpack.c.l.b16 %v621
  %v773 = vunpack.c.h.b16 %v621
  %v774 = vunpack.c.l.b16 %v622
  %v775 = vunpack.c.h.b16 %v622
  %v776 = vunpack.c.l.b16 %v623
  %v777 = vunpack.c.h.b16 %v623
  %v778 = vunpack.c.l.b16 %v624
  %v779 = vunpack.c.h.b16 %v624
  %v780 = vunpack.c.l.b16 %v625
  %v781 = vunpack.c.h.b16 %v625
  %v782 = vpack.c.b16 %v688, %v686
  %v783 = vpack.c.b16 %v689, %v687
  %v784 = vpack.c.b16 %v692, %v690
  %v785 = vpack.c.b16 %v693, %v691
  %v786 = vpack.c.b16 %v696, %v694
  %v787 = vpack.c.b16 %v697, %v695
  %v788 = vpack.c.b16 %v700, %v698
  %v789 = vpack.c.b16 %v701, %v699
  %v790 = vpack.c.b16 %v704, %v702
  %v791 = vpack.c.b16 %v705, %v703
  %v792 = vpack.c.b16 %v708, %v706
  %v793 = vpack.c.b16 %v709, %v707
  %v794 = vpack.c.b16 %v712, %v710
  %v795 = vpack.c.b16 %v713, %v711
  %v796 = vpack.c.b16 %v716, %v714
  %v797 = vpack.c.b16 %v717, %v715
  %v798 = vpack.c.b16 %v720, %v718
  %v799 = vpack.c.b16 %v721, %v719
  %v800 = vpack.c.b16 %v724, %v722
  %v801 = vpack.c.b16 %v725, %v723
  %v802 = vpack.c.b16 %v728, %v726
  %v803 = vpack.c.b16 %v729, %v727
  %v804 = vpack.c.b16 %v732, %v730
  %v805 = vpack.c.b16 %v733, %v731
  %v806 = vpack.c.b16 %v736, %v734
  %v807 = vpack.c.b16 %v737, %v735
  %v808 = vpack.c.b16 %v740, %v738
  %v809 = vpack.c.b16 %v741, %v739
  %v810 = vpack.c.b16 %v744, %v742
  %v811 = vpack.c.b16 %v745, %v743
  %v812 = vpack.c.b16 %v748, %v746
  %v813 = vpack.c.b16 %v749, %v747
  %v814 = vpack.c.b16 %v752, %v750
  %v815 = vpack.c.b16 %v753, %v751
  %v816 = vpack.c.b16 %v756, %v754
  %v817 = vpack.c.b16 %v757, %v755
  %v818 = vpack.c.b16 %v760, %v758
  %v819 = vpack.c.b16 %v761, %v759
  %v820 = vpack.c.b16 %v764, %v762
  %v821 = vpack.c.b16 %v765, %v763
  %v822 = vpack.c.b16 %v768, %v766
  %v823 = vpack.c.b16 %v769, %v767
  %v824 = vpack.c.b16 %v772, %v770
  %v825 = vpack.c.b16 %v773, %v771
  %v826 = vpack.c.b16 %v776, %v774
  %v827 = vpack.c.b16 %v777, %v775
  %v828 = vpack.c.b16 %v780, %v778
  %v829 = vpack.c.b16 %v781, %v779
  %878 = vmatprep.subr.bf16.mxu0 %v783
  %879 = vmatpush1.bf16.msra.mxu0 %v782
  %880 = vmatprep.subr.bf16.mxu0 %v785
  %881 = vmatpush1.bf16.msra.mxu0 %v784
  %882 = vmatprep.subr.bf16.mxu0 %v787
  %883 = vmatpush1.bf16.msra.mxu0 %v786
  %884 = vmatprep.subr.bf16.mxu0 %v789
  %885 = vmatpush1.bf16.msra.mxu0 %v788
  %886 = vmatprep.subr.bf16.mxu0 %v791
  %887 = vmatpush1.bf16.msra.mxu0 %v790
  %888 = vmatprep.subr.bf16.mxu0 %v793
  %889 = vmatpush1.bf16.msra.mxu0 %v792
  %890 = vmatprep.subr.bf16.mxu0 %v795
  %891 = vmatpush1.bf16.msra.mxu0 %v794
  %892 = vmatprep.subr.bf16.mxu0 %v797
  %893 = vmatpush1.bf16.msra.mxu0 %v796
  %894 = vmatprep.subr.bf16.mxu0 %v799
  %895 = vmatpush1.bf16.msra.mxu0 %v798
  %896 = vmatprep.subr.bf16.mxu0 %v801
  %897 = vmatpush1.bf16.msra.mxu0 %v800
  %898 = vmatprep.subr.bf16.mxu0 %v803
  %899 = vmatpush1.bf16.msra.mxu0 %v802
  %900 = vmatprep.subr.bf16.mxu0 %v805
  %901 = vmatpush1.bf16.msra.mxu0 %v804
  %902 = vmatprep.subr.bf16.mxu0 %v807
  %903 = vmatpush1.bf16.msra.mxu0 %v806
  %904 = vmatprep.subr.bf16.mxu0 %v809
  %905 = vmatpush1.bf16.msra.mxu0 %v808
  %906 = vmatprep.subr.bf16.mxu0 %v811
  %907 = vmatpush1.bf16.msra.mxu0 %v810
  %908 = vmatprep.subr.bf16.mxu0 %v813
  %909 = vmatpush1.bf16.msra.mxu0 %v812
  %910 = vmatprep.mubr.bf16.mxu0 %v570
  %911 = vmatmul.mubr.bf16.gmra.mrb[0].mxu0 %v569
  %v912 = vpop.f32.mrb[0].mxu0
  %v913 = vadd.f32 %v631, %v912
  %v914 = vpop.f32.mrb[0].mxu0
  %v915 = vadd.f32 %v635, %v914
  %v916 = vpop.f32.mrb[0].mxu0
  %v917 = vadd.f32 %v631, %v916
  %v918 = vpop.f32.mrb[0].mxu0
  %v919 = vadd.f32 %v635, %v918
  %920 = vmatprep.mubr.bf16.mxu0 %v572
  %921 = vmatmul.mubr.bf16.gmra.mrb[0].mxu0 %v571
  %v922 = vpop.f32.mrb[0].mxu0
  %v923 = vadd.f32 %v631, %v922
  %v924 = vpop.f32.mrb[0].mxu0
  %v925 = vadd.f32 %v635, %v924
  %v926 = vpop.f32.mrb[0].mxu0
  %v927 = vadd.f32 %v631, %v926
  %v928 = vpop.f32.mrb[0].mxu0
  %v929 = vadd.f32 %v635, %v928
  %930 = vmatprep.mubr.bf16.mxu0 %v574
  %931 = vmatmul.mubr.bf16.gmra.mrb[0].mxu0 %v573
  %v932 = vpop.f32.mrb[0].mxu0
  %v933 = vadd.f32 %v631, %v932
  %v934 = vpop.f32.mrb[0].mxu0
  %v935 = vadd.f32 %v635, %v934
  %v936 = vpop.f32.mrb[0].mxu0
  %v937 = vadd.f32 %v631, %v936
  %v938 = vpop.f32.mrb[0].mxu0
  %v939 = vadd.f32 %v635, %v938
  %940 = vmatprep.mubr.bf16.mxu0 %v576
  %941 = vmatmul.mubr.bf16.gmra.mrb[0].mxu0 %v575
  %v942 = vpop.f32.mrb[0].mxu0
  %v943 = vadd.f32 %v631, %v942
  %v944 = vpop.f32.mrb[0].mxu0
  %v945 = vadd.f32 %v635, %v944
  %v946 = vpop.f32.mrb[0].mxu0
  %v947 = vadd.f32 %v631, %v946
  %v948 = vpop.f32.mrb[0].mxu0
  %v949 = vadd.f32 %v635, %v948
  %950 = vdwg.mxu0
  %951 = vmatprep.subr.bf16.mxu0 %v815
  %952 = vmatpush1.bf16.msra.mxu0 %v814
  %953 = vmatprep.subr.bf16.mxu0 %v817
  %954 = vmatpush1.bf16.msra.mxu0 %v816
  %955 = vmatprep.subr.bf16.mxu0 %v819
  %956 = vmatpush1.bf16.msra.mxu0 %v818
  %957 = vmatprep.subr.bf16.mxu0 %v821
  %958 = vmatpush1.bf16.msra.mxu0 %v820
  %959 = vmatprep.subr.bf16.mxu0 %v823
  %960 = vmatpush1.bf16.msra.mxu0 %v822
  %961 = vmatprep.subr.bf16.mxu0 %v825
  %962 = vmatpush1.bf16.msra.mxu0 %v824
  %963 = vmatprep.subr.bf16.mxu0 %v827
  %964 = vmatpush1.bf16.msra.mxu0 %v826
  %965 = vmatprep.subr.bf16.mxu0 %v829
  %966 = vmatpush1.bf16.msra.mxu0 %v828
  %967 = vmatprep.subr.bf16.mxu0 0
  %968 = vmatpush1.bf16.msra.mxu0 0
  %969 = vmatprep.subr.bf16.mxu0 0
  %970 = vmatpush1.bf16.msra.mxu0 0
  %971 = vmatprep.subr.bf16.mxu0 0
  %972 = vmatpush1.bf16.msra.mxu0 0
  %973 = vmatprep.subr.bf16.mxu0 0
  %974 = vmatpush1.bf16.msra.mxu0 0
  %975 = vmatprep.subr.bf16.mxu0 0
  %976 = vmatpush1.bf16.msra.mxu0 0
  %977 = vmatprep.subr.bf16.mxu0 0
  %978 = vmatpush1.bf16.msra.mxu0 0
  %979 = vmatprep.subr.bf16.mxu0 0
  %980 = vmatpush1.bf16.msra.mxu0 0
  %981 = vmatprep.subr.bf16.mxu0 0
  %982 = vmatpush1.bf16.msra.mxu0 0
  %983 = vmatprep.mubr.bf16.mxu0 0
  %984 = vmatmul.mubr.bf16.gmra.mrb[0].mxu0 %v571
  %v985 = vpop.f32.mrb[0].mxu0
  %v986 = vadd.f32 %v913, %v985
  %v987 = vpop.f32.mrb[0].mxu0
  %v988 = vadd.f32 %v915, %v987
  %v989 = vpop.f32.mrb[0].mxu0
  %v990 = vadd.f32 %v917, %v989
  %v991 = vpop.f32.mrb[0].mxu0
  %v992 = vadd.f32 %v919, %v991
  %993 = vmatprep.mubr.bf16.mxu0 0
  %994 = vmatmul.mubr.bf16.gmra.mrb[0].mxu0 %v573
  %v995 = vpop.f32.mrb[0].mxu0
  %v996 = vadd.f32 %v923, %v995
  %v997 = vpop.f32.mrb[0].mxu0
  %v998 = vadd.f32 %v925, %v997
  %v999 = vpop.f32.mrb[0].mxu0
  %v1000 = vadd.f32 %v927, %v999
  %v1001 = vpop.f32.mrb[0].mxu0
  %v1002 = vadd.f32 %v929, %v1001
  %1003 = vmatprep.mubr.bf16.mxu0 0
  %1004 = vmatmul.mubr.bf16.gmra.mrb[0].mxu0 %v575
  %v1005 = vpop.f32.mrb[0].mxu0
  %v1006 = vadd.f32 %v933, %v1005
  %v1007 = vpop.f32.mrb[0].mxu0
  %v1008 = vadd.f32 %v935, %v1007
  %v1009 = vpop.f32.mrb[0].mxu0
  %v1010 = vadd.f32 %v937, %v1009
  %v1011 = vpop.f32.mrb[0].mxu0
  %v1012 = vadd.f32 %v939, %v1011
  %1013 = vmatprep.mubr.bf16.mxu0 0
  %1014 = vmatmul.mubr.bf16.gmra.mrb[0].mxu0 %v577
  %v1015 = vpop.f32.mrb[0].mxu0
  %v1016 = vadd.f32 %v943, %v1015
  %v1017 = vpop.f32.mrb[0].mxu0
  %v1018 = vadd.f32 %v945, %v1017
  %v1019 = vpop.f32.mrb[0].mxu0
  %v1020 = vadd.f32 %v947, %v1019
  %v1021 = vpop.f32.mrb[0].mxu0
  %v1022 = vadd.f32 %v949, %v1021
  %1023 = vdwg.mxu0
  %v1024 = vmax.f32 %v986, 0.0
  %v1025 = vmax.f32 %v988, 0.0
  %v1026 = vmax.f32 %v990, 0.0
  %v1027 = vmax.f32 %v992, 0.0
  %v1028 = vmax.f32 %v996, 0.0
  %v1029 = vmax.f32 %v998, 0.0
  %v1030 = vmax.f32 %v1000, 0.0
  %v1031 = vmax.f32 %v1002, 0.0
  %v1032 = vmax.f32 %v1006, 0.0
  %v1033 = vmax.f32 %v1008, 0.0
  %v1034 = vmax.f32 %v1010, 0.0
  %v1035 = vmax.f32 %v1012, 0.0
  %v1036 = vmax.f32 %v1016, 0.0
  %v1037 = vmax.f32 %v1018, 0.0
  %v1038 = vmax.f32 %v1020, 0.0
  %v1039 = vmax.f32 %v1022, 0.0
  %v1040 = vld [vmem:[%s11] sm:$0x3]
  %v1042 = vlaneseq
  %v1043 = vshrl.u32 %v1042, 7
  %v1044 = vsub.s32 0, %v1043
  %v1045 = vrot.slane %v1040, %v1044
  %v1046 = vlaneseq
  %v1047 = vshrl.u32 %v1046, 7
  %v1048 = vsub.s32 1, %v1047
  %v1049 = vrot.slane %v1040, %v1048
  %v1052 = vmul.f32 %v1024, %v1045
  %v1053 = vmul.f32 %v1025, %v1049
  %v1054 = vmul.f32 %v1026, %v1045
  %v1055 = vmul.f32 %v1027, %v1049
  %v1056 = vmul.f32 %v1028, %v1045
  %v1057 = vmul.f32 %v1029, %v1049
  %v1058 = vmul.f32 %v1030, %v1045
  %v1059 = vmul.f32 %v1031, %v1049
  %v1060 = vmul.f32 %v1032, %v1045
  %v1061 = vmul.f32 %v1033, %v1049
  %v1062 = vmul.f32 %v1034, %v1045
  %v1063 = vmul.f32 %v1035, %v1049
  %v1064 = vmul.f32 %v1036, %v1045
  %v1065 = vmul.f32 %v1037, %v1049
  %v1066 = vmul.f32 %v1038, %v1045
  %v1067 = vmul.f32 %v1039, %v1049
  %v1068 = vld [vmem:[%s12] sm:$0x3]
  %v1070 = vlaneseq
  %v1071 = vshrl.u32 %v1070, 7
  %v1072 = vsub.s32 0, %v1071
  %v1073 = vrot.slane %v1068, %v1072
  %v1074 = vlaneseq
  %v1075 = vshrl.u32 %v1074, 7
  %v1076 = vsub.s32 1, %v1075
  %v1077 = vrot.slane %v1068, %v1076
  %v1080 = vadd.f32 %v1052, %v1073
  %v1081 = vadd.f32 %v1053, %v1077
  %v1082 = vadd.f32 %v1054, %v1073
  %v1083 = vadd.f32 %v1055, %v1077
  %v1084 = vadd.f32 %v1056, %v1073
  %v1085 = vadd.f32 %v1057, %v1077
  %v1086 = vadd.f32 %v1058, %v1073
  %v1087 = vadd.f32 %v1059, %v1077
  %v1088 = vadd.f32 %v1060, %v1073
  %v1089 = vadd.f32 %v1061, %v1077
  %v1090 = vadd.f32 %v1062, %v1073
  %v1091 = vadd.f32 %v1063, %v1077
  %v1092 = vadd.f32 %v1064, %v1073
  %v1093 = vadd.f32 %v1065, %v1077
  %v1094 = vadd.f32 %v1066, %v1073
  %v1095 = vadd.f32 %v1067, %v1077
  %v1096 = vpack.c.bf16 %v1082, %v1080
  %v1097 = vpack.c.bf16 %v1083, %v1081
  %v1098 = vpack.c.bf16 %v1086, %v1084
  %v1099 = vpack.c.bf16 %v1087, %v1085
  %v1100 = vpack.c.bf16 %v1090, %v1088
  %v1101 = vpack.c.bf16 %v1091, %v1089
  %v1102 = vpack.c.bf16 %v1094, %v1092
  %v1103 = vpack.c.bf16 %v1095, %v1093
  %v1104 = vld [vmem:[%s13] sm:$0xff]
  %v1105 = vld [vmem:[%s13 + $0x8] sm:$0xff]
  %v1106 = vld [vmem:[%s13 + $0x10] sm:$0xff]
  %v1107 = vld [vmem:[%s13 + $0x18] sm:$0xff]
  %v1108 = vld [vmem:[%s13 + $0x20] sm:$0xff]
  %v1109 = vld [vmem:[%s13 + $0x28] sm:$0xff]
  %v1110 = vld [vmem:[%s13 + $0x30] sm:$0xff]
  %v1111 = vld [vmem:[%s13 + $0x38] sm:$0xff]
  %v1112 = vld [vmem:[%s13 + $0x40] sm:$0xff]
  %v1113 = vld [vmem:[%s13 + $0x48] sm:$0xff]
  %v1114 = vld [vmem:[%s13 + $0x50] sm:$0xff]
  %v1115 = vld [vmem:[%s13 + $0x58] sm:$0xff]
  %v1116 = vld [vmem:[%s13 + $0x60] sm:$0xff]
  %v1117 = vld [vmem:[%s13 + $0x68] sm:$0xff]
  %v1118 = vld [vmem:[%s13 + $0x70] sm:$0xff]
  %v1119 = vld [vmem:[%s13 + $0x78] sm:$0xff]
  %v1120 = vld [vmem:[%s13 + $0x80] sm:$0xff]
  %v1121 = vld [vmem:[%s13 + $0x88] sm:$0xff]
  %v1122 = vld [vmem:[%s13 + $0x90] sm:$0xff]
  %v1123 = vld [vmem:[%s13 + $0x98] sm:$0xff]
  %v1124 = vld [vmem:[%s13 + $0xa0] sm:$0xff]
  %v1125 = vld [vmem:[%s13 + $0xa8] sm:$0xff]
  %v1126 = vld [vmem:[%s13 + $0xb0] sm:$0xff]
  %v1127 = vld [vmem:[%s13 + $0xb8] sm:$0xff]
  %v1128 = vld [vmem:[%s13 + $0xc0] sm:$0xff]
  %v1129 = vld [vmem:[%s13 + $0xc8] sm:$0xff]
  %v1130 = vld [vmem:[%s13 + $0xd0] sm:$0xff]
  %v1131 = vld [vmem:[%s13 + $0xd8] sm:$0xff]
  %v1132 = vld [vmem:[%s13 + $0xe0] sm:$0xff]
  %v1133 = vld [vmem:[%s13 + $0xe8] sm:$0xff]
  %v1134 = vld [vmem:[%s13 + $0xf0] sm:$0xff]
  %v1135 = vld [vmem:[%s13 + $0xf8] sm:$0xff]
  %v1136 = vld [vmem:[%s13 + $0x100] sm:$0xff]
  %v1137 = vld [vmem:[%s13 + $0x108] sm:$0xff]
  %v1138 = vld [vmem:[%s13 + $0x110] sm:$0xff]
  %v1139 = vld [vmem:[%s13 + $0x118] sm:$0xff]
  %v1140 = vld [vmem:[%s13 + $0x120] sm:$0xff]
  %v1141 = vld [vmem:[%s13 + $0x128] sm:$0xff]
  %v1142 = vld [vmem:[%s13 + $0x130] sm:$0xff]
  %v1143 = vld [vmem:[%s13 + $0x138] sm:$0xff]
  %v1144 = vld [vmem:[%s13 + $0x140] sm:$0xff]
  %v1145 = vld [vmem:[%s13 + $0x148] sm:$0xff]
  %v1146 = vld [vmem:[%s13 + $0x150] sm:$0xff]
  %v1147 = vld [vmem:[%s13 + $0x158] sm:$0xff]
  %v1148 = vld [vmem:[%s13 + $0x160] sm:$0xff]
  %v1149 = vld [vmem:[%s13 + $0x168] sm:$0xff]
  %v1150 = vld [vmem:[%s13 + $0x170] sm:$0xff]
  %v1151 = vld [vmem:[%s13 + $0x178] sm:$0xff]
  %v1152 = vld [vmem:[%s13 + $0x180] sm:$0xff]
  %v1153 = vld [vmem:[%s13 + $0x188] sm:$0xff]
  %v1154 = vld [vmem:[%s13 + $0x190] sm:$0xff]
  %v1155 = vld [vmem:[%s13 + $0x198] sm:$0xff]
  %v1156 = vld [vmem:[%s13 + $0x1a0] sm:$0xff]
  %v1157 = vld [vmem:[%s13 + $0x1a8] sm:$0xff]
  %v1158 = vld [vmem:[%s13 + $0x1b0] sm:$0xff]
  %v1159 = vld [vmem:[%s13 + $0x1b8] sm:$0xff]
  %v1160 = vld [vmem:[%s13 + $0x1c0] sm:$0xff]
  %v1161 = vld [vmem:[%s13 + $0x1c8] sm:$0xff]
  %v1162 = vld [vmem:[%s13 + $0x1d0] sm:$0xff]
  %v1163 = vld [vmem:[%s13 + $0x1d8] sm:$0xff]
  %v1164 = vld [vmem:[%s13 + $0x1e0] sm:$0xff]
  %v1165 = vld [vmem:[%s13 + $0x1e8] sm:$0xff]
  %v1166 = vld [vmem:[%s13 + $0x1f0] sm:$0xff]
  %v1167 = vld [vmem:[%s13 + $0x1f8] sm:$0xff]
  %v1168 = vld [vmem:[%s13 + $0x200] sm:$0xff]
  %v1169 = vld [vmem:[%s13 + $0x208] sm:$0xff]
  %v1170 = vld [vmem:[%s13 + $0x210] sm:$0xff]
  %v1171 = vld [vmem:[%s13 + $0x218] sm:$0xff]
  %v1172 = vld [vmem:[%s13 + $0x220] sm:$0xff]
  %v1173 = vld [vmem:[%s13 + $0x228] sm:$0xff]
  %v1174 = vld [vmem:[%s13 + $0x230] sm:$0xff]
  %v1175 = vld [vmem:[%s13 + $0x238] sm:$0xff]
  %v1176 = vld [vmem:[%s13 + $0x240] sm:$0xff]
  %v1177 = vld [vmem:[%s13 + $0x248] sm:$0xff]
  %v1178 = vld [vmem:[%s13 + $0x250] sm:$0xff]
  %v1179 = vld [vmem:[%s13 + $0x258] sm:$0xff]
  %v1180 = vld [vmem:[%s13 + $0x260] sm:$0xff]
  %v1181 = vld [vmem:[%s13 + $0x268] sm:$0xff]
  %v1182 = vld [vmem:[%s13 + $0x270] sm:$0xff]
  %v1183 = vld [vmem:[%s13 + $0x278] sm:$0xff]
  %v1184 = vld [vmem:[%s13 + $0x280] sm:$0xff]
  %v1185 = vld [vmem:[%s13 + $0x288] sm:$0xff]
  %v1186 = vld [vmem:[%s13 + $0x290] sm:$0xff]
  %v1187 = vld [vmem:[%s13 + $0x298] sm:$0xff]
  %v1188 = vld [vmem:[%s13 + $0x2a0] sm:$0xff]
  %v1189 = vld [vmem:[%s13 + $0x2a8] sm:$0xff]
  %v1190 = vld [vmem:[%s13 + $0x2b0] sm:$0xff]
  %v1191 = vld [vmem:[%s13 + $0x2b8] sm:$0xff]
  %v1192 = vld [vmem:[%s13 + $0x2c0] sm:$0xff]
  %v1193 = vld [vmem:[%s13 + $0x2c8] sm:$0xff]
  %v1194 = vld [vmem:[%s13 + $0x2d0] sm:$0xff]
  %v1195 = vld [vmem:[%s13 + $0x2d8] sm:$0xff]
  %v1196 = vld [vmem:[%s13 + $0x2e0] sm:$0xff]
  %v1197 = vld [vmem:[%s13 + $0x2e8] sm:$0xff]
  %v1198 = vld [vmem:[%s13 + $0x2f0] sm:$0xff]
  %v1199 = vld [vmem:[%s13 + $0x2f8] sm:$0xff]
  %v1200 = vld [vmem:[%s13 + $0x300] sm:$0xff]
  %v1201 = vld [vmem:[%s13 + $0x308] sm:$0xff]
  %v1202 = vld [vmem:[%s13 + $0x310] sm:$0xff]
  %v1203 = vld [vmem:[%s13 + $0x318] sm:$0xff]
  %v1204 = vld [vmem:[%s13 + $0x320] sm:$0xff]
  %v1205 = vld [vmem:[%s13 + $0x328] sm:$0xff]
  %v1206 = vld [vmem:[%s13 + $0x330] sm:$0xff]
  %v1207 = vld [vmem:[%s13 + $0x338] sm:$0xff]
  %v1208 = vld [vmem:[%s13 + $0x340] sm:$0xff]
  %v1209 = vld [vmem:[%s13 + $0x348] sm:$0xff]
  %v1210 = vld [vmem:[%s13 + $0x350] sm:$0xff]
  %v1211 = vld [vmem:[%s13 + $0x358] sm:$0xff]
  %v1212 = vld [vmem:[%s13 + $0x360] sm:$0xff]
  %v1213 = vld [vmem:[%s13 + $0x368] sm:$0xff]
  %v1214 = vld [vmem:[%s13 + $0x370] sm:$0xff]
  %v1215 = vld [vmem:[%s13 + $0x378] sm:$0xff]
  %v1216 = vld [vmem:[%s13 + $0x380] sm:$0xff]
  %v1217 = vld [vmem:[%s13 + $0x388] sm:$0xff]
  %v1218 = vld [vmem:[%s13 + $0x390] sm:$0xff]
  %v1219 = vld [vmem:[%s13 + $0x398] sm:$0xff]
  %v1220 = vld [vmem:[%s13 + $0x3a0] sm:$0xff]
  %v1221 = vld [vmem:[%s13 + $0x3a8] sm:$0xff]
  %v1222 = vld [vmem:[%s13 + $0x3b0] sm:$0xff]
  %v1223 = vld [vmem:[%s13 + $0x3b8] sm:$0xff]
  %v1224 = vld [vmem:[%s13 + $0x3c0] sm:$0xff]
  %v1225 = vld [vmem:[%s13 + $0x3c8] sm:$0xff]
  %v1226 = vld [vmem:[%s13 + $0x3d0] sm:$0xff]
  %v1227 = vld [vmem:[%s13 + $0x3d8] sm:$0xff]
  %v1228 = vld [vmem:[%s13 + $0x3e0] sm:$0xff]
  %v1229 = vld [vmem:[%s13 + $0x3e8] sm:$0xff]
  %v1230 = vld [vmem:[%s13 + $0x3f0] sm:$0xff]
  %v1231 = vld [vmem:[%s13 + $0x3f8] sm:$0xff]
  %v1232 = vld [vmem:[%s14] sm:$0xff]
  %v1234 = vlaneseq
  %v1235 = vshrl.u32 %v1234, 7
  %v1236 = vsub.s32 0, %v1235
  %v1237 = vrot.slane %v1232, %v1236
  %v1238 = vlaneseq
  %v1239 = vshrl.u32 %v1238, 7
  %v1240 = vsub.s32 1, %v1239
  %v1241 = vrot.slane %v1232, %v1240
  %v1242 = vlaneseq
  %v1243 = vshrl.u32 %v1242, 7
  %v1244 = vsub.s32 2, %v1243
  %v1245 = vrot.slane %v1232, %v1244
  %v1246 = vlaneseq
  %v1247 = vshrl.u32 %v1246, 7
  %v1248 = vsub.s32 3, %v1247
  %v1249 = vrot.slane %v1232, %v1248
  %v1250 = vlaneseq
  %v1251 = vshrl.u32 %v1250, 7
  %v1252 = vsub.s32 4, %v1251
  %v1253 = vrot.slane %v1232, %v1252
  %v1254 = vlaneseq
  %v1255 = vshrl.u32 %v1254, 7
  %v1256 = vsub.s32 5, %v1255
  %v1257 = vrot.slane %v1232, %v1256
  %v1258 = vlaneseq
  %v1259 = vshrl.u32 %v1258, 7
  %v1260 = vsub.s32 6, %v1259
  %v1261 = vrot.slane %v1232, %v1260
  %v1262 = vlaneseq
  %v1263 = vshrl.u32 %v1262, 7
  %v1264 = vsub.s32 7, %v1263
  %v1265 = vrot.slane %v1232, %v1264
  %v1402 = vunpack.c.l.b16 %v1104
  %v1403 = vunpack.c.h.b16 %v1104
  %v1404 = vunpack.c.l.b16 %v1105
  %v1405 = vunpack.c.h.b16 %v1105
  %v1406 = vunpack.c.l.b16 %v1106
  %v1407 = vunpack.c.h.b16 %v1106
  %v1408 = vunpack.c.l.b16 %v1107
  %v1409 = vunpack.c.h.b16 %v1107
  %v1410 = vunpack.c.l.b16 %v1108
  %v1411 = vunpack.c.h.b16 %v1108
  %v1412 = vunpack.c.l.b16 %v1109
  %v1413 = vunpack.c.h.b16 %v1109
  %v1414 = vunpack.c.l.b16 %v1110
  %v1415 = vunpack.c.h.b16 %v1110
  %v1416 = vunpack.c.l.b16 %v1111
  %v1417 = vunpack.c.h.b16 %v1111
  %v1418 = vunpack.c.l.b16 %v1112
  %v1419 = vunpack.c.h.b16 %v1112
  %v1420 = vunpack.c.l.b16 %v1113
  %v1421 = vunpack.c.h.b16 %v1113
  %v1422 = vunpack.c.l.b16 %v1114
  %v1423 = vunpack.c.h.b16 %v1114
  %v1424 = vunpack.c.l.b16 %v1115
  %v1425 = vunpack.c.h.b16 %v1115
  %v1426 = vunpack.c.l.b16 %v1116
  %v1427 = vunpack.c.h.b16 %v1116
  %v1428 = vunpack.c.l.b16 %v1117
  %v1429 = vunpack.c.h.b16 %v1117
  %v1430 = vunpack.c.l.b16 %v1118
  %v1431 = vunpack.c.h.b16 %v1118
  %v1432 = vunpack.c.l.b16 %v1119
  %v1433 = vunpack.c.h.b16 %v1119
  %v1434 = vunpack.c.l.b16 %v1120
  %v1435 = vunpack.c.h.b16 %v1120
  %v1436 = vunpack.c.l.b16 %v1121
  %v1437 = vunpack.c.h.b16 %v1121
  %v1438 = vunpack.c.l.b16 %v1122
  %v1439 = vunpack.c.h.b16 %v1122
  %v1440 = vunpack.c.l.b16 %v1123
  %v1441 = vunpack.c.h.b16 %v1123
  %v1442 = vunpack.c.l.b16 %v1124
  %v1443 = vunpack.c.h.b16 %v1124
  %v1444 = vunpack.c.l.b16 %v1125
  %v1445 = vunpack.c.h.b16 %v1125
  %v1446 = vunpack.c.l.b16 %v1126
  %v1447 = vunpack.c.h.b16 %v1126
  %v1448 = vunpack.c.l.b16 %v1127
  %v1449 = vunpack.c.h.b16 %v1127
  %v1450 = vunpack.c.l.b16 %v1128
  %v1451 = vunpack.c.h.b16 %v1128
  %v1452 = vunpack.c.l.b16 %v1129
  %v1453 = vunpack.c.h.b16 %v1129
  %v1454 = vunpack.c.l.b16 %v1130
  %v1455 = vunpack.c.h.b16 %v1130
  %v1456 = vunpack.c.l.b16 %v1131
  %v1457 = vunpack.c.h.b16 %v1131
  %v1458 = vunpack.c.l.b16 %v1132
  %v1459 = vunpack.c.h.b16 %v1132
  %v1460 = vunpack.c.l.b16 %v1133
  %v1461 = vunpack.c.h.b16 %v1133
  %v1462 = vunpack.c.l.b16 %v1134
  %v1463 = vunpack.c.h.b16 %v1134
  %v1464 = vunpack.c.l.b16 %v1135
  %v1465 = vunpack.c.h.b16 %v1135
  %v1466 = vunpack.c.l.b16 %v1136
  %v1467 = vunpack.c.h.b16 %v1136
  %v1468 = vunpack.c.l.b16 %v1137
  %v1469 = vunpack.c.h.b16 %v1137
  %v1470 = vunpack.c.l.b16 %v1138
  %v1471 = vunpack.c.h.b16 %v1138
  %v1472 = vunpack.c.l.b16 %v1139
  %v1473 = vunpack.c.h.b16 %v1139
  %v1474 = vunpack.c.l.b16 %v1140
  %v1475 = vunpack.c.h.b16 %v1140
  %v1476 = vunpack.c.l.b16 %v1141
  %v1477 = vunpack.c.h.b16 %v1141
  %v1478 = vunpack.c.l.b16 %v1142
  %v1479 = vunpack.c.h.b16 %v1142
  %v1480 = vunpack.c.l.b16 %v1143
  %v1481 = vunpack.c.h.b16 %v1143
  %v1482 = vunpack.c.l.b16 %v1144
  %v1483 = vunpack.c.h.b16 %v1144
  %v1484 = vunpack.c.l.b16 %v1145
  %v1485 = vunpack.c.h.b16 %v1145
  %v1486 = vunpack.c.l.b16 %v1146
  %v1487 = vunpack.c.h.b16 %v1146
  %v1488 = vunpack.c.l.b16 %v1147
  %v1489 = vunpack.c.h.b16 %v1147
  %v1490 = vunpack.c.l.b16 %v1148
  %v1491 = vunpack.c.h.b16 %v1148
  %v1492 = vunpack.c.l.b16 %v1149
  %v1493 = vunpack.c.h.b16 %v1149
  %v1494 = vunpack.c.l.b16 %v1150
  %v1495 = vunpack.c.h.b16 %v1150
  %v1496 = vunpack.c.l.b16 %v1151
  %v1497 = vunpack.c.h.b16 %v1151
  %v1498 = vunpack.c.l.b16 %v1152
  %v1499 = vunpack.c.h.b16 %v1152
  %v1500 = vunpack.c.l.b16 %v1153
  %v1501 = vunpack.c.h.b16 %v1153
  %v1502 = vunpack.c.l.b16 %v1154
  %v1503 = vunpack.c.h.b16 %v1154
  %v1504 = vunpack.c.l.b16 %v1155
  %v1505 = vunpack.c.h.b16 %v1155
  %v1506 = vunpack.c.l.b16 %v1156
  %v1507 = vunpack.c.h.b16 %v1156
  %v1508 = vunpack.c.l.b16 %v1157
  %v1509 = vunpack.c.h.b16 %v1157
  %v1510 = vunpack.c.l.b16 %v1158
  %v1511 = vunpack.c.h.b16 %v1158
  %v1512 = vunpack.c.l.b16 %v1159
  %v1513 = vunpack.c.h.b16 %v1159
  %v1514 = vunpack.c.l.b16 %v1160
  %v1515 = vunpack.c.h.b16 %v1160
  %v1516 = vunpack.c.l.b16 %v1161
  %v1517 = vunpack.c.h.b16 %v1161
  %v1518 = vunpack.c.l.b16 %v1162
  %v1519 = vunpack.c.h.b16 %v1162
  %v1520 = vunpack.c.l.b16 %v1163
  %v1521 = vunpack.c.h.b16 %v1163
  %v1522 = vunpack.c.l.b16 %v1164
  %v1523 = vunpack.c.h.b16 %v1164
  %v1524 = vunpack.c.l.b16 %v1165
  %v1525 = vunpack.c.h.b16 %v1165
  %v1526 = vunpack.c.l.b16 %v1166
  %v1527 = vunpack.c.h.b16 %v1166
  %v1528 = vunpack.c.l.b16 %v1167
  %v1529 = vunpack.c.h.b16 %v1167
  %v1530 = vunpack.c.l.b16 %v1168
  %v1531 = vunpack.c.h.b16 %v1168
  %v1532 = vunpack.c.l.b16 %v1169
  %v1533 = vunpack.c.h.b16 %v1169
  %v1534 = vunpack.c.l.b16 %v1170
  %v1535 = vunpack.c.h.b16 %v1170
  %v1536 = vunpack.c.l.b16 %v1171
  %v1537 = vunpack.c.h.b16 %v1171
  %v1538 = vunpack.c.l.b16 %v1172
  %v1539 = vunpack.c.h.b16 %v1172
  %v1540 = vunpack.c.l.b16 %v1173
  %v1541 = vunpack.c.h.b16 %v1173
  %v1542 = vunpack.c.l.b16 %v1174
  %v1543 = vunpack.c.h.b16 %v1174
  %v1544 = vunpack.c.l.b16 %v1175
  %v1545 = vunpack.c.h.b16 %v1175
  %v1546 = vunpack.c.l.b16 %v1176
  %v1547 = vunpack.c.h.b16 %v1176
  %v1548 = vunpack.c.l.b16 %v1177
  %v1549 = vunpack.c.h.b16 %v1177
  %v1550 = vunpack.c.l.b16 %v1178
  %v1551 = vunpack.c.h.b16 %v1178
  %v1552 = vunpack.c.l.b16 %v1179
  %v1553 = vunpack.c.h.b16 %v1179
  %v1554 = vunpack.c.l.b16 %v1180
  %v1555 = vunpack.c.h.b16 %v1180
  %v1556 = vunpack.c.l.b16 %v1181
  %v1557 = vunpack.c.h.b16 %v1181
  %v1558 = vunpack.c.l.b16 %v1182
  %v1559 = vunpack.c.h.b16 %v1182
  %v1560 = vunpack.c.l.b16 %v1183
  %v1561 = vunpack.c.h.b16 %v1183
  %v1562 = vunpack.c.l.b16 %v1184
  %v1563 = vunpack.c.h.b16 %v1184
  %v1564 = vunpack.c.l.b16 %v1185
  %v1565 = vunpack.c.h.b16 %v1185
  %v1566 = vunpack.c.l.b16 %v1186
  %v1567 = vunpack.c.h.b16 %v1186
  %v1568 = vunpack.c.l.b16 %v1187
  %v1569 = vunpack.c.h.b16 %v1187
  %v1570 = vunpack.c.l.b16 %v1188
  %v1571 = vunpack.c.h.b16 %v1188
  %v1572 = vunpack.c.l.b16 %v1189
  %v1573 = vunpack.c.h.b16 %v1189
  %v1574 = vunpack.c.l.b16 %v1190
  %v1575 = vunpack.c.h.b16 %v1190
  %v1576 = vunpack.c.l.b16 %v1191
  %v1577 = vunpack.c.h.b16 %v1191
  %v1578 = vunpack.c.l.b16 %v1192
  %v1579 = vunpack.c.h.b16 %v1192
  %v1580 = vunpack.c.l.b16 %v1193
  %v1581 = vunpack.c.h.b16 %v1193
  %v1582 = vunpack.c.l.b16 %v1194
  %v1583 = vunpack.c.h.b16 %v1194
  %v1584 = vunpack.c.l.b16 %v1195
  %v1585 = vunpack.c.h.b16 %v1195
  %v1586 = vunpack.c.l.b16 %v1196
  %v1587 = vunpack.c.h.b16 %v1196
  %v1588 = vunpack.c.l.b16 %v1197
  %v1589 = vunpack.c.h.b16 %v1197
  %v1590 = vunpack.c.l.b16 %v1198
  %v1591 = vunpack.c.h.b16 %v1198
  %v1592 = vunpack.c.l.b16 %v1199
  %v1593 = vunpack.c.h.b16 %v1199
  %v1594 = vunpack.c.l.b16 %v1200
  %v1595 = vunpack.c.h.b16 %v1200
  %v1596 = vunpack.c.l.b16 %v1201
  %v1597 = vunpack.c.h.b16 %v1201
  %v1598 = vunpack.c.l.b16 %v1202
  %v1599 = vunpack.c.h.b16 %v1202
  %v1600 = vunpack.c.l.b16 %v1203
  %v1601 = vunpack.c.h.b16 %v1203
  %v1602 = vunpack.c.l.b16 %v1204
  %v1603 = vunpack.c.h.b16 %v1204
  %v1604 = vunpack.c.l.b16 %v1205
  %v1605 = vunpack.c.h.b16 %v1205
  %v1606 = vunpack.c.l.b16 %v1206
  %v1607 = vunpack.c.h.b16 %v1206
  %v1608 = vunpack.c.l.b16 %v1207
  %v1609 = vunpack.c.h.b16 %v1207
  %v1610 = vunpack.c.l.b16 %v1208
  %v1611 = vunpack.c.h.b16 %v1208
  %v1612 = vunpack.c.l.b16 %v1209
  %v1613 = vunpack.c.h.b16 %v1209
  %v1614 = vunpack.c.l.b16 %v1210
  %v1615 = vunpack.c.h.b16 %v1210
  %v1616 = vunpack.c.l.b16 %v1211
  %v1617 = vunpack.c.h.b16 %v1211
  %v1618 = vunpack.c.l.b16 %v1212
  %v1619 = vunpack.c.h.b16 %v1212
  %v1620 = vunpack.c.l.b16 %v1213
  %v1621 = vunpack.c.h.b16 %v1213
  %v1622 = vunpack.c.l.b16 %v1214
  %v1623 = vunpack.c.h.b16 %v1214
  %v1624 = vunpack.c.l.b16 %v1215
  %v1625 = vunpack.c.h.b16 %v1215
  %v1626 = vunpack.c.l.b16 %v1216
  %v1627 = vunpack.c.h.b16 %v1216
  %v1628 = vunpack.c.l.b16 %v1217
  %v1629 = vunpack.c.h.b16 %v1217
  %v1630 = vunpack.c.l.b16 %v1218
  %v1631 = vunpack.c.h.b16 %v1218
  %v1632 = vunpack.c.l.b16 %v1219
  %v1633 = vunpack.c.h.b16 %v1219
  %v1634 = vunpack.c.l.b16 %v1220
  %v1635 = vunpack.c.h.b16 %v1220
  %v1636 = vunpack.c.l.b16 %v1221
  %v1637 = vunpack.c.h.b16 %v1221
  %v1638 = vunpack.c.l.b16 %v1222
  %v1639 = vunpack.c.h.b16 %v1222
  %v1640 = vunpack.c.l.b16 %v1223
  %v1641 = vunpack.c.h.b16 %v1223
  %v1642 = vunpack.c.l.b16 %v1224
  %v1643 = vunpack.c.h.b16 %v1224
  %v1644 = vunpack.c.l.b16 %v1225
  %v1645 = vunpack.c.h.b16 %v1225
  %v1646 = vunpack.c.l.b16 %v1226
  %v1647 = vunpack.c.h.b16 %v1226
  %v1648 = vunpack.c.l.b16 %v1227
  %v1649 = vunpack.c.h.b16 %v1227
  %v1650 = vunpack.c.l.b16 %v1228
  %v1651 = vunpack.c.h.b16 %v1228
  %v1652 = vunpack.c.l.b16 %v1229
  %v1653 = vunpack.c.h.b16 %v1229
  %v1654 = vunpack.c.l.b16 %v1230
  %v1655 = vunpack.c.h.b16 %v1230
  %v1656 = vunpack.c.l.b16 %v1231
  %v1657 = vunpack.c.h.b16 %v1231
  %v1658 = vpack.c.b16 %v1410, %v1402
  %v1659 = vpack.c.b16 %v1411, %v1403
  %v1660 = vpack.c.b16 %v1412, %v1404
  %v1661 = vpack.c.b16 %v1413, %v1405
  %v1662 = vpack.c.b16 %v1414, %v1406
  %v1663 = vpack.c.b16 %v1415, %v1407
  %v1664 = vpack.c.b16 %v1416, %v1408
  %v1665 = vpack.c.b16 %v1417, %v1409
  %v1666 = vpack.c.b16 %v1426, %v1418
  %v1667 = vpack.c.b16 %v1427, %v1419
  %v1668 = vpack.c.b16 %v1428, %v1420
  %v1669 = vpack.c.b16 %v1429, %v1421
  %v1670 = vpack.c.b16 %v1430, %v1422
  %v1671 = vpack.c.b16 %v1431, %v1423
  %v1672 = vpack.c.b16 %v1432, %v1424
  %v1673 = vpack.c.b16 %v1433, %v1425
  %v1674 = vpack.c.b16 %v1442, %v1434
  %v1675 = vpack.c.b16 %v1443, %v1435
  %v1676 = vpack.c.b16 %v1444, %v1436
  %v1677 = vpack.c.b16 %v1445, %v1437
  %v1678 = vpack.c.b16 %v1446, %v1438
  %v1679 = vpack.c.b16 %v1447, %v1439
  %v1680 = vpack.c.b16 %v1448, %v1440
  %v1681 = vpack.c.b16 %v1449, %v1441
  %v1682 = vpack.c.b16 %v1458, %v1450
  %v1683 = vpack.c.b16 %v1459, %v1451
  %v1684 = vpack.c.b16 %v1460, %v1452
  %v1685 = vpack.c.b16 %v1461, %v1453
  %v1686 = vpack.c.b16 %v1462, %v1454
  %v1687 = vpack.c.b16 %v1463, %v1455
  %v1688 = vpack.c.b16 %v1464, %v1456
  %v1689 = vpack.c.b16 %v1465, %v1457
  %v1690 = vpack.c.b16 %v1474, %v1466
  %v1691 = vpack.c.b16 %v1475, %v1467
  %v1692 = vpack.c.b16 %v1476, %v1468
  %v1693 = vpack.c.b16 %v1477, %v1469
  %v1694 = vpack.c.b16 %v1478, %v1470
  %v1695 = vpack.c.b16 %v1479, %v1471
  %v1696 = vpack.c.b16 %v1480, %v1472
  %v1697 = vpack.c.b16 %v1481, %v1473
  %v1698 = vpack.c.b16 %v1490, %v1482
  %v1699 = vpack.c.b16 %v1491, %v1483
  %v1700 = vpack.c.b16 %v1492, %v1484
  %v1701 = vpack.c.b16 %v1493, %v1485
  %v1702 = vpack.c.b16 %v1494, %v1486
  %v1703 = vpack.c.b16 %v1495, %v1487
  %v1704 = vpack.c.b16 %v1496, %v1488
  %v1705 = vpack.c.b16 %v1497, %v1489
  %v1706 = vpack.c.b16 %v1506, %v1498
  %v1707 = vpack.c.b16 %v1507, %v1499
  %v1708 = vpack.c.b16 %v1508, %v1500
  %v1709 = vpack.c.b16 %v1509, %v1501
  %v1710 = vpack.c.b16 %v1510, %v1502
  %v1711 = vpack.c.b16 %v1511, %v1503
  %v1712 = vpack.c.b16 %v1512, %v1504
  %v1713 = vpack.c.b16 %v1513, %v1505
  %v1714 = vpack.c.b16 %v1522, %v1514
  %v1715 = vpack.c.b16 %v1523, %v1515
  %v1716 = vpack.c.b16 %v1524, %v1516
  %v1717 = vpack.c.b16 %v1525, %v1517
  %v1718 = vpack.c.b16 %v1526, %v1518
  %v1719 = vpack.c.b16 %v1527, %v1519
  %v1720 = vpack.c.b16 %v1528, %v1520
  %v1721 = vpack.c.b16 %v1529, %v1521
  %v1722 = vpack.c.b16 %v1538, %v1530
  %v1723 = vpack.c.b16 %v1539, %v1531
  %v1724 = vpack.c.b16 %v1540, %v1532
  %v1725 = vpack.c.b16 %v1541, %v1533
  %v1726 = vpack.c.b16 %v1542, %v1534
  %v1727 = vpack.c.b16 %v1543, %v1535
  %v1728 = vpack.c.b16 %v1544, %v1536
  %v1729 = vpack.c.b16 %v1545, %v1537
  %v1730 = vpack.c.b16 %v1554, %v1546
  %v1731 = vpack.c.b16 %v1555, %v1547
  %v1732 = vpack.c.b16 %v1556, %v1548
  %v1733 = vpack.c.b16 %v1557, %v1549
  %v1734 = vpack.c.b16 %v1558, %v1550
  %v1735 = vpack.c.b16 %v1559, %v1551
  %v1736 = vpack.c.b16 %v1560, %v1552
  %v1737 = vpack.c.b16 %v1561, %v1553
  %v1738 = vpack.c.b16 %v1570, %v1562
  %v1739 = vpack.c.b16 %v1571, %v1563
  %v1740 = vpack.c.b16 %v1572, %v1564
  %v1741 = vpack.c.b16 %v1573, %v1565
  %v1742 = vpack.c.b16 %v1574, %v1566
  %v1743 = vpack.c.b16 %v1575, %v1567
  %v1744 = vpack.c.b16 %v1576, %v1568
  %v1745 = vpack.c.b16 %v1577, %v1569
  %v1746 = vpack.c.b16 %v1586, %v1578
  %v1747 = vpack.c.b16 %v1587, %v1579
  %v1748 = vpack.c.b16 %v1588, %v1580
  %v1749 = vpack.c.b16 %v1589, %v1581
  %v1750 = vpack.c.b16 %v1590, %v1582
  %v1751 = vpack.c.b16 %v1591, %v1583
  %v1752 = vpack.c.b16 %v1592, %v1584
  %v1753 = vpack.c.b16 %v1593, %v1585
  %v1754 = vpack.c.b16 %v1602, %v1594
  %v1755 = vpack.c.b16 %v1603, %v1595
  %v1756 = vpack.c.b16 %v1604, %v1596
  %v1757 = vpack.c.b16 %v1605, %v1597
  %v1758 = vpack.c.b16 %v1606, %v1598
  %v1759 = vpack.c.b16 %v1607, %v1599
  %v1760 = vpack.c.b16 %v1608, %v1600
  %v1761 = vpack.c.b16 %v1609, %v1601
  %v1762 = vpack.c.b16 %v1618, %v1610
  %v1763 = vpack.c.b16 %v1619, %v1611
  %v1764 = vpack.c.b16 %v1620, %v1612
  %v1765 = vpack.c.b16 %v1621, %v1613
  %v1766 = vpack.c.b16 %v1622, %v1614
  %v1767 = vpack.c.b16 %v1623, %v1615
  %v1768 = vpack.c.b16 %v1624, %v1616
  %v1769 = vpack.c.b16 %v1625, %v1617
  %v1770 = vpack.c.b16 %v1634, %v1626
  %v1771 = vpack.c.b16 %v1635, %v1627
  %v1772 = vpack.c.b16 %v1636, %v1628
  %v1773 = vpack.c.b16 %v1637, %v1629
  %v1774 = vpack.c.b16 %v1638, %v1630
  %v1775 = vpack.c.b16 %v1639, %v1631
  %v1776 = vpack.c.b16 %v1640, %v1632
  %v1777 = vpack.c.b16 %v1641, %v1633
  %v1778 = vpack.c.b16 %v1650, %v1642
  %v1779 = vpack.c.b16 %v1651, %v1643
  %v1780 = vpack.c.b16 %v1652, %v1644
  %v1781 = vpack.c.b16 %v1653, %v1645
  %v1782 = vpack.c.b16 %v1654, %v1646
  %v1783 = vpack.c.b16 %v1655, %v1647
  %v1784 = vpack.c.b16 %v1656, %v1648
  %v1785 = vpack.c.b16 %v1657, %v1649
  %1914 = vmatprep.subr.bf16.mxu0 %v1659
  %1915 = vmatpush1.bf16.msra.mxu0 %v1658
  %1916 = vmatprep.subr.bf16.mxu0 %v1667
  %1917 = vmatpush1.bf16.msra.mxu0 %v1666
  %1918 = vmatprep.subr.bf16.mxu0 %v1675
  %1919 = vmatpush1.bf16.msra.mxu0 %v1674
  %1920 = vmatprep.subr.bf16.mxu0 %v1683
  %1921 = vmatpush1.bf16.msra.mxu0 %v1682
  %1922 = vmatprep.subr.bf16.mxu0 %v1691
  %1923 = vmatpush1.bf16.msra.mxu0 %v1690
  %1924 = vmatprep.subr.bf16.mxu0 %v1699
  %1925 = vmatpush1.bf16.msra.mxu0 %v1698
  %1926 = vmatprep.subr.bf16.mxu0 %v1707
  %1927 = vmatpush1.bf16.msra.mxu0 %v1706
  %1928 = vmatprep.subr.bf16.mxu0 %v1715
  %1929 = vmatpush1.bf16.msra.mxu0 %v1714
  %1930 = vmatprep.subr.bf16.mxu0 %v1723
  %1931 = vmatpush1.bf16.msra.mxu0 %v1722
  %1932 = vmatprep.subr.bf16.mxu0 %v1731
  %1933 = vmatpush1.bf16.msra.mxu0 %v1730
  %1934 = vmatprep.subr.bf16.mxu0 %v1739
  %1935 = vmatpush1.bf16.msra.mxu0 %v1738
  %1936 = vmatprep.subr.bf16.mxu0 %v1747
  %1937 = vmatpush1.bf16.msra.mxu0 %v1746
  %1938 = vmatprep.subr.bf16.mxu0 %v1755
  %1939 = vmatpush1.bf16.msra.mxu0 %v1754
  %1940 = vmatprep.subr.bf16.mxu0 %v1763
  %1941 = vmatpush1.bf16.msra.mxu0 %v1762
  %1942 = vmatprep.subr.bf16.mxu0 %v1771
  %1943 = vmatpush1.bf16.msra.mxu0 %v1770
  %1944 = vmatprep.subr.bf16.mxu0 %v1779
  %1945 = vmatpush1.bf16.msra.mxu0 %v1778
  %1946 = vmatprep.mubr.bf16.mxu0 %v1097
  %1947 = vmatmul.mubr.bf16.gmra.mrb[0].mxu0 %v1096
  %v1948 = vpop.f32.mrb[0].mxu0
  %v1949 = vadd.f32 %v1237, %v1948
  %v1950 = vpop.f32.mrb[0].mxu0
  %v1951 = vadd.f32 %v1241, %v1950
  %v1952 = vpop.f32.mrb[0].mxu0
  %v1953 = vadd.f32 %v1237, %v1952
  %v1954 = vpop.f32.mrb[0].mxu0
  %v1955 = vadd.f32 %v1241, %v1954
  %1956 = vmatprep.mubr.bf16.mxu0 %v1099
  %1957 = vmatmul.mubr.bf16.gmra.mrb[0].mxu0 %v1098
  %v1958 = vpop.f32.mrb[0].mxu0
  %v1959 = vadd.f32 %v1237, %v1958
  %v1960 = vpop.f32.mrb[0].mxu0
  %v1961 = vadd.f32 %v1241, %v1960
  %v1962 = vpop.f32.mrb[0].mxu0
  %v1963 = vadd.f32 %v1237, %v1962
  %v1964 = vpop.f32.mrb[0].mxu0
  %v1965 = vadd.f32 %v1241, %v1964
  %1966 = vmatprep.mubr.bf16.mxu0 %v1101
  %1967 = vmatmul.mubr.bf16.gmra.mrb[0].mxu0 %v1100
  %v1968 = vpop.f32.mrb[0].mxu0
  %v1969 = vadd.f32 %v1237, %v1968
  %v1970 = vpop.f32.mrb[0].mxu0
  %v1971 = vadd.f32 %v1241, %v1970
  %v1972 = vpop.f32.mrb[0].mxu0
  %v1973 = vadd.f32 %v1237, %v1972
  %v1974 = vpop.f32.mrb[0].mxu0
  %v1975 = vadd.f32 %v1241, %v1974
  %1976 = vmatprep.mubr.bf16.mxu0 %v1103
  %1977 = vmatmul.mubr.bf16.gmra.mrb[0].mxu0 %v1102
  %v1978 = vpop.f32.mrb[0].mxu0
  %v1979 = vadd.f32 %v1237, %v1978
  %v1980 = vpop.f32.mrb[0].mxu0
  %v1981 = vadd.f32 %v1241, %v1980
  %v1982 = vpop.f32.mrb[0].mxu0
  %v1983 = vadd.f32 %v1237, %v1982
  %v1984 = vpop.f32.mrb[0].mxu0
  %v1985 = vadd.f32 %v1241, %v1984
  %1986 = vdwg.mxu0
  %1987 = vmatprep.subr.bf16.mxu0 %v1661
  %1988 = vmatpush1.bf16.msra.mxu0 %v1660
  %1989 = vmatprep.subr.bf16.mxu0 %v1669
  %1990 = vmatpush1.bf16.msra.mxu0 %v1668
  %1991 = vmatprep.subr.bf16.mxu0 %v1677
  %1992 = vmatpush1.bf16.msra.mxu0 %v1676
  %1993 = vmatprep.subr.bf16.mxu0 %v1685
  %1994 = vmatpush1.bf16.msra.mxu0 %v1684
  %1995 = vmatprep.subr.bf16.mxu0 %v1693
  %1996 = vmatpush1.bf16.msra.mxu0 %v1692
  %1997 = vmatprep.subr.bf16.mxu0 %v1701
  %1998 = vmatpush1.bf16.msra.mxu0 %v1700
  %1999 = vmatprep.subr.bf16.mxu0 %v1709
  %2000 = vmatpush1.bf16.msra.mxu0 %v1708
  %2001 = vmatprep.subr.bf16.mxu0 %v1717
  %2002 = vmatpush1.bf16.msra.mxu0 %v1716
  %2003 = vmatprep.subr.bf16.mxu0 %v1725
  %2004 = vmatpush1.bf16.msra.mxu0 %v1724
  %2005 = vmatprep.subr.bf16.mxu0 %v1733
  %2006 = vmatpush1.bf16.msra.mxu0 %v1732
  %2007 = vmatprep.subr.bf16.mxu0 %v1741
  %2008 = vmatpush1.bf16.msra.mxu0 %v1740
  %2009 = vmatprep.subr.bf16.mxu0 %v1749
  %2010 = vmatpush1.bf16.msra.mxu0 %v1748
  %2011 = vmatprep.subr.bf16.mxu0 %v1757
  %2012 = vmatpush1.bf16.msra.mxu0 %v1756
  %2013 = vmatprep.subr.bf16.mxu0 %v1765
  %2014 = vmatpush1.bf16.msra.mxu0 %v1764
  %2015 = vmatprep.subr.bf16.mxu0 %v1773
  %2016 = vmatpush1.bf16.msra.mxu0 %v1772
  %2017 = vmatprep.subr.bf16.mxu0 %v1781
  %2018 = vmatpush1.bf16.msra.mxu0 %v1780
  %2019 = vmatprep.mubr.bf16.mxu0 %v1097
  %2020 = vmatmul.mubr.bf16.gmra.mrb[0].mxu0 %v1096
  %v2021 = vpop.f32.mrb[0].mxu0
  %v2022 = vadd.f32 %v1245, %v2021
  %v2023 = vpop.f32.mrb[0].mxu0
  %v2024 = vadd.f32 %v1249, %v2023
  %v2025 = vpop.f32.mrb[0].mxu0
  %v2026 = vadd.f32 %v1245, %v2025
  %v2027 = vpop.f32.mrb[0].mxu0
  %v2028 = vadd.f32 %v1249, %v2027
  %2029 = vmatprep.mubr.bf16.mxu0 %v1099
  %2030 = vmatmul.mubr.bf16.gmra.mrb[0].mxu0 %v1098
  %v2031 = vpop.f32.mrb[0].mxu0
  %v2032 = vadd.f32 %v1245, %v2031
  %v2033 = vpop.f32.mrb[0].mxu0
  %v2034 = vadd.f32 %v1249, %v2033
  %v2035 = vpop.f32.mrb[0].mxu0
  %v2036 = vadd.f32 %v1245, %v2035
  %v2037 = vpop.f32.mrb[0].mxu0
  %v2038 = vadd.f32 %v1249, %v2037
  %2039 = vmatprep.mubr.bf16.mxu0 %v1101
  %2040 = vmatmul.mubr.bf16.gmra.mrb[0].mxu0 %v1100
  %v2041 = vpop.f32.mrb[0].mxu0
  %v2042 = vadd.f32 %v1245, %v2041
  %v2043 = vpop.f32.mrb[0].mxu0
  %v2044 = vadd.f32 %v1249, %v2043
  %v2045 = vpop.f32.mrb[0].mxu0
  %v2046 = vadd.f32 %v1245, %v2045
  %v2047 = vpop.f32.mrb[0].mxu0
  %v2048 = vadd.f32 %v1249, %v2047
  %2049 = vmatprep.mubr.bf16.mxu0 %v1103
  %2050 = vmatmul.mubr.bf16.gmra.mrb[0].mxu0 %v1102
  %v2051 = vpop.f32.mrb[0].mxu0
  %v2052 = vadd.f32 %v1245, %v2051
  %v2053 = vpop.f32.mrb[0].mxu0
  %v2054 = vadd.f32 %v1249, %v2053
  %v2055 = vpop.f32.mrb[0].mxu0
  %v2056 = vadd.f32 %v1245, %v2055
  %v2057 = vpop.f32.mrb[0].mxu0
  %v2058 = vadd.f32 %v1249, %v2057
  %2059 = vdwg.mxu0
  %2060 = vmatprep.subr.bf16.mxu0 %v1663
  %2061 = vmatpush1.bf16.msra.mxu0 %v1662
  %2062 = vmatprep.subr.bf16.mxu0 %v1671
  %2063 = vmatpush1.bf16.msra.mxu0 %v1670
  %2064 = vmatprep.subr.bf16.mxu0 %v1679
  %2065 = vmatpush1.bf16.msra.mxu0 %v1678
  %2066 = vmatprep.subr.bf16.mxu0 %v1687
  %2067 = vmatpush1.bf16.msra.mxu0 %v1686
  %2068 = vmatprep.subr.bf16.mxu0 %v1695
  %2069 = vmatpush1.bf16.msra.mxu0 %v1694
  %2070 = vmatprep.subr.bf16.mxu0 %v1703
  %2071 = vmatpush1.bf16.msra.mxu0 %v1702
  %2072 = vmatprep.subr.bf16.mxu0 %v1711
  %2073 = vmatpush1.bf16.msra.mxu0 %v1710
  %2074 = vmatprep.subr.bf16.mxu0 %v1719
  %2075 = vmatpush1.bf16.msra.mxu0 %v1718
  %2076 = vmatprep.subr.bf16.mxu0 %v1727
  %2077 = vmatpush1.bf16.msra.mxu0 %v1726
  %2078 = vmatprep.subr.bf16.mxu0 %v1735
  %2079 = vmatpush1.bf16.msra.mxu0 %v1734
  %2080 = vmatprep.subr.bf16.mxu0 %v1743
  %2081 = vmatpush1.bf16.msra.mxu0 %v1742
  %2082 = vmatprep.subr.bf16.mxu0 %v1751
  %2083 = vmatpush1.bf16.msra.mxu0 %v1750
  %2084 = vmatprep.subr.bf16.mxu0 %v1759
  %2085 = vmatpush1.bf16.msra.mxu0 %v1758
  %2086 = vmatprep.subr.bf16.mxu0 %v1767
  %2087 = vmatpush1.bf16.msra.mxu0 %v1766
  %2088 = vmatprep.subr.bf16.mxu0 %v1775
  %2089 = vmatpush1.bf16.msra.mxu0 %v1774
  %2090 = vmatprep.subr.bf16.mxu0 %v1783
  %2091 = vmatpush1.bf16.msra.mxu0 %v1782
  %2092 = vmatprep.mubr.bf16.mxu0 %v1097
  %2093 = vmatmul.mubr.bf16.gmra.mrb[0].mxu0 %v1096
  %v2094 = vpop.f32.mrb[0].mxu0
  %v2095 = vadd.f32 %v1253, %v2094
  %v2096 = vpop.f32.mrb[0].mxu0
  %v2097 = vadd.f32 %v1257, %v2096
  %v2098 = vpop.f32.mrb[0].mxu0
  %v2099 = vadd.f32 %v1253, %v2098
  %v2100 = vpop.f32.mrb[0].mxu0
  %v2101 = vadd.f32 %v1257, %v2100
  %2102 = vmatprep.mubr.bf16.mxu0 %v1099
  %2103 = vmatmul.mubr.bf16.gmra.mrb[0].mxu0 %v1098
  %v2104 = vpop.f32.mrb[0].mxu0
  %v2105 = vadd.f32 %v1253, %v2104
  %v2106 = vpop.f32.mrb[0].mxu0
  %v2107 = vadd.f32 %v1257, %v2106
  %v2108 = vpop.f32.mrb[0].mxu0
  %v2109 = vadd.f32 %v1253, %v2108
  %v2110 = vpop.f32.mrb[0].mxu0
  %v2111 = vadd.f32 %v1257, %v2110
  %2112 = vmatprep.mubr.bf16.mxu0 %v1101
  %2113 = vmatmul.mubr.bf16.gmra.mrb[0].mxu0 %v1100
  %v2114 = vpop.f32.mrb[0].mxu0
  %v2115 = vadd.f32 %v1253, %v2114
  %v2116 = vpop.f32.mrb[0].mxu0
  %v2117 = vadd.f32 %v1257, %v2116
  %v2118 = vpop.f32.mrb[0].mxu0
  %v2119 = vadd.f32 %v1253, %v2118
  %v2120 = vpop.f32.mrb[0].mxu0
  %v2121 = vadd.f32 %v1257, %v2120
  %2122 = vmatprep.mubr.bf16.mxu0 %v1103
  %2123 = vmatmul.mubr.bf16.gmra.mrb[0].mxu0 %v1102
  %v2124 = vpop.f32.mrb[0].mxu0
  %v2125 = vadd.f32 %v1253, %v2124
  %v2126 = vpop.f32.mrb[0].mxu0
  %v2127 = vadd.f32 %v1257, %v2126
  %v2128 = vpop.f32.mrb[0].mxu0
  %v2129 = vadd.f32 %v1253, %v2128
  %v2130 = vpop.f32.mrb[0].mxu0
  %v2131 = vadd.f32 %v1257, %v2130
  %2132 = vdwg.mxu0
  %2133 = vmatprep.subr.bf16.mxu0 %v1665
  %2134 = vmatpush1.bf16.msra.mxu0 %v1664
  %2135 = vmatprep.subr.bf16.mxu0 %v1673
  %2136 = vmatpush1.bf16.msra.mxu0 %v1672
  %2137 = vmatprep.subr.bf16.mxu0 %v1681
  %2138 = vmatpush1.bf16.msra.mxu0 %v1680
  %2139 = vmatprep.subr.bf16.mxu0 %v1689
  %2140 = vmatpush1.bf16.msra.mxu0 %v1688
  %2141 = vmatprep.subr.bf16.mxu0 %v1697
  %2142 = vmatpush1.bf16.msra.mxu0 %v1696
  %2143 = vmatprep.subr.bf16.mxu0 %v1705
  %2144 = vmatpush1.bf16.msra.mxu0 %v1704
  %2145 = vmatprep.subr.bf16.mxu0 %v1713
  %2146 = vmatpush1.bf16.msra.mxu0 %v1712
  %2147 = vmatprep.subr.bf16.mxu0 %v1721
  %2148 = vmatpush1.bf16.msra.mxu0 %v1720
  %2149 = vmatprep.subr.bf16.mxu0 %v1729
  %2150 = vmatpush1.bf16.msra.mxu0 %v1728
  %2151 = vmatprep.subr.bf16.mxu0 %v1737
  %2152 = vmatpush1.bf16.msra.mxu0 %v1736
  %2153 = vmatprep.subr.bf16.mxu0 %v1745
  %2154 = vmatpush1.bf16.msra.mxu0 %v1744
  %2155 = vmatprep.subr.bf16.mxu0 %v1753
  %2156 = vmatpush1.bf16.msra.mxu0 %v1752
  %2157 = vmatprep.subr.bf16.mxu0 %v1761
  %2158 = vmatpush1.bf16.msra.mxu0 %v1760
  %2159 = vmatprep.subr.bf16.mxu0 %v1769
  %2160 = vmatpush1.bf16.msra.mxu0 %v1768
  %2161 = vmatprep.subr.bf16.mxu0 %v1777
  %2162 = vmatpush1.bf16.msra.mxu0 %v1776
  %2163 = vmatprep.subr.bf16.mxu0 %v1785
  %2164 = vmatpush1.bf16.msra.mxu0 %v1784
  %2165 = vmatprep.mubr.bf16.mxu0 %v1097
  %2166 = vmatmul.mubr.bf16.gmra.mrb[0].mxu0 %v1096
  %v2167 = vpop.f32.mrb[0].mxu0
  %v2168 = vadd.f32 %v1261, %v2167
  %v2169 = vpop.f32.mrb[0].mxu0
  %v2170 = vadd.f32 %v1265, %v2169
  %v2171 = vpop.f32.mrb[0].mxu0
  %v2172 = vadd.f32 %v1261, %v2171
  %v2173 = vpop.f32.mrb[0].mxu0
  %v2174 = vadd.f32 %v1265, %v2173
  %2175 = vmatprep.mubr.bf16.mxu0 %v1099
  %2176 = vmatmul.mubr.bf16.gmra.mrb[0].mxu0 %v1098
  %v2177 = vpop.f32.mrb[0].mxu0
  %v2178 = vadd.f32 %v1261, %v2177
  %v2179 = vpop.f32.mrb[0].mxu0
  %v2180 = vadd.f32 %v1265, %v2179
  %v2181 = vpop.f32.mrb[0].mxu0
  %v2182 = vadd.f32 %v1261, %v2181
  %v2183 = vpop.f32.mrb[0].mxu0
  %v2184 = vadd.f32 %v1265, %v2183
  %2185 = vmatprep.mubr.bf16.mxu0 %v1101
  %2186 = vmatmul.mubr.bf16.gmra.mrb[0].mxu0 %v1100
  %v2187 = vpop.f32.mrb[0].mxu0
  %v2188 = vadd.f32 %v1261, %v2187
  %v2189 = vpop.f32.mrb[0].mxu0
  %v2190 = vadd.f32 %v1265, %v2189
  %v2191 = vpop.f32.mrb[0].mxu0
  %v2192 = vadd.f32 %v1261, %v2191
  %v2193 = vpop.f32.mrb[0].mxu0
  %v2194 = vadd.f32 %v1265, %v2193
  %2195 = vmatprep.mubr.bf16.mxu0 %v1103
  %2196 = vmatmul.mubr.bf16.gmra.mrb[0].mxu0 %v1102
  %v2197 = vpop.f32.mrb[0].mxu0
  %v2198 = vadd.f32 %v1261, %v2197
  %v2199 = vpop.f32.mrb[0].mxu0
  %v2200 = vadd.f32 %v1265, %v2199
  %v2201 = vpop.f32.mrb[0].mxu0
  %v2202 = vadd.f32 %v1261, %v2201
  %v2203 = vpop.f32.mrb[0].mxu0
  %v2204 = vadd.f32 %v1265, %v2203
  %2205 = vdwg.mxu0
  %2206 = vst [vmem:[#allocation2] sm:$0xff] %v1949
  %2207 = vst [vmem:[#allocation2 + $0x8] sm:$0xff] %v1951
  %2208 = vst [vmem:[#allocation2 + $0x10] sm:$0xff] %v2022
  %2209 = vst [vmem:[#allocation2 + $0x18] sm:$0xff] %v2024
  %2210 = vst [vmem:[#allocation2 + $0x20] sm:$0xff] %v2095
  %2211 = vst [vmem:[#allocation2 + $0x28] sm:$0xff] %v2097
  %2212 = vst [vmem:[#allocation2 + $0x30] sm:$0xff] %v2168
  %2213 = vst [vmem:[#allocation2 + $0x38] sm:$0xff] %v2170
  %2214 = vst [vmem:[#allocation2 + $0x40] sm:$0xff] %v1953
  %2215 = vst [vmem:[#allocation2 + $0x48] sm:$0xff] %v1955
  %2216 = vst [vmem:[#allocation2 + $0x50] sm:$0xff] %v2026
  %2217 = vst [vmem:[#allocation2 + $0x58] sm:$0xff] %v2028
  %2218 = vst [vmem:[#allocation2 + $0x60] sm:$0xff] %v2099
  %2219 = vst [vmem:[#allocation2 + $0x68] sm:$0xff] %v2101
  %2220 = vst [vmem:[#allocation2 + $0x70] sm:$0xff] %v2172
  %2221 = vst [vmem:[#allocation2 + $0x78] sm:$0xff] %v2174
  %2222 = vst [vmem:[#allocation2 + $0x80] sm:$0xff] %v1959
  %2223 = vst [vmem:[#allocation2 + $0x88] sm:$0xff] %v1961
  %2224 = vst [vmem:[#allocation2 + $0x90] sm:$0xff] %v2032
  %2225 = vst [vmem:[#allocation2 + $0x98] sm:$0xff] %v2034
  %2226 = vst [vmem:[#allocation2 + $0xa0] sm:$0xff] %v2105
  %2227 = vst [vmem:[#allocation2 + $0xa8] sm:$0xff] %v2107
  %2228 = vst [vmem:[#allocation2 + $0xb0] sm:$0xff] %v2178
  %2229 = vst [vmem:[#allocation2 + $0xb8] sm:$0xff] %v2180
  %2230 = vst [vmem:[#allocation2 + $0xc0] sm:$0xff] %v1963
  %2231 = vst [vmem:[#allocation2 + $0xc8] sm:$0xff] %v1965
  %2232 = vst [vmem:[#allocation2 + $0xd0] sm:$0xff] %v2036
  %2233 = vst [vmem:[#allocation2 + $0xd8] sm:$0xff] %v2038
  %2234 = vst [vmem:[#allocation2 + $0xe0] sm:$0xff] %v2109
  %2235 = vst [vmem:[#allocation2 + $0xe8] sm:$0xff] %v2111
  %2236 = vst [vmem:[#allocation2 + $0xf0] sm:$0xff] %v2182
  %2237 = vst [vmem:[#allocation2 + $0xf8] sm:$0xff] %v2184
  %2238 = vst [vmem:[#allocation2 + $0x100] sm:$0xff] %v1969
  %2239 = vst [vmem:[#allocation2 + $0x108] sm:$0xff] %v1971
  %2240 = vst [vmem:[#allocation2 + $0x110] sm:$0xff] %v2042
  %2241 = vst [vmem:[#allocation2 + $0x118] sm:$0xff] %v2044
  %2242 = vst [vmem:[#allocation2 + $0x120] sm:$0xff] %v2115
  %2243 = vst [vmem:[#allocation2 + $0x128] sm:$0xff] %v2117
  %2244 = vst [vmem:[#allocation2 + $0x130] sm:$0xff] %v2188
  %2245 = vst [vmem:[#allocation2 + $0x138] sm:$0xff] %v2190
  %2246 = vst [vmem:[#allocation2 + $0x140] sm:$0xff] %v1973
  %2247 = vst [vmem:[#allocation2 + $0x148] sm:$0xff] %v1975
  %2248 = vst [vmem:[#allocation2 + $0x150] sm:$0xff] %v2046
  %2249 = vst [vmem:[#allocation2 + $0x158] sm:$0xff] %v2048
  %2250 = vst [vmem:[#allocation2 + $0x160] sm:$0xff] %v2119
  %2251 = vst [vmem:[#allocation2 + $0x168] sm:$0xff] %v2121
  %2252 = vst [vmem:[#allocation2 + $0x170] sm:$0xff] %v2192
  %2253 = vst [vmem:[#allocation2 + $0x178] sm:$0xff] %v2194
  %2254 = vst [vmem:[#allocation2 + $0x180] sm:$0xff] %v1979
  %2255 = vst [vmem:[#allocation2 + $0x188] sm:$0xff] %v1981
  %2256 = vst [vmem:[#allocation2 + $0x190] sm:$0xff] %v2052
  %2257 = vst [vmem:[#allocation2 + $0x198] sm:$0xff] %v2054
  %2258 = vst [vmem:[#allocation2 + $0x1a0] sm:$0xff] %v2125
  %2259 = vst [vmem:[#allocation2 + $0x1a8] sm:$0xff] %v2127
  %2260 = vst [vmem:[#allocation2 + $0x1b0] sm:$0xff] %v2198
  %2261 = vst [vmem:[#allocation2 + $0x1b8] sm:$0xff] %v2200
  %2262 = vst [vmem:[#allocation2 + $0x1c0] sm:$0xff] %v1983
  %2263 = vst [vmem:[#allocation2 + $0x1c8] sm:$0xff] %v1985
  %2264 = vst [vmem:[#allocation2 + $0x1d0] sm:$0xff] %v2056
  %2265 = vst [vmem:[#allocation2 + $0x1d8] sm:$0xff] %v2058
  %2266 = vst [vmem:[#allocation2 + $0x1e0] sm:$0xff] %v2129
  %2267 = vst [vmem:[#allocation2 + $0x1e8] sm:$0xff] %v2131
  %2268 = vst [vmem:[#allocation2 + $0x1f0] sm:$0xff] %v2202
  %2269 = vst [vmem:[#allocation2 + $0x1f8] sm:$0xff] %v2204
  %v2270 = vld [vmem:[%s15] sm:$0xff]
  %v2271 = vld [vmem:[%s15 + $0x8] sm:$0xff]
  %v2272 = vld [vmem:[%s15 + $0x10] sm:$0xff]
  %v2273 = vld [vmem:[%s15 + $0x18] sm:$0xff]
  %v2274 = vld [vmem:[%s15 + $0x20] sm:$0xff]
  %v2275 = vld [vmem:[%s15 + $0x28] sm:$0xff]
  %v2276 = vld [vmem:[%s15 + $0x30] sm:$0xff]
  %v2277 = vld [vmem:[%s15 + $0x38] sm:$0xff]
  %v2278 = vld [vmem:[%s15 + $0x40] sm:$0xff]
  %v2279 = vld [vmem:[%s15 + $0x48] sm:$0xff]
  %v2280 = vld [vmem:[%s15 + $0x50] sm:$0xff]
  %v2281 = vld [vmem:[%s15 + $0x58] sm:$0xff]
  %v2282 = vld [vmem:[%s15 + $0x60] sm:$0xff]
  %v2283 = vld [vmem:[%s15 + $0x68] sm:$0xff]
  %v2284 = vld [vmem:[%s15 + $0x70] sm:$0xff]
  %v2285 = vld [vmem:[%s15 + $0x78] sm:$0xff]
  %v2286 = vld [vmem:[%s15 + $0x80] sm:$0xff]
  %v2287 = vld [vmem:[%s15 + $0x88] sm:$0xff]
  %v2288 = vld [vmem:[%s15 + $0x90] sm:$0xff]
  %v2289 = vld [vmem:[%s15 + $0x98] sm:$0xff]
  %v2290 = vld [vmem:[%s15 + $0xa0] sm:$0xff]
  %v2291 = vld [vmem:[%s15 + $0xa8] sm:$0xff]
  %v2292 = vld [vmem:[%s15 + $0xb0] sm:$0xff]
  %v2293 = vld [vmem:[%s15 + $0xb8] sm:$0xff]
  %v2294 = vld [vmem:[%s15 + $0xc0] sm:$0xff]
  %v2295 = vld [vmem:[%s15 + $0xc8] sm:$0xff]
  %v2296 = vld [vmem:[%s15 + $0xd0] sm:$0xff]
  %v2297 = vld [vmem:[%s15 + $0xd8] sm:$0xff]
  %v2298 = vld [vmem:[%s15 + $0xe0] sm:$0xff]
  %v2299 = vld [vmem:[%s15 + $0xe8] sm:$0xff]
  %v2300 = vld [vmem:[%s15 + $0xf0] sm:$0xff]
  %v2301 = vld [vmem:[%s15 + $0xf8] sm:$0xff]
  %v2302 = vld [vmem:[%s15 + $0x100] sm:$0xff]
  %v2303 = vld [vmem:[%s15 + $0x108] sm:$0xff]
  %v2304 = vld [vmem:[%s15 + $0x110] sm:$0xff]
  %v2305 = vld [vmem:[%s15 + $0x118] sm:$0xff]
  %v2306 = vld [vmem:[%s15 + $0x120] sm:$0xff]
  %v2307 = vld [vmem:[%s15 + $0x128] sm:$0xff]
  %v2308 = vld [vmem:[%s15 + $0x130] sm:$0xff]
  %v2309 = vld [vmem:[%s15 + $0x138] sm:$0xff]
  %v2310 = vld [vmem:[%s15 + $0x140] sm:$0xff]
  %v2311 = vld [vmem:[%s15 + $0x148] sm:$0xff]
  %v2312 = vld [vmem:[%s15 + $0x150] sm:$0xff]
  %v2313 = vld [vmem:[%s15 + $0x158] sm:$0xff]
  %v2314 = vld [vmem:[%s15 + $0x160] sm:$0xff]
  %v2315 = vld [vmem:[%s15 + $0x168] sm:$0xff]
  %v2316 = vld [vmem:[%s15 + $0x170] sm:$0xff]
  %v2317 = vld [vmem:[%s15 + $0x178] sm:$0xff]
  %v2318 = vld [vmem:[%s15 + $0x180] sm:$0xff]
  %v2319 = vld [vmem:[%s15 + $0x188] sm:$0xff]
  %v2320 = vld [vmem:[%s15 + $0x190] sm:$0xff]
  %v2321 = vld [vmem:[%s15 + $0x198] sm:$0xff]
  %v2322 = vld [vmem:[%s15 + $0x1a0] sm:$0xff]
  %v2323 = vld [vmem:[%s15 + $0x1a8] sm:$0xff]
  %v2324 = vld [vmem:[%s15 + $0x1b0] sm:$0xff]
  %v2325 = vld [vmem:[%s15 + $0x1b8] sm:$0xff]
  %v2326 = vld [vmem:[%s15 + $0x1c0] sm:$0xff]
  %v2327 = vld [vmem:[%s15 + $0x1c8] sm:$0xff]
  %v2328 = vld [vmem:[%s15 + $0x1d0] sm:$0xff]
  %v2329 = vld [vmem:[%s15 + $0x1d8] sm:$0xff]
  %v2330 = vld [vmem:[%s15 + $0x1e0] sm:$0xff]
  %v2331 = vld [vmem:[%s15 + $0x1e8] sm:$0xff]
  %v2332 = vld [vmem:[%s15 + $0x1f0] sm:$0xff]
  %v2333 = vld [vmem:[%s15 + $0x1f8] sm:$0xff]
  %v2334 = vld [vmem:[%s15 + $0x200] sm:$0xff]
  %v2335 = vld [vmem:[%s15 + $0x208] sm:$0xff]
  %v2336 = vld [vmem:[%s15 + $0x210] sm:$0xff]
  %v2337 = vld [vmem:[%s15 + $0x218] sm:$0xff]
  %v2338 = vld [vmem:[%s15 + $0x220] sm:$0xff]
  %v2339 = vld [vmem:[%s15 + $0x228] sm:$0xff]
  %v2340 = vld [vmem:[%s15 + $0x230] sm:$0xff]
  %v2341 = vld [vmem:[%s15 + $0x238] sm:$0xff]
  %v2342 = vld [vmem:[%s15 + $0x240] sm:$0xff]
  %v2343 = vld [vmem:[%s15 + $0x248] sm:$0xff]
  %v2344 = vld [vmem:[%s15 + $0x250] sm:$0xff]
  %v2345 = vld [vmem:[%s15 + $0x258] sm:$0xff]
  %v2346 = vld [vmem:[%s15 + $0x260] sm:$0xff]
  %v2347 = vld [vmem:[%s15 + $0x268] sm:$0xff]
  %v2348 = vld [vmem:[%s15 + $0x270] sm:$0xff]
  %v2349 = vld [vmem:[%s15 + $0x278] sm:$0xff]
  %v2350 = vld [vmem:[%s15 + $0x280] sm:$0xff]
  %v2351 = vld [vmem:[%s15 + $0x288] sm:$0xff]
  %v2352 = vld [vmem:[%s15 + $0x290] sm:$0xff]
  %v2353 = vld [vmem:[%s15 + $0x298] sm:$0xff]
  %v2354 = vld [vmem:[%s15 + $0x2a0] sm:$0xff]
  %v2355 = vld [vmem:[%s15 + $0x2a8] sm:$0xff]
  %v2356 = vld [vmem:[%s15 + $0x2b0] sm:$0xff]
  %v2357 = vld [vmem:[%s15 + $0x2b8] sm:$0xff]
  %v2358 = vld [vmem:[%s15 + $0x2c0] sm:$0xff]
  %v2359 = vld [vmem:[%s15 + $0x2c8] sm:$0xff]
  %v2360 = vld [vmem:[%s15 + $0x2d0] sm:$0xff]
  %v2361 = vld [vmem:[%s15 + $0x2d8] sm:$0xff]
  %v2362 = vld [vmem:[%s15 + $0x2e0] sm:$0xff]
  %v2363 = vld [vmem:[%s15 + $0x2e8] sm:$0xff]
  %v2364 = vld [vmem:[%s15 + $0x2f0] sm:$0xff]
  %v2365 = vld [vmem:[%s15 + $0x2f8] sm:$0xff]
  %v2366 = vld [vmem:[%s15 + $0x300] sm:$0xff]
  %v2367 = vld [vmem:[%s15 + $0x308] sm:$0xff]
  %v2368 = vld [vmem:[%s15 + $0x310] sm:$0xff]
  %v2369 = vld [vmem:[%s15 + $0x318] sm:$0xff]
  %v2370 = vld [vmem:[%s15 + $0x320] sm:$0xff]
  %v2371 = vld [vmem:[%s15 + $0x328] sm:$0xff]
  %v2372 = vld [vmem:[%s15 + $0x330] sm:$0xff]
  %v2373 = vld [vmem:[%s15 + $0x338] sm:$0xff]
  %v2374 = vld [vmem:[%s15 + $0x340] sm:$0xff]
  %v2375 = vld [vmem:[%s15 + $0x348] sm:$0xff]
  %v2376 = vld [vmem:[%s15 + $0x350] sm:$0xff]
  %v2377 = vld [vmem:[%s15 + $0x358] sm:$0xff]
  %v2378 = vld [vmem:[%s15 + $0x360] sm:$0xff]
  %v2379 = vld [vmem:[%s15 + $0x368] sm:$0xff]
  %v2380 = vld [vmem:[%s15 + $0x370] sm:$0xff]
  %v2381 = vld [vmem:[%s15 + $0x378] sm:$0xff]
  %v2382 = vld [vmem:[%s15 + $0x380] sm:$0xff]
  %v2383 = vld [vmem:[%s15 + $0x388] sm:$0xff]
  %v2384 = vld [vmem:[%s15 + $0x390] sm:$0xff]
  %v2385 = vld [vmem:[%s15 + $0x398] sm:$0xff]
  %v2386 = vld [vmem:[%s15 + $0x3a0] sm:$0xff]
  %v2387 = vld [vmem:[%s15 + $0x3a8] sm:$0xff]
  %v2388 = vld [vmem:[%s15 + $0x3b0] sm:$0xff]
  %v2389 = vld [vmem:[%s15 + $0x3b8] sm:$0xff]
  %v2390 = vld [vmem:[%s15 + $0x3c0] sm:$0xff]
  %v2391 = vld [vmem:[%s15 + $0x3c8] sm:$0xff]
  %v2392 = vld [vmem:[%s15 + $0x3d0] sm:$0xff]
  %v2393 = vld [vmem:[%s15 + $0x3d8] sm:$0xff]
  %v2394 = vld [vmem:[%s15 + $0x3e0] sm:$0xff]
  %v2395 = vld [vmem:[%s15 + $0x3e8] sm:$0xff]
  %v2396 = vld [vmem:[%s15 + $0x3f0] sm:$0xff]
  %v2397 = vld [vmem:[%s15 + $0x3f8] sm:$0xff]
  %v2526 = vunpack.c.l.b16 %v2270
  %v2527 = vunpack.c.h.b16 %v2270
  %v2528 = vunpack.c.l.b16 %v2271
  %v2529 = vunpack.c.h.b16 %v2271
  %v2530 = vunpack.c.l.b16 %v2272
  %v2531 = vunpack.c.h.b16 %v2272
  %v2532 = vunpack.c.l.b16 %v2273
  %v2533 = vunpack.c.h.b16 %v2273
  %v2534 = vunpack.c.l.b16 %v2274
  %v2535 = vunpack.c.h.b16 %v2274
  %v2536 = vunpack.c.l.b16 %v2275
  %v2537 = vunpack.c.h.b16 %v2275
  %v2538 = vunpack.c.l.b16 %v2276
  %v2539 = vunpack.c.h.b16 %v2276
  %v2540 = vunpack.c.l.b16 %v2277
  %v2541 = vunpack.c.h.b16 %v2277
  %v2542 = vunpack.c.l.b16 %v2278
  %v2543 = vunpack.c.h.b16 %v2278
  %v2544 = vunpack.c.l.b16 %v2279
  %v2545 = vunpack.c.h.b16 %v2279
  %v2546 = vunpack.c.l.b16 %v2280
  %v2547 = vunpack.c.h.b16 %v2280
  %v2548 = vunpack.c.l.b16 %v2281
  %v2549 = vunpack.c.h.b16 %v2281
  %v2550 = vunpack.c.l.b16 %v2282
  %v2551 = vunpack.c.h.b16 %v2282
  %v2552 = vunpack.c.l.b16 %v2283
  %v2553 = vunpack.c.h.b16 %v2283
  %v2554 = vunpack.c.l.b16 %v2284
  %v2555 = vunpack.c.h.b16 %v2284
  %v2556 = vunpack.c.l.b16 %v2285
  %v2557 = vunpack.c.h.b16 %v2285
  %v2558 = vunpack.c.l.b16 %v2286
  %v2559 = vunpack.c.h.b16 %v2286
  %v2560 = vunpack.c.l.b16 %v2287
  %v2561 = vunpack.c.h.b16 %v2287
  %v2562 = vunpack.c.l.b16 %v2288
  %v2563 = vunpack.c.h.b16 %v2288
  %v2564 = vunpack.c.l.b16 %v2289
  %v2565 = vunpack.c.h.b16 %v2289
  %v2566 = vunpack.c.l.b16 %v2290
  %v2567 = vunpack.c.h.b16 %v2290
  %v2568 = vunpack.c.l.b16 %v2291
  %v2569 = vunpack.c.h.b16 %v2291
  %v2570 = vunpack.c.l.b16 %v2292
  %v2571 = vunpack.c.h.b16 %v2292
  %v2572 = vunpack.c.l.b16 %v2293
  %v2573 = vunpack.c.h.b16 %v2293
  %v2574 = vunpack.c.l.b16 %v2294
  %v2575 = vunpack.c.h.b16 %v2294
  %v2576 = vunpack.c.l.b16 %v2295
  %v2577 = vunpack.c.h.b16 %v2295
  %v2578 = vunpack.c.l.b16 %v2296
  %v2579 = vunpack.c.h.b16 %v2296
  %v2580 = vunpack.c.l.b16 %v2297
  %v2581 = vunpack.c.h.b16 %v2297
  %v2582 = vunpack.c.l.b16 %v2298
  %v2583 = vunpack.c.h.b16 %v2298
  %v2584 = vunpack.c.l.b16 %v2299
  %v2585 = vunpack.c.h.b16 %v2299
  %v2586 = vunpack.c.l.b16 %v2300
  %v2587 = vunpack.c.h.b16 %v2300
  %v2588 = vunpack.c.l.b16 %v2301
  %v2589 = vunpack.c.h.b16 %v2301
  %v2590 = vunpack.c.l.b16 %v2302
  %v2591 = vunpack.c.h.b16 %v2302
  %v2592 = vunpack.c.l.b16 %v2303
  %v2593 = vunpack.c.h.b16 %v2303
  %v2594 = vunpack.c.l.b16 %v2304
  %v2595 = vunpack.c.h.b16 %v2304
  %v2596 = vunpack.c.l.b16 %v2305
  %v2597 = vunpack.c.h.b16 %v2305
  %v2598 = vunpack.c.l.b16 %v2306
  %v2599 = vunpack.c.h.b16 %v2306
  %v2600 = vunpack.c.l.b16 %v2307
  %v2601 = vunpack.c.h.b16 %v2307
  %v2602 = vunpack.c.l.b16 %v2308
  %v2603 = vunpack.c.h.b16 %v2308
  %v2604 = vunpack.c.l.b16 %v2309
  %v2605 = vunpack.c.h.b16 %v2309
  %v2606 = vunpack.c.l.b16 %v2310
  %v2607 = vunpack.c.h.b16 %v2310
  %v2608 = vunpack.c.l.b16 %v2311
  %v2609 = vunpack.c.h.b16 %v2311
  %v2610 = vunpack.c.l.b16 %v2312
  %v2611 = vunpack.c.h.b16 %v2312
  %v2612 = vunpack.c.l.b16 %v2313
  %v2613 = vunpack.c.h.b16 %v2313
  %v2614 = vunpack.c.l.b16 %v2314
  %v2615 = vunpack.c.h.b16 %v2314
  %v2616 = vunpack.c.l.b16 %v2315
  %v2617 = vunpack.c.h.b16 %v2315
  %v2618 = vunpack.c.l.b16 %v2316
  %v2619 = vunpack.c.h.b16 %v2316
  %v2620 = vunpack.c.l.b16 %v2317
  %v2621 = vunpack.c.h.b16 %v2317
  %v2622 = vunpack.c.l.b16 %v2318
  %v2623 = vunpack.c.h.b16 %v2318
  %v2624 = vunpack.c.l.b16 %v2319
  %v2625 = vunpack.c.h.b16 %v2319
  %v2626 = vunpack.c.l.b16 %v2320
  %v2627 = vunpack.c.h.b16 %v2320
  %v2628 = vunpack.c.l.b16 %v2321
  %v2629 = vunpack.c.h.b16 %v2321
  %v2630 = vunpack.c.l.b16 %v2322
  %v2631 = vunpack.c.h.b16 %v2322
  %v2632 = vunpack.c.l.b16 %v2323
  %v2633 = vunpack.c.h.b16 %v2323
  %v2634 = vunpack.c.l.b16 %v2324
  %v2635 = vunpack.c.h.b16 %v2324
  %v2636 = vunpack.c.l.b16 %v2325
  %v2637 = vunpack.c.h.b16 %v2325
  %v2638 = vunpack.c.l.b16 %v2326
  %v2639 = vunpack.c.h.b16 %v2326
  %v2640 = vunpack.c.l.b16 %v2327
  %v2641 = vunpack.c.h.b16 %v2327
  %v2642 = vunpack.c.l.b16 %v2328
  %v2643 = vunpack.c.h.b16 %v2328
  %v2644 = vunpack.c.l.b16 %v2329
  %v2645 = vunpack.c.h.b16 %v2329
  %v2646 = vunpack.c.l.b16 %v2330
  %v2647 = vunpack.c.h.b16 %v2330
  %v2648 = vunpack.c.l.b16 %v2331
  %v2649 = vunpack.c.h.b16 %v2331
  %v2650 = vunpack.c.l.b16 %v2332
  %v2651 = vunpack.c.h.b16 %v2332
  %v2652 = vunpack.c.l.b16 %v2333
  %v2653 = vunpack.c.h.b16 %v2333
  %v2654 = vunpack.c.l.b16 %v2334
  %v2655 = vunpack.c.h.b16 %v2334
  %v2656 = vunpack.c.l.b16 %v2335
  %v2657 = vunpack.c.h.b16 %v2335
  %v2658 = vunpack.c.l.b16 %v2336
  %v2659 = vunpack.c.h.b16 %v2336
  %v2660 = vunpack.c.l.b16 %v2337
  %v2661 = vunpack.c.h.b16 %v2337
  %v2662 = vunpack.c.l.b16 %v2338
  %v2663 = vunpack.c.h.b16 %v2338
  %v2664 = vunpack.c.l.b16 %v2339
  %v2665 = vunpack.c.h.b16 %v2339
  %v2666 = vunpack.c.l.b16 %v2340
  %v2667 = vunpack.c.h.b16 %v2340
  %v2668 = vunpack.c.l.b16 %v2341
  %v2669 = vunpack.c.h.b16 %v2341
  %v2670 = vunpack.c.l.b16 %v2342
  %v2671 = vunpack.c.h.b16 %v2342
  %v2672 = vunpack.c.l.b16 %v2343
  %v2673 = vunpack.c.h.b16 %v2343
  %v2674 = vunpack.c.l.b16 %v2344
  %v2675 = vunpack.c.h.b16 %v2344
  %v2676 = vunpack.c.l.b16 %v2345
  %v2677 = vunpack.c.h.b16 %v2345
  %v2678 = vunpack.c.l.b16 %v2346
  %v2679 = vunpack.c.h.b16 %v2346
  %v2680 = vunpack.c.l.b16 %v2347
  %v2681 = vunpack.c.h.b16 %v2347
  %v2682 = vunpack.c.l.b16 %v2348
  %v2683 = vunpack.c.h.b16 %v2348
  %v2684 = vunpack.c.l.b16 %v2349
  %v2685 = vunpack.c.h.b16 %v2349
  %v2686 = vunpack.c.l.b16 %v2350
  %v2687 = vunpack.c.h.b16 %v2350
  %v2688 = vunpack.c.l.b16 %v2351
  %v2689 = vunpack.c.h.b16 %v2351
  %v2690 = vunpack.c.l.b16 %v2352
  %v2691 = vunpack.c.h.b16 %v2352
  %v2692 = vunpack.c.l.b16 %v2353
  %v2693 = vunpack.c.h.b16 %v2353
  %v2694 = vunpack.c.l.b16 %v2354
  %v2695 = vunpack.c.h.b16 %v2354
  %v2696 = vunpack.c.l.b16 %v2355
  %v2697 = vunpack.c.h.b16 %v2355
  %v2698 = vunpack.c.l.b16 %v2356
  %v2699 = vunpack.c.h.b16 %v2356
  %v2700 = vunpack.c.l.b16 %v2357
  %v2701 = vunpack.c.h.b16 %v2357
  %v2702 = vunpack.c.l.b16 %v2358
  %v2703 = vunpack.c.h.b16 %v2358
  %v2704 = vunpack.c.l.b16 %v2359
  %v2705 = vunpack.c.h.b16 %v2359
  %v2706 = vunpack.c.l.b16 %v2360
  %v2707 = vunpack.c.h.b16 %v2360
  %v2708 = vunpack.c.l.b16 %v2361
  %v2709 = vunpack.c.h.b16 %v2361
  %v2710 = vunpack.c.l.b16 %v2362
  %v2711 = vunpack.c.h.b16 %v2362
  %v2712 = vunpack.c.l.b16 %v2363
  %v2713 = vunpack.c.h.b16 %v2363
  %v2714 = vunpack.c.l.b16 %v2364
  %v2715 = vunpack.c.h.b16 %v2364
  %v2716 = vunpack.c.l.b16 %v2365
  %v2717 = vunpack.c.h.b16 %v2365
  %v2718 = vunpack.c.l.b16 %v2366
  %v2719 = vunpack.c.h.b16 %v2366
  %v2720 = vunpack.c.l.b16 %v2367
  %v2721 = vunpack.c.h.b16 %v2367
  %v2722 = vunpack.c.l.b16 %v2368
  %v2723 = vunpack.c.h.b16 %v2368
  %v2724 = vunpack.c.l.b16 %v2369
  %v2725 = vunpack.c.h.b16 %v2369
  %v2726 = vunpack.c.l.b16 %v2370
  %v2727 = vunpack.c.h.b16 %v2370
  %v2728 = vunpack.c.l.b16 %v2371
  %v2729 = vunpack.c.h.b16 %v2371
  %v2730 = vunpack.c.l.b16 %v2372
  %v2731 = vunpack.c.h.b16 %v2372
  %v2732 = vunpack.c.l.b16 %v2373
  %v2733 = vunpack.c.h.b16 %v2373
  %v2734 = vunpack.c.l.b16 %v2374
  %v2735 = vunpack.c.h.b16 %v2374
  %v2736 = vunpack.c.l.b16 %v2375
  %v2737 = vunpack.c.h.b16 %v2375
  %v2738 = vunpack.c.l.b16 %v2376
  %v2739 = vunpack.c.h.b16 %v2376
  %v2740 = vunpack.c.l.b16 %v2377
  %v2741 = vunpack.c.h.b16 %v2377
  %v2742 = vunpack.c.l.b16 %v2378
  %v2743 = vunpack.c.h.b16 %v2378
  %v2744 = vunpack.c.l.b16 %v2379
  %v2745 = vunpack.c.h.b16 %v2379
  %v2746 = vunpack.c.l.b16 %v2380
  %v2747 = vunpack.c.h.b16 %v2380
  %v2748 = vunpack.c.l.b16 %v2381
  %v2749 = vunpack.c.h.b16 %v2381
  %v2750 = vunpack.c.l.b16 %v2382
  %v2751 = vunpack.c.h.b16 %v2382
  %v2752 = vunpack.c.l.b16 %v2383
  %v2753 = vunpack.c.h.b16 %v2383
  %v2754 = vunpack.c.l.b16 %v2384
  %v2755 = vunpack.c.h.b16 %v2384
  %v2756 = vunpack.c.l.b16 %v2385
  %v2757 = vunpack.c.h.b16 %v2385
  %v2758 = vunpack.c.l.b16 %v2386
  %v2759 = vunpack.c.h.b16 %v2386
  %v2760 = vunpack.c.l.b16 %v2387
  %v2761 = vunpack.c.h.b16 %v2387
  %v2762 = vunpack.c.l.b16 %v2388
  %v2763 = vunpack.c.h.b16 %v2388
  %v2764 = vunpack.c.l.b16 %v2389
  %v2765 = vunpack.c.h.b16 %v2389
  %v2766 = vunpack.c.l.b16 %v2390
  %v2767 = vunpack.c.h.b16 %v2390
  %v2768 = vunpack.c.l.b16 %v2391
  %v2769 = vunpack.c.h.b16 %v2391
  %v2770 = vunpack.c.l.b16 %v2392
  %v2771 = vunpack.c.h.b16 %v2392
  %v2772 = vunpack.c.l.b16 %v2393
  %v2773 = vunpack.c.h.b16 %v2393
  %v2774 = vunpack.c.l.b16 %v2394
  %v2775 = vunpack.c.h.b16 %v2394
  %v2776 = vunpack.c.l.b16 %v2395
  %v2777 = vunpack.c.h.b16 %v2395
  %v2778 = vunpack.c.l.b16 %v2396
  %v2779 = vunpack.c.h.b16 %v2396
  %v2780 = vunpack.c.l.b16 %v2397
  %v2781 = vunpack.c.h.b16 %v2397
  %v2782 = vpack.c.b16 %v2534, %v2526
  %v2783 = vpack.c.b16 %v2535, %v2527
  %v2784 = vpack.c.b16 %v2536, %v2528
  %v2785 = vpack.c.b16 %v2537, %v2529
  %v2786 = vpack.c.b16 %v2538, %v2530
  %v2787 = vpack.c.b16 %v2539, %v2531
  %v2788 = vpack.c.b16 %v2540, %v2532
  %v2789 = vpack.c.b16 %v2541, %v2533
  %v2790 = vpack.c.b16 %v2550, %v2542
  %v2791 = vpack.c.b16 %v2551, %v2543
  %v2792 = vpack.c.b16 %v2552, %v2544
  %v2793 = vpack.c.b16 %v2553, %v2545
  %v2794 = vpack.c.b16 %v2554, %v2546
  %v2795 = vpack.c.b16 %v2555, %v2547
  %v2796 = vpack.c.b16 %v2556, %v2548
  %v2797 = vpack.c.b16 %v2557, %v2549
  %v2798 = vpack.c.b16 %v2566, %v2558
  %v2799 = vpack.c.b16 %v2567, %v2559
  %v2800 = vpack.c.b16 %v2568, %v2560
  %v2801 = vpack.c.b16 %v2569, %v2561
  %v2802 = vpack.c.b16 %v2570, %v2562
  %v2803 = vpack.c.b16 %v2571, %v2563
  %v2804 = vpack.c.b16 %v2572, %v2564
  %v2805 = vpack.c.b16 %v2573, %v2565
  %v2806 = vpack.c.b16 %v2582, %v2574
  %v2807 = vpack.c.b16 %v2583, %v2575
  %v2808 = vpack.c.b16 %v2584, %v2576
  %v2809 = vpack.c.b16 %v2585, %v2577
  %v2810 = vpack.c.b16 %v2586, %v2578
  %v2811 = vpack.c.b16 %v2587, %v2579
  %v2812 = vpack.c.b16 %v2588, %v2580
  %v2813 = vpack.c.b16 %v2589, %v2581
  %v2814 = vpack.c.b16 %v2598, %v2590
  %v2815 = vpack.c.b16 %v2599, %v2591
  %v2816 = vpack.c.b16 %v2600, %v2592
  %v2817 = vpack.c.b16 %v2601, %v2593
  %v2818 = vpack.c.b16 %v2602, %v2594
  %v2819 = vpack.c.b16 %v2603, %v2595
  %v2820 = vpack.c.b16 %v2604, %v2596
  %v2821 = vpack.c.b16 %v2605, %v2597
  %v2822 = vpack.c.b16 %v2614, %v2606
  %v2823 = vpack.c.b16 %v2615, %v2607
  %v2824 = vpack.c.b16 %v2616, %v2608
  %v2825 = vpack.c.b16 %v2617, %v2609
  %v2826 = vpack.c.b16 %v2618, %v2610
  %v2827 = vpack.c.b16 %v2619, %v2611
  %v2828 = vpack.c.b16 %v2620, %v2612
  %v2829 = vpack.c.b16 %v2621, %v2613
  %v2830 = vpack.c.b16 %v2630, %v2622
  %v2831 = vpack.c.b16 %v2631, %v2623
  %v2832 = vpack.c.b16 %v2632, %v2624
  %v2833 = vpack.c.b16 %v2633, %v2625
  %v2834 = vpack.c.b16 %v2634, %v2626
  %v2835 = vpack.c.b16 %v2635, %v2627
  %v2836 = vpack.c.b16 %v2636, %v2628
  %v2837 = vpack.c.b16 %v2637, %v2629
  %v2838 = vpack.c.b16 %v2646, %v2638
  %v2839 = vpack.c.b16 %v2647, %v2639
  %v2840 = vpack.c.b16 %v2648, %v2640
  %v2841 = vpack.c.b16 %v2649, %v2641
  %v2842 = vpack.c.b16 %v2650, %v2642
  %v2843 = vpack.c.b16 %v2651, %v2643
  %v2844 = vpack.c.b16 %v2652, %v2644
  %v2845 = vpack.c.b16 %v2653, %v2645
  %v2846 = vpack.c.b16 %v2662, %v2654
  %v2847 = vpack.c.b16 %v2663, %v2655
  %v2848 = vpack.c.b16 %v2664, %v2656
  %v2849 = vpack.c.b16 %v2665, %v2657
  %v2850 = vpack.c.b16 %v2666, %v2658
  %v2851 = vpack.c.b16 %v2667, %v2659
  %v2852 = vpack.c.b16 %v2668, %v2660
  %v2853 = vpack.c.b16 %v2669, %v2661
  %v2854 = vpack.c.b16 %v2678, %v2670
  %v2855 = vpack.c.b16 %v2679, %v2671
  %v2856 = vpack.c.b16 %v2680, %v2672
  %v2857 = vpack.c.b16 %v2681, %v2673
  %v2858 = vpack.c.b16 %v2682, %v2674
  %v2859 = vpack.c.b16 %v2683, %v2675
  %v2860 = vpack.c.b16 %v2684, %v2676
  %v2861 = vpack.c.b16 %v2685, %v2677
  %v2862 = vpack.c.b16 %v2694, %v2686
  %v2863 = vpack.c.b16 %v2695, %v2687
  %v2864 = vpack.c.b16 %v2696, %v2688
  %v2865 = vpack.c.b16 %v2697, %v2689
  %v2866 = vpack.c.b16 %v2698, %v2690
  %v2867 = vpack.c.b16 %v2699, %v2691
  %v2868 = vpack.c.b16 %v2700, %v2692
  %v2869 = vpack.c.b16 %v2701, %v2693
  %v2870 = vpack.c.b16 %v2710, %v2702
  %v2871 = vpack.c.b16 %v2711, %v2703
  %v2872 = vpack.c.b16 %v2712, %v2704
  %v2873 = vpack.c.b16 %v2713, %v2705
  %v2874 = vpack.c.b16 %v2714, %v2706
  %v2875 = vpack.c.b16 %v2715, %v2707
  %v2876 = vpack.c.b16 %v2716, %v2708
  %v2877 = vpack.c.b16 %v2717, %v2709
  %v2878 = vpack.c.b16 %v2726, %v2718
  %v2879 = vpack.c.b16 %v2727, %v2719
  %v2880 = vpack.c.b16 %v2728, %v2720
  %v2881 = vpack.c.b16 %v2729, %v2721
  %v2882 = vpack.c.b16 %v2730, %v2722
  %v2883 = vpack.c.b16 %v2731, %v2723
  %v2884 = vpack.c.b16 %v2732, %v2724
  %v2885 = vpack.c.b16 %v2733, %v2725
  %v2886 = vpack.c.b16 %v2742, %v2734
  %v2887 = vpack.c.b16 %v2743, %v2735
  %v2888 = vpack.c.b16 %v2744, %v2736
  %v2889 = vpack.c.b16 %v2745, %v2737
  %v2890 = vpack.c.b16 %v2746, %v2738
  %v2891 = vpack.c.b16 %v2747, %v2739
  %v2892 = vpack.c.b16 %v2748, %v2740
  %v2893 = vpack.c.b16 %v2749, %v2741
  %v2894 = vpack.c.b16 %v2758, %v2750
  %v2895 = vpack.c.b16 %v2759, %v2751
  %v2896 = vpack.c.b16 %v2760, %v2752
  %v2897 = vpack.c.b16 %v2761, %v2753
  %v2898 = vpack.c.b16 %v2762, %v2754
  %v2899 = vpack.c.b16 %v2763, %v2755
  %v2900 = vpack.c.b16 %v2764, %v2756
  %v2901 = vpack.c.b16 %v2765, %v2757
  %v2902 = vpack.c.b16 %v2774, %v2766
  %v2903 = vpack.c.b16 %v2775, %v2767
  %v2904 = vpack.c.b16 %v2776, %v2768
  %v2905 = vpack.c.b16 %v2777, %v2769
  %v2906 = vpack.c.b16 %v2778, %v2770
  %v2907 = vpack.c.b16 %v2779, %v2771
  %v2908 = vpack.c.b16 %v2780, %v2772
  %v2909 = vpack.c.b16 %v2781, %v2773
  %3038 = vmatprep.subr.bf16.mxu0 %v2783
  %3039 = vmatpush1.bf16.msra.mxu0 %v2782
  %3040 = vmatprep.subr.bf16.mxu0 %v2791
  %3041 = vmatpush1.bf16.msra.mxu0 %v2790
  %3042 = vmatprep.subr.bf16.mxu0 %v2799
  %3043 = vmatpush1.bf16.msra.mxu0 %v2798
  %3044 = vmatprep.subr.bf16.mxu0 %v2807
  %3045 = vmatpush1.bf16.msra.mxu0 %v2806
  %3046 = vmatprep.subr.bf16.mxu0 %v2815
  %3047 = vmatpush1.bf16.msra.mxu0 %v2814
  %3048 = vmatprep.subr.bf16.mxu0 %v2823
  %3049 = vmatpush1.bf16.msra.mxu0 %v2822
  %3050 = vmatprep.subr.bf16.mxu0 %v2831
  %3051 = vmatpush1.bf16.msra.mxu0 %v2830
  %3052 = vmatprep.subr.bf16.mxu0 %v2839
  %3053 = vmatpush1.bf16.msra.mxu0 %v2838
  %3054 = vmatprep.subr.bf16.mxu0 %v2847
  %3055 = vmatpush1.bf16.msra.mxu0 %v2846
  %3056 = vmatprep.subr.bf16.mxu0 %v2855
  %3057 = vmatpush1.bf16.msra.mxu0 %v2854
  %3058 = vmatprep.subr.bf16.mxu0 %v2863
  %3059 = vmatpush1.bf16.msra.mxu0 %v2862
  %3060 = vmatprep.subr.bf16.mxu0 %v2871
  %3061 = vmatpush1.bf16.msra.mxu0 %v2870
  %3062 = vmatprep.subr.bf16.mxu0 %v2879
  %3063 = vmatpush1.bf16.msra.mxu0 %v2878
  %3064 = vmatprep.subr.bf16.mxu0 %v2887
  %3065 = vmatpush1.bf16.msra.mxu0 %v2886
  %3066 = vmatprep.subr.bf16.mxu0 %v2895
  %3067 = vmatpush1.bf16.msra.mxu0 %v2894
  %3068 = vmatprep.subr.bf16.mxu0 %v2903
  %3069 = vmatpush1.bf16.msra.mxu0 %v2902
  %3070 = vmatprep.mubr.bf16.mxu0 0
  %3071 = vmatmul.mubr.bf16.gmra.mrb[0].mxu0 0
  %v3072 = vpop.f32.mrb[0].mxu0
  %v3073 = vadd.f32 0.0, %v3072
  %v3074 = vpop.f32.mrb[0].mxu0
  %v3075 = vadd.f32 0.0, %v3074
  %v3076 = vpop.f32.mrb[0].mxu0
  %v3077 = vpop.f32.mrb[0].mxu0
  %3078 = vdwg.mxu0
  %3079 = vmatprep.subr.bf16.mxu0 %v2785
  %3080 = vmatpush1.bf16.msra.mxu0 %v2784
  %3081 = vmatprep.subr.bf16.mxu0 %v2793
  %3082 = vmatpush1.bf16.msra.mxu0 %v2792
  %3083 = vmatprep.subr.bf16.mxu0 %v2801
  %3084 = vmatpush1.bf16.msra.mxu0 %v2800
  %3085 = vmatprep.subr.bf16.mxu0 %v2809
  %3086 = vmatpush1.bf16.msra.mxu0 %v2808
  %3087 = vmatprep.subr.bf16.mxu0 %v2817
  %3088 = vmatpush1.bf16.msra.mxu0 %v2816
  %3089 = vmatprep.subr.bf16.mxu0 %v2825
  %3090 = vmatpush1.bf16.msra.mxu0 %v2824
  %3091 = vmatprep.subr.bf16.mxu0 %v2833
  %3092 = vmatpush1.bf16.msra.mxu0 %v2832
  %3093 = vmatprep.subr.bf16.mxu0 %v2841
  %3094 = vmatpush1.bf16.msra.mxu0 %v2840
  %3095 = vmatprep.subr.bf16.mxu0 %v2849
  %3096 = vmatpush1.bf16.msra.mxu0 %v2848
  %3097 = vmatprep.subr.bf16.mxu0 %v2857
  %3098 = vmatpush1.bf16.msra.mxu0 %v2856
  %3099 = vmatprep.subr.bf16.mxu0 %v2865
  %3100 = vmatpush1.bf16.msra.mxu0 %v2864
  %3101 = vmatprep.subr.bf16.mxu0 %v2873
  %3102 = vmatpush1.bf16.msra.mxu0 %v2872
  %3103 = vmatprep.subr.bf16.mxu0 %v2881
  %3104 = vmatpush1.bf16.msra.mxu0 %v2880
  %3105 = vmatprep.subr.bf16.mxu0 %v2889
  %3106 = vmatpush1.bf16.msra.mxu0 %v2888
  %3107 = vmatprep.subr.bf16.mxu0 %v2897
  %3108 = vmatpush1.bf16.msra.mxu0 %v2896
  %3109 = vmatprep.subr.bf16.mxu0 %v2905
  %3110 = vmatpush1.bf16.msra.mxu0 %v2904
  %3111 = vmatprep.mubr.bf16.mxu0 0
  %3112 = vmatmul.mubr.bf16.gmra.mrb[0].mxu0 0
  %v3113 = vpop.f32.mrb[0].mxu0
  %v3114 = vadd.f32 0.0, %v3113
  %v3115 = vpop.f32.mrb[0].mxu0
  %v3116 = vadd.f32 0.0, %v3115
  %v3117 = vpop.f32.mrb[0].mxu0
  %v3118 = vpop.f32.mrb[0].mxu0
  %3119 = vdwg.mxu0
  %3120 = vmatprep.subr.bf16.mxu0 %v2787
  %3121 = vmatpush1.bf16.msra.mxu0 %v2786
  %3122 = vmatprep.subr.bf16.mxu0 %v2795
  %3123 = vmatpush1.bf16.msra.mxu0 %v2794
  %3124 = vmatprep.subr.bf16.mxu0 %v2803
  %3125 = vmatpush1.bf16.msra.mxu0 %v2802
  %3126 = vmatprep.subr.bf16.mxu0 %v2811
  %3127 = vmatpush1.bf16.msra.mxu0 %v2810
  %3128 = vmatprep.subr.bf16.mxu0 %v2819
  %3129 = vmatpush1.bf16.msra.mxu0 %v2818
  %3130 = vmatprep.subr.bf16.mxu0 %v2827
  %3131 = vmatpush1.bf16.msra.mxu0 %v2826
  %3132 = vmatprep.subr.bf16.mxu0 %v2835
  %3133 = vmatpush1.bf16.msra.mxu0 %v2834
  %3134 = vmatprep.subr.bf16.mxu0 %v2843
  %3135 = vmatpush1.bf16.msra.mxu0 %v2842
  %3136 = vmatprep.subr.bf16.mxu0 %v2851
  %3137 = vmatpush1.bf16.msra.mxu0 %v2850
  %3138 = vmatprep.subr.bf16.mxu0 %v2859
  %3139 = vmatpush1.bf16.msra.mxu0 %v2858
  %3140 = vmatprep.subr.bf16.mxu0 %v2867
  %3141 = vmatpush1.bf16.msra.mxu0 %v2866
  %3142 = vmatprep.subr.bf16.mxu0 %v2875
  %3143 = vmatpush1.bf16.msra.mxu0 %v2874
  %3144 = vmatprep.subr.bf16.mxu0 %v2883
  %3145 = vmatpush1.bf16.msra.mxu0 %v2882
  %3146 = vmatprep.subr.bf16.mxu0 %v2891
  %3147 = vmatpush1.bf16.msra.mxu0 %v2890
  %3148 = vmatprep.subr.bf16.mxu0 %v2899
  %3149 = vmatpush1.bf16.msra.mxu0 %v2898
  %3150 = vmatprep.subr.bf16.mxu0 %v2907
  %3151 = vmatpush1.bf16.msra.mxu0 %v2906
  %3152 = vmatprep.mubr.bf16.mxu0 0
  %3153 = vmatmul.mubr.bf16.gmra.mrb[0].mxu0 0
  %v3154 = vpop.f32.mrb[0].mxu0
  %v3155 = vadd.f32 0.0, %v3154
  %v3156 = vpop.f32.mrb[0].mxu0
  %v3157 = vadd.f32 0.0, %v3156
  %v3158 = vpop.f32.mrb[0].mxu0
  %v3159 = vpop.f32.mrb[0].mxu0
  %3160 = vdwg.mxu0
  %3161 = vmatprep.subr.bf16.mxu0 %v2789
  %3162 = vmatpush1.bf16.msra.mxu0 %v2788
  %3163 = vmatprep.subr.bf16.mxu0 %v2797
  %3164 = vmatpush1.bf16.msra.mxu0 %v2796
  %3165 = vmatprep.subr.bf16.mxu0 %v2805
  %3166 = vmatpush1.bf16.msra.mxu0 %v2804
  %3167 = vmatprep.subr.bf16.mxu0 %v2813
  %3168 = vmatpush1.bf16.msra.mxu0 %v2812
  %3169 = vmatprep.subr.bf16.mxu0 %v2821
  %3170 = vmatpush1.bf16.msra.mxu0 %v2820
  %3171 = vmatprep.subr.bf16.mxu0 %v2829
  %3172 = vmatpush1.bf16.msra.mxu0 %v2828
  %3173 = vmatprep.subr.bf16.mxu0 %v2837
  %3174 = vmatpush1.bf16.msra.mxu0 %v2836
  %3175 = vmatprep.subr.bf16.mxu0 %v2845
  %3176 = vmatpush1.bf16.msra.mxu0 %v2844
  %3177 = vmatprep.subr.bf16.mxu0 %v2853
  %3178 = vmatpush1.bf16.msra.mxu0 %v2852
  %3179 = vmatprep.subr.bf16.mxu0 %v2861
  %3180 = vmatpush1.bf16.msra.mxu0 %v2860
  %3181 = vmatprep.subr.bf16.mxu0 %v2869
  %3182 = vmatpush1.bf16.msra.mxu0 %v2868
  %3183 = vmatprep.subr.bf16.mxu0 %v2877
  %3184 = vmatpush1.bf16.msra.mxu0 %v2876
  %3185 = vmatprep.subr.bf16.mxu0 %v2885
  %3186 = vmatpush1.bf16.msra.mxu0 %v2884
  %3187 = vmatprep.subr.bf16.mxu0 %v2893
  %3188 = vmatpush1.bf16.msra.mxu0 %v2892
  %3189 = vmatprep.subr.bf16.mxu0 %v2901
  %3190 = vmatpush1.bf16.msra.mxu0 %v2900
  %3191 = vmatprep.subr.bf16.mxu0 %v2909
  %3192 = vmatpush1.bf16.msra.mxu0 %v2908
  %3193 = vmatprep.mubr.bf16.mxu0 0
  %3194 = vmatmul.mubr.bf16.gmra.mrb[0].mxu0 0
  %v3195 = vpop.f32.mrb[0].mxu0
  %v3196 = vadd.f32 0.0, %v3195
  %v3197 = vpop.f32.mrb[0].mxu0
  %v3198 = vadd.f32 0.0, %v3197
  %v3199 = vpop.f32.mrb[0].mxu0
  %v3200 = vpop.f32.mrb[0].mxu0
  %3201 = vdwg.mxu0
  %v3202 = vld [vmem:[#allocation2] sm:$0xff]
  %v3203 = vld [vmem:[#allocation2 + $0x8] sm:$0xff]
  %v3204 = vld [vmem:[#allocation2 + $0x10] sm:$0xff]
  %v3205 = vld [vmem:[#allocation2 + $0x18] sm:$0xff]
  %v3206 = vadd.f32 %v3202, %v3073
  %v3207 = vadd.f32 %v3203, %v3075
  %v3208 = vadd.f32 %v3204, %v3114
  %v3209 = vadd.f32 %v3205, %v3116
  %v3210 = vld [vmem:[#allocation2 + $0x1e0] sm:$0xff]
  %v3211 = vld [vmem:[#allocation2 + $0x1e8] sm:$0xff]
  %v3212 = vld [vmem:[#allocation2 + $0x1f0] sm:$0xff]
  %v3213 = vld [vmem:[#allocation2 + $0x1f8] sm:$0xff]
  %v3214 = vadd.f32 %v3210, %v3155
  %v3215 = vadd.f32 %v3211, %v3157
  %v3216 = vadd.f32 %v3212, %v3196
  %v3217 = vadd.f32 %v3213, %v3198
  %v3218 = vsub.f32 0.0, %v3206
  %v3219 = vmul.f32 %v3218, 1.442695
  %v3220 = vpow.pop %v3219
  %v3221 = vadd.f32 %v3220, 1.0
  %v3222 = vrcp.pop %v3221
  %v3223 = vmul.f32 1.0, %v3222
  %v3224 = vsub.f32 0.0, %v3207
  %v3225 = vmul.f32 %v3224, 1.442695
  %v3226 = vpow.pop %v3225
  %v3227 = vadd.f32 %v3226, 1.0
  %v3228 = vrcp.pop %v3227
  %v3229 = vmul.f32 1.0, %v3228
  %v3230 = vtanh.pop %v3208
  %v3231 = vsub.f32 0.0, %v3209
  %v3232 = vmul.f32 %v3231, 1.442695
  %v3233 = vpow.pop %v3232
  %v3234 = vadd.f32 %v3233, 1.0
  %v3235 = vrcp.pop %v3234
  %v3236 = vmul.f32 1.0, %v3235
  %v3237 = vmul.f32 %v3229, 0.0
  %v3238 = vmul.f32 %v3223, %v3230
  %v3239 = vadd.f32 %v3237, %v3238
  %v3240 = vtanh.pop %v3239
  %v3241 = vmul.f32 %v3236, %v3240
  %v3242 = vsub.f32 0.0, %v3214
  %v3243 = vmul.f32 %v3242, 1.442695
  %v3244 = vpow.pop %v3243
  %v3245 = vadd.f32 %v3244, 1.0
  %v3246 = vrcp.pop %v3245
  %v3247 = vmul.f32 1.0, %v3246
  %v3248 = vsub.f32 0.0, %v3215
  %v3249 = vmul.f32 %v3248, 1.442695
  %v3250 = vpow.pop %v3249
  %v3251 = vadd.f32 %v3250, 1.0
  %v3252 = vrcp.pop %v3251
  %v3253 = vmul.f32 1.0, %v3252
  %v3254 = vtanh.pop %v3216
  %v3255 = vsub.f32 0.0, %v3217
  %v3256 = vmul.f32 %v3255, 1.442695
  %v3257 = vpow.pop %v3256
  %v3258 = vadd.f32 %v3257, 1.0
  %v3259 = vrcp.pop %v3258
  %v3260 = vmul.f32 1.0, %v3259
  %v3261 = vmul.f32 %v3253, 0.0
  %v3262 = vmul.f32 %v3247, %v3254
  %v3263 = vadd.f32 %v3261, %v3262
  %v3264 = vtanh.pop %v3263
  %v3265 = vmul.f32 %v3260, %v3264
  %v3266 = vpack.c.bf16 %v3241, %v3241
  %v3267 = vpack.c.bf16 %v3265, %v3265
  %3268 = vmatprep.subr.bf16.mxu0 %v2783
  %3269 = vmatpush1.bf16.msra.mxu0 %v2782
  %3270 = vmatprep.subr.bf16.mxu0 %v2791
  %3271 = vmatpush1.bf16.msra.mxu0 %v2790
  %3272 = vmatprep.subr.bf16.mxu0 %v2799
  %3273 = vmatpush1.bf16.msra.mxu0 %v2798
  %3274 = vmatprep.subr.bf16.mxu0 %v2807
  %3275 = vmatpush1.bf16.msra.mxu0 %v2806
  %3276 = vmatprep.subr.bf16.mxu0 %v2815
  %3277 = vmatpush1.bf16.msra.mxu0 %v2814
  %3278 = vmatprep.subr.bf16.mxu0 %v2823
  %3279 = vmatpush1.bf16.msra.mxu0 %v2822
  %3280 = vmatprep.subr.bf16.mxu0 %v2831
  %3281 = vmatpush1.bf16.msra.mxu0 %v2830
  %3282 = vmatprep.subr.bf16.mxu0 %v2839
  %3283 = vmatpush1.bf16.msra.mxu0 %v2838
  %3284 = vmatprep.subr.bf16.mxu0 %v2847
  %3285 = vmatpush1.bf16.msra.mxu0 %v2846
  %3286 = vmatprep.subr.bf16.mxu0 %v2855
  %3287 = vmatpush1.bf16.msra.mxu0 %v2854
  %3288 = vmatprep.subr.bf16.mxu0 %v2863
  %3289 = vmatpush1.bf16.msra.mxu0 %v2862
  %3290 = vmatprep.subr.bf16.mxu0 %v2871
  %3291 = vmatpush1.bf16.msra.mxu0 %v2870
  %3292 = vmatprep.subr.bf16.mxu0 %v2879
  %3293 = vmatpush1.bf16.msra.mxu0 %v2878
  %3294 = vmatprep.subr.bf16.mxu0 %v2887
  %3295 = vmatpush1.bf16.msra.mxu0 %v2886
  %3296 = vmatprep.subr.bf16.mxu0 %v2895
  %3297 = vmatpush1.bf16.msra.mxu0 %v2894
  %3298 = vmatprep.subr.bf16.mxu0 %v2903
  %3299 = vmatpush1.bf16.msra.mxu0 %v2902
  %3300 = vmatprep.mubr.bf16.mxu0 %v3267
  %3301 = vmatmul.mubr.bf16.gmra.mrb[0].mxu0 %v3266
  %v3302 = vpop.f32.mrb[0].mxu0
  %v3303 = vadd.f32 0.0, %v3302
  %v3304 = vpop.f32.mrb[0].mxu0
  %v3305 = vadd.f32 0.0, %v3304
  %v3306 = vpop.f32.mrb[0].mxu0
  %v3307 = vpop.f32.mrb[0].mxu0
  %3308 = vdwg.mxu0
  %3309 = vmatprep.subr.bf16.mxu0 %v2785
  %3310 = vmatpush1.bf16.msra.mxu0 %v2784
  %3311 = vmatprep.subr.bf16.mxu0 %v2793
  %3312 = vmatpush1.bf16.msra.mxu0 %v2792
  %3313 = vmatprep.subr.bf16.mxu0 %v2801
  %3314 = vmatpush1.bf16.msra.mxu0 %v2800
  %3315 = vmatprep.subr.bf16.mxu0 %v2809
  %3316 = vmatpush1.bf16.msra.mxu0 %v2808
  %3317 = vmatprep.subr.bf16.mxu0 %v2817
  %3318 = vmatpush1.bf16.msra.mxu0 %v2816
  %3319 = vmatprep.subr.bf16.mxu0 %v2825
  %3320 = vmatpush1.bf16.msra.mxu0 %v2824
  %3321 = vmatprep.subr.bf16.mxu0 %v2833
  %3322 = vmatpush1.bf16.msra.mxu0 %v2832
  %3323 = vmatprep.subr.bf16.mxu0 %v2841
  %3324 = vmatpush1.bf16.msra.mxu0 %v2840
  %3325 = vmatprep.subr.bf16.mxu0 %v2849
  %3326 = vmatpush1.bf16.msra.mxu0 %v2848
  %3327 = vmatprep.subr.bf16.mxu0 %v2857
  %3328 = vmatpush1.bf16.msra.mxu0 %v2856
  %3329 = vmatprep.subr.bf16.mxu0 %v2865
  %3330 = vmatpush1.bf16.msra.mxu0 %v2864
  %3331 = vmatprep.subr.bf16.mxu0 %v2873
  %3332 = vmatpush1.bf16.msra.mxu0 %v2872
  %3333 = vmatprep.subr.bf16.mxu0 %v2881
  %3334 = vmatpush1.bf16.msra.mxu0 %v2880
  %3335 = vmatprep.subr.bf16.mxu0 %v2889
  %3336 = vmatpush1.bf16.msra.mxu0 %v2888
  %3337 = vmatprep.subr.bf16.mxu0 %v2897
  %3338 = vmatpush1.bf16.msra.mxu0 %v2896
  %3339 = vmatprep.subr.bf16.mxu0 %v2905
  %3340 = vmatpush1.bf16.msra.mxu0 %v2904
  %3341 = vmatprep.mubr.bf16.mxu0 %v3267
  %3342 = vmatmul.mubr.bf16.gmra.mrb[0].mxu0 %v3266
  %v3343 = vpop.f32.mrb[0].mxu0
  %v3344 = vadd.f32 0.0, %v3343
  %v3345 = vpop.f32.mrb[0].mxu0
  %v3346 = vadd.f32 0.0, %v3345
  %v3347 = vpop.f32.mrb[0].mxu0
  %v3348 = vpop.f32.mrb[0].mxu0
  %3349 = vdwg.mxu0
  %3350 = vmatprep.subr.bf16.mxu0 %v2787
  %3351 = vmatpush1.bf16.msra.mxu0 %v2786
  %3352 = vmatprep.subr.bf16.mxu0 %v2795
  %3353 = vmatpush1.bf16.msra.mxu0 %v2794
  %3354 = vmatprep.subr.bf16.mxu0 %v2803
  %3355 = vmatpush1.bf16.msra.mxu0 %v2802
  %3356 = vmatprep.subr.bf16.mxu0 %v2811
  %3357 = vmatpush1.bf16.msra.mxu0 %v2810
  %3358 = vmatprep.subr.bf16.mxu0 %v2819
  %3359 = vmatpush1.bf16.msra.mxu0 %v2818
  %3360 = vmatprep.subr.bf16.mxu0 %v2827
  %3361 = vmatpush1.bf16.msra.mxu0 %v2826
  %3362 = vmatprep.subr.bf16.mxu0 %v2835
  %3363 = vmatpush1.bf16.msra.mxu0 %v2834
  %3364 = vmatprep.subr.bf16.mxu0 %v2843
  %3365 = vmatpush1.bf16.msra.mxu0 %v2842
  %3366 = vmatprep.subr.bf16.mxu0 %v2851
  %3367 = vmatpush1.bf16.msra.mxu0 %v2850
  %3368 = vmatprep.subr.bf16.mxu0 %v2859
  %3369 = vmatpush1.bf16.msra.mxu0 %v2858
  %3370 = vmatprep.subr.bf16.mxu0 %v2867
  %3371 = vmatpush1.bf16.msra.mxu0 %v2866
  %3372 = vmatprep.subr.bf16.mxu0 %v2875
  %3373 = vmatpush1.bf16.msra.mxu0 %v2874
  %3374 = vmatprep.subr.bf16.mxu0 %v2883
  %3375 = vmatpush1.bf16.msra.mxu0 %v2882
  %3376 = vmatprep.subr.bf16.mxu0 %v2891
  %3377 = vmatpush1.bf16.msra.mxu0 %v2890
  %3378 = vmatprep.subr.bf16.mxu0 %v2899
  %3379 = vmatpush1.bf16.msra.mxu0 %v2898
  %3380 = vmatprep.subr.bf16.mxu0 %v2907
  %3381 = vmatpush1.bf16.msra.mxu0 %v2906
  %3382 = vmatprep.mubr.bf16.mxu0 %v3267
  %3383 = vmatmul.mubr.bf16.gmra.mrb[0].mxu0 %v3266
  %v3384 = vpop.f32.mrb[0].mxu0
  %v3385 = vadd.f32 0.0, %v3384
  %v3386 = vpop.f32.mrb[0].mxu0
  %v3387 = vadd.f32 0.0, %v3386
  %v3388 = vpop.f32.mrb[0].mxu0
  %v3389 = vpop.f32.mrb[0].mxu0
  %3390 = vdwg.mxu0
  %3391 = vmatprep.subr.bf16.mxu0 %v2789
  %3392 = vmatpush1.bf16.msra.mxu0 %v2788
  %3393 = vmatprep.subr.bf16.mxu0 %v2797
  %3394 = vmatpush1.bf16.msra.mxu0 %v2796
  %3395 = vmatprep.subr.bf16.mxu0 %v2805
  %3396 = vmatpush1.bf16.msra.mxu0 %v2804
  %3397 = vmatprep.subr.bf16.mxu0 %v2813
  %3398 = vmatpush1.bf16.msra.mxu0 %v2812
  %3399 = vmatprep.subr.bf16.mxu0 %v2821
  %3400 = vmatpush1.bf16.msra.mxu0 %v2820
  %3401 = vmatprep.subr.bf16.mxu0 %v2829
  %3402 = vmatpush1.bf16.msra.mxu0 %v2828
  %3403 = vmatprep.subr.bf16.mxu0 %v2837
  %3404 = vmatpush1.bf16.msra.mxu0 %v2836
  %3405 = vmatprep.subr.bf16.mxu0 %v2845
  %3406 = vmatpush1.bf16.msra.mxu0 %v2844
  %3407 = vmatprep.subr.bf16.mxu0 %v2853
  %3408 = vmatpush1.bf16.msra.mxu0 %v2852
  %3409 = vmatprep.subr.bf16.mxu0 %v2861
  %3410 = vmatpush1.bf16.msra.mxu0 %v2860
  %3411 = vmatprep.subr.bf16.mxu0 %v2869
  %3412 = vmatpush1.bf16.msra.mxu0 %v2868
  %3413 = vmatprep.subr.bf16.mxu0 %v2877
  %3414 = vmatpush1.bf16.msra.mxu0 %v2876
  %3415 = vmatprep.subr.bf16.mxu0 %v2885
  %3416 = vmatpush1.bf16.msra.mxu0 %v2884
  %3417 = vmatprep.subr.bf16.mxu0 %v2893
  %3418 = vmatpush1.bf16.msra.mxu0 %v2892
  %3419 = vmatprep.subr.bf16.mxu0 %v2901
  %3420 = vmatpush1.bf16.msra.mxu0 %v2900
  %3421 = vmatprep.subr.bf16.mxu0 %v2909
  %3422 = vmatpush1.bf16.msra.mxu0 %v2908
  %3423 = vmatprep.mubr.bf16.mxu0 %v3267
  %3424 = vmatmul.mubr.bf16.gmra.mrb[0].mxu0 %v3266
  %v3425 = vpop.f32.mrb[0].mxu0
  %v3426 = vadd.f32 0.0, %v3425
  %v3427 = vpop.f32.mrb[0].mxu0
  %v3428 = vadd.f32 0.0, %v3427
  %v3429 = vpop.f32.mrb[0].mxu0
  %v3430 = vpop.f32.mrb[0].mxu0
  %3431 = vdwg.mxu0
  %v3432 = vld [vmem:[#allocation2 + $0x40] sm:$0xff]
  %v3433 = vld [vmem:[#allocation2 + $0x48] sm:$0xff]
  %v3434 = vld [vmem:[#allocation2 + $0x50] sm:$0xff]
  %v3435 = vld [vmem:[#allocation2 + $0x58] sm:$0xff]
  %v3436 = vadd.f32 %v3432, %v3303
  %v3437 = vadd.f32 %v3433, %v3305
  %v3438 = vadd.f32 %v3434, %v3344
  %v3439 = vadd.f32 %v3435, %v3346
  %v3440 = vld [vmem:[#allocation2 + $0x1a0] sm:$0xff]
  %v3441 = vld [vmem:[#allocation2 + $0x1a8] sm:$0xff]
  %v3442 = vld [vmem:[#allocation2 + $0x1b0] sm:$0xff]
  %v3443 = vld [vmem:[#allocation2 + $0x1b8] sm:$0xff]
  %v3444 = vadd.f32 %v3440, %v3385
  %v3445 = vadd.f32 %v3441, %v3387
  %v3446 = vadd.f32 %v3442, %v3426
  %v3447 = vadd.f32 %v3443, %v3428
  %v3448 = vsub.f32 0.0, %v3436
  %v3449 = vmul.f32 %v3448, 1.442695
  %v3450 = vpow.pop %v3449
  %v3451 = vadd.f32 %v3450, 1.0
  %v3452 = vrcp.pop %v3451
  %v3453 = vmul.f32 1.0, %v3452
  %v3454 = vsub.f32 0.0, %v3437
  %v3455 = vmul.f32 %v3454, 1.442695
  %v3456 = vpow.pop %v3455
  %v3457 = vadd.f32 %v3456, 1.0
  %v3458 = vrcp.pop %v3457
  %v3459 = vmul.f32 1.0, %v3458
  %v3460 = vtanh.pop %v3438
  %v3461 = vsub.f32 0.0, %v3439
  %v3462 = vmul.f32 %v3461, 1.442695
  %v3463 = vpow.pop %v3462
  %v3464 = vadd.f32 %v3463, 1.0
  %v3465 = vrcp.pop %v3464
  %v3466 = vmul.f32 1.0, %v3465
  %v3467 = vmul.f32 %v3459, %v3239
  %v3468 = vmul.f32 %v3453, %v3460
  %v3469 = vadd.f32 %v3467, %v3468
  %v3470 = vtanh.pop %v3469
  %v3471 = vmul.f32 %v3466, %v3470
  %v3472 = vsub.f32 0.0, %v3444
  %v3473 = vmul.f32 %v3472, 1.442695
  %v3474 = vpow.pop %v3473
  %v3475 = vadd.f32 %v3474, 1.0
  %v3476 = vrcp.pop %v3475
  %v3477 = vmul.f32 1.0, %v3476
  %v3478 = vsub.f32 0.0, %v3445
  %v3479 = vmul.f32 %v3478, 1.442695
  %v3480 = vpow.pop %v3479
  %v3481 = vadd.f32 %v3480, 1.0
  %v3482 = vrcp.pop %v3481
  %v3483 = vmul.f32 1.0, %v3482
  %v3484 = vtanh.pop %v3446
  %v3485 = vsub.f32 0.0, %v3447
  %v3486 = vmul.f32 %v3485, 1.442695
  %v3487 = vpow.pop %v3486
  %v3488 = vadd.f32 %v3487, 1.0
  %v3489 = vrcp.pop %v3488
  %v3490 = vmul.f32 1.0, %v3489
  %v3491 = vmul.f32 %v3483, %v3263
  %v3492 = vmul.f32 %v3477, %v3484
  %v3493 = vadd.f32 %v3491, %v3492
  %v3494 = vtanh.pop %v3493
  %v3495 = vmul.f32 %v3490, %v3494
  %v3496 = vpack.c.bf16 %v3471, %v3471
  %v3497 = vpack.c.bf16 %v3495, %v3495
  %3498 = vmatprep.subr.bf16.mxu0 %v2783
  %3499 = vmatpush1.bf16.msra.mxu0 %v2782
  %3500 = vmatprep.subr.bf16.mxu0 %v2791
  %3501 = vmatpush1.bf16.msra.mxu0 %v2790
  %3502 = vmatprep.subr.bf16.mxu0 %v2799
  %3503 = vmatpush1.bf16.msra.mxu0 %v2798
  %3504 = vmatprep.subr.bf16.mxu0 %v2807
  %3505 = vmatpush1.bf16.msra.mxu0 %v2806
  %3506 = vmatprep.subr.bf16.mxu0 %v2815
  %3507 = vmatpush1.bf16.msra.mxu0 %v2814
  %3508 = vmatprep.subr.bf16.mxu0 %v2823
  %3509 = vmatpush1.bf16.msra.mxu0 %v2822
  %3510 = vmatprep.subr.bf16.mxu0 %v2831
  %3511 = vmatpush1.bf16.msra.mxu0 %v2830
  %3512 = vmatprep.subr.bf16.mxu0 %v2839
  %3513 = vmatpush1.bf16.msra.mxu0 %v2838
  %3514 = vmatprep.subr.bf16.mxu0 %v2847
  %3515 = vmatpush1.bf16.msra.mxu0 %v2846
  %3516 = vmatprep.subr.bf16.mxu0 %v2855
  %3517 = vmatpush1.bf16.msra.mxu0 %v2854
  %3518 = vmatprep.subr.bf16.mxu0 %v2863
  %3519 = vmatpush1.bf16.msra.mxu0 %v2862
  %3520 = vmatprep.subr.bf16.mxu0 %v2871
  %3521 = vmatpush1.bf16.msra.mxu0 %v2870
  %3522 = vmatprep.subr.bf16.mxu0 %v2879
  %3523 = vmatpush1.bf16.msra.mxu0 %v2878
  %3524 = vmatprep.subr.bf16.mxu0 %v2887
  %3525 = vmatpush1.bf16.msra.mxu0 %v2886
  %3526 = vmatprep.subr.bf16.mxu0 %v2895
  %3527 = vmatpush1.bf16.msra.mxu0 %v2894
  %3528 = vmatprep.subr.bf16.mxu0 %v2903
  %3529 = vmatpush1.bf16.msra.mxu0 %v2902
  %3530 = vmatprep.mubr.bf16.mxu0 %v3497
  %3531 = vmatmul.mubr.bf16.gmra.mrb[0].mxu0 %v3496
  %v3532 = vpop.f32.mrb[0].mxu0
  %v3533 = vadd.f32 0.0, %v3532
  %v3534 = vpop.f32.mrb[0].mxu0
  %v3535 = vadd.f32 0.0, %v3534
  %v3536 = vpop.f32.mrb[0].mxu0
  %v3537 = vpop.f32.mrb[0].mxu0
  %3538 = vdwg.mxu0
  %3539 = vmatprep.subr.bf16.mxu0 %v2785
  %3540 = vmatpush1.bf16.msra.mxu0 %v2784
  %3541 = vmatprep.subr.bf16.mxu0 %v2793
  %3542 = vmatpush1.bf16.msra.mxu0 %v2792
  %3543 = vmatprep.subr.bf16.mxu0 %v2801
  %3544 = vmatpush1.bf16.msra.mxu0 %v2800
  %3545 = vmatprep.subr.bf16.mxu0 %v2809
  %3546 = vmatpush1.bf16.msra.mxu0 %v2808
  %3547 = vmatprep.subr.bf16.mxu0 %v2817
  %3548 = vmatpush1.bf16.msra.mxu0 %v2816
  %3549 = vmatprep.subr.bf16.mxu0 %v2825
  %3550 = vmatpush1.bf16.msra.mxu0 %v2824
  %3551 = vmatprep.subr.bf16.mxu0 %v2833
  %3552 = vmatpush1.bf16.msra.mxu0 %v2832
  %3553 = vmatprep.subr.bf16.mxu0 %v2841
  %3554 = vmatpush1.bf16.msra.mxu0 %v2840
  %3555 = vmatprep.subr.bf16.mxu0 %v2849
  %3556 = vmatpush1.bf16.msra.mxu0 %v2848
  %3557 = vmatprep.subr.bf16.mxu0 %v2857
  %3558 = vmatpush1.bf16.msra.mxu0 %v2856
  %3559 = vmatprep.subr.bf16.mxu0 %v2865
  %3560 = vmatpush1.bf16.msra.mxu0 %v2864
  %3561 = vmatprep.subr.bf16.mxu0 %v2873
  %3562 = vmatpush1.bf16.msra.mxu0 %v2872
  %3563 = vmatprep.subr.bf16.mxu0 %v2881
  %3564 = vmatpush1.bf16.msra.mxu0 %v2880
  %3565 = vmatprep.subr.bf16.mxu0 %v2889
  %3566 = vmatpush1.bf16.msra.mxu0 %v2888
  %3567 = vmatprep.subr.bf16.mxu0 %v2897
  %3568 = vmatpush1.bf16.msra.mxu0 %v2896
  %3569 = vmatprep.subr.bf16.mxu0 %v2905
  %3570 = vmatpush1.bf16.msra.mxu0 %v2904
  %3571 = vmatprep.mubr.bf16.mxu0 %v3497
  %3572 = vmatmul.mubr.bf16.gmra.mrb[0].mxu0 %v3496
  %v3573 = vpop.f32.mrb[0].mxu0
  %v3574 = vadd.f32 0.0, %v3573
  %v3575 = vpop.f32.mrb[0].mxu0
  %v3576 = vadd.f32 0.0, %v3575
  %v3577 = vpop.f32.mrb[0].mxu0
  %v3578 = vpop.f32.mrb[0].mxu0
  %3579 = vdwg.mxu0
  %3580 = vmatprep.subr.bf16.mxu0 %v2787
  %3581 = vmatpush1.bf16.msra.mxu0 %v2786
  %3582 = vmatprep.subr.bf16.mxu0 %v2795
  %3583 = vmatpush1.bf16.msra.mxu0 %v2794
  %3584 = vmatprep.subr.bf16.mxu0 %v2803
  %3585 = vmatpush1.bf16.msra.mxu0 %v2802
  %3586 = vmatprep.subr.bf16.mxu0 %v2811
  %3587 = vmatpush1.bf16.msra.mxu0 %v2810
  %3588 = vmatprep.subr.bf16.mxu0 %v2819
  %3589 = vmatpush1.bf16.msra.mxu0 %v2818
  %3590 = vmatprep.subr.bf16.mxu0 %v2827
  %3591 = vmatpush1.bf16.msra.mxu0 %v2826
  %3592 = vmatprep.subr.bf16.mxu0 %v2835
  %3593 = vmatpush1.bf16.msra.mxu0 %v2834
  %3594 = vmatprep.subr.bf16.mxu0 %v2843
  %3595 = vmatpush1.bf16.msra.mxu0 %v2842
  %3596 = vmatprep.subr.bf16.mxu0 %v2851
  %3597 = vmatpush1.bf16.msra.mxu0 %v2850
  %3598 = vmatprep.subr.bf16.mxu0 %v2859
  %3599 = vmatpush1.bf16.msra.mxu0 %v2858
  %3600 = vmatprep.subr.bf16.mxu0 %v2867
  %3601 = vmatpush1.bf16.msra.mxu0 %v2866
  %3602 = vmatprep.subr.bf16.mxu0 %v2875
  %3603 = vmatpush1.bf16.msra.mxu0 %v2874
  %3604 = vmatprep.subr.bf16.mxu0 %v2883
  %3605 = vmatpush1.bf16.msra.mxu0 %v2882
  %3606 = vmatprep.subr.bf16.mxu0 %v2891
  %3607 = vmatpush1.bf16.msra.mxu0 %v2890
  %3608 = vmatprep.subr.bf16.mxu0 %v2899
  %3609 = vmatpush1.bf16.msra.mxu0 %v2898
  %3610 = vmatprep.subr.bf16.mxu0 %v2907
  %3611 = vmatpush1.bf16.msra.mxu0 %v2906
  %3612 = vmatprep.mubr.bf16.mxu0 %v3497
  %3613 = vmatmul.mubr.bf16.gmra.mrb[0].mxu0 %v3496
  %v3614 = vpop.f32.mrb[0].mxu0
  %v3615 = vadd.f32 0.0, %v3614
  %v3616 = vpop.f32.mrb[0].mxu0
  %v3617 = vadd.f32 0.0, %v3616
  %v3618 = vpop.f32.mrb[0].mxu0
  %v3619 = vpop.f32.mrb[0].mxu0
  %3620 = vdwg.mxu0
  %3621 = vmatprep.subr.bf16.mxu0 %v2789
  %3622 = vmatpush1.bf16.msra.mxu0 %v2788
  %3623 = vmatprep.subr.bf16.mxu0 %v2797
  %3624 = vmatpush1.bf16.msra.mxu0 %v2796
  %3625 = vmatprep.subr.bf16.mxu0 %v2805
  %3626 = vmatpush1.bf16.msra.mxu0 %v2804
  %3627 = vmatprep.subr.bf16.mxu0 %v2813
  %3628 = vmatpush1.bf16.msra.mxu0 %v2812
  %3629 = vmatprep.subr.bf16.mxu0 %v2821
  %3630 = vmatpush1.bf16.msra.mxu0 %v2820
  %3631 = vmatprep.subr.bf16.mxu0 %v2829
  %3632 = vmatpush1.bf16.msra.mxu0 %v2828
  %3633 = vmatprep.subr.bf16.mxu0 %v2837
  %3634 = vmatpush1.bf16.msra.mxu0 %v2836
  %3635 = vmatprep.subr.bf16.mxu0 %v2845
  %3636 = vmatpush1.bf16.msra.mxu0 %v2844
  %3637 = vmatprep.subr.bf16.mxu0 %v2853
  %3638 = vmatpush1.bf16.msra.mxu0 %v2852
  %3639 = vmatprep.subr.bf16.mxu0 %v2861
  %3640 = vmatpush1.bf16.msra.mxu0 %v2860
  %3641 = vmatprep.subr.bf16.mxu0 %v2869
  %3642 = vmatpush1.bf16.msra.mxu0 %v2868
  %3643 = vmatprep.subr.bf16.mxu0 %v2877
  %3644 = vmatpush1.bf16.msra.mxu0 %v2876
  %3645 = vmatprep.subr.bf16.mxu0 %v2885
  %3646 = vmatpush1.bf16.msra.mxu0 %v2884
  %3647 = vmatprep.subr.bf16.mxu0 %v2893
  %3648 = vmatpush1.bf16.msra.mxu0 %v2892
  %3649 = vmatprep.subr.bf16.mxu0 %v2901
  %3650 = vmatpush1.bf16.msra.mxu0 %v2900
  %3651 = vmatprep.subr.bf16.mxu0 %v2909
  %3652 = vmatpush1.bf16.msra.mxu0 %v2908
  %3653 = vmatprep.mubr.bf16.mxu0 %v3497
  %3654 = vmatmul.mubr.bf16.gmra.mrb[0].mxu0 %v3496
  %v3655 = vpop.f32.mrb[0].mxu0
  %v3656 = vadd.f32 0.0, %v3655
  %v3657 = vpop.f32.mrb[0].mxu0
  %v3658 = vadd.f32 0.0, %v3657
  %v3659 = vpop.f32.mrb[0].mxu0
  %v3660 = vpop.f32.mrb[0].mxu0
  %3661 = vdwg.mxu0
  %v3662 = vld [vmem:[#allocation2 + $0x80] sm:$0xff]
  %v3663 = vld [vmem:[#allocation2 + $0x88] sm:$0xff]
  %v3664 = vld [vmem:[#allocation2 + $0x90] sm:$0xff]
  %v3665 = vld [vmem:[#allocation2 + $0x98] sm:$0xff]
  %v3666 = vadd.f32 %v3662, %v3533
  %v3667 = vadd.f32 %v3663, %v3535
  %v3668 = vadd.f32 %v3664, %v3574
  %v3669 = vadd.f32 %v3665, %v3576
  %v3670 = vld [vmem:[#allocation2 + $0x160] sm:$0xff]
  %v3671 = vld [vmem:[#allocation2 + $0x168] sm:$0xff]
  %v3672 = vld [vmem:[#allocation2 + $0x170] sm:$0xff]
  %v3673 = vld [vmem:[#allocation2 + $0x178] sm:$0xff]
  %v3674 = vadd.f32 %v3670, %v3615
  %v3675 = vadd.f32 %v3671, %v3617
  %v3676 = vadd.f32 %v3672, %v3656
  %v3677 = vadd.f32 %v3673, %v3658
  %v3678 = vsub.f32 0.0, %v3666
  %v3679 = vmul.f32 %v3678, 1.442695
  %v3680 = vpow.pop %v3679
  %v3681 = vadd.f32 %v3680, 1.0
  %v3682 = vrcp.pop %v3681
  %v3683 = vmul.f32 1.0, %v3682
  %v3684 = vsub.f32 0.0, %v3667
  %v3685 = vmul.f32 %v3684, 1.442695
  %v3686 = vpow.pop %v3685
  %v3687 = vadd.f32 %v3686, 1.0
  %v3688 = vrcp.pop %v3687
  %v3689 = vmul.f32 1.0, %v3688
  %v3690 = vtanh.pop %v3668
  %v3691 = vsub.f32 0.0, %v3669
  %v3692 = vmul.f32 %v3691, 1.442695
  %v3693 = vpow.pop %v3692
  %v3694 = vadd.f32 %v3693, 1.0
  %v3695 = vrcp.pop %v3694
  %v3696 = vmul.f32 1.0, %v3695
  %v3697 = vmul.f32 %v3689, %v3469
  %v3698 = vmul.f32 %v3683, %v3690
  %v3699 = vadd.f32 %v3697, %v3698
  %v3700 = vtanh.pop %v3699
  %v3701 = vmul.f32 %v3696, %v3700
  %v3702 = vsub.f32 0.0, %v3674
  %v3703 = vmul.f32 %v3702, 1.442695
  %v3704 = vpow.pop %v3703
  %v3705 = vadd.f32 %v3704, 1.0
  %v3706 = vrcp.pop %v3705
  %v3707 = vmul.f32 1.0, %v3706
  %v3708 = vsub.f32 0.0, %v3675
  %v3709 = vmul.f32 %v3708, 1.442695
  %v3710 = vpow.pop %v3709
  %v3711 = vadd.f32 %v3710, 1.0
  %v3712 = vrcp.pop %v3711
  %v3713 = vmul.f32 1.0, %v3712
  %v3714 = vtanh.pop %v3676
  %v3715 = vsub.f32 0.0, %v3677
  %v3716 = vmul.f32 %v3715, 1.442695
  %v3717 = vpow.pop %v3716
  %v3718 = vadd.f32 %v3717, 1.0
  %v3719 = vrcp.pop %v3718
  %v3720 = vmul.f32 1.0, %v3719
  %v3721 = vmul.f32 %v3713, %v3493
  %v3722 = vmul.f32 %v3707, %v3714
  %v3723 = vadd.f32 %v3721, %v3722
  %v3724 = vtanh.pop %v3723
  %v3725 = vmul.f32 %v3720, %v3724
  %v3726 = vpack.c.bf16 %v3701, %v3701
  %v3727 = vpack.c.bf16 %v3725, %v3725
  %3728 = vmatprep.subr.bf16.mxu0 %v2783
  %3729 = vmatpush1.bf16.msra.mxu0 %v2782
  %3730 = vmatprep.subr.bf16.mxu0 %v2791
  %3731 = vmatpush1.bf16.msra.mxu0 %v2790
  %3732 = vmatprep.subr.bf16.mxu0 %v2799
  %3733 = vmatpush1.bf16.msra.mxu0 %v2798
  %3734 = vmatprep.subr.bf16.mxu0 %v2807
  %3735 = vmatpush1.bf16.msra.mxu0 %v2806
  %3736 = vmatprep.subr.bf16.mxu0 %v2815
  %3737 = vmatpush1.bf16.msra.mxu0 %v2814
  %3738 = vmatprep.subr.bf16.mxu0 %v2823
  %3739 = vmatpush1.bf16.msra.mxu0 %v2822
  %3740 = vmatprep.subr.bf16.mxu0 %v2831
  %3741 = vmatpush1.bf16.msra.mxu0 %v2830
  %3742 = vmatprep.subr.bf16.mxu0 %v2839
  %3743 = vmatpush1.bf16.msra.mxu0 %v2838
  %3744 = vmatprep.subr.bf16.mxu0 %v2847
  %3745 = vmatpush1.bf16.msra.mxu0 %v2846
  %3746 = vmatprep.subr.bf16.mxu0 %v2855
  %3747 = vmatpush1.bf16.msra.mxu0 %v2854
  %3748 = vmatprep.subr.bf16.mxu0 %v2863
  %3749 = vmatpush1.bf16.msra.mxu0 %v2862
  %3750 = vmatprep.subr.bf16.mxu0 %v2871
  %3751 = vmatpush1.bf16.msra.mxu0 %v2870
  %3752 = vmatprep.subr.bf16.mxu0 %v2879
  %3753 = vmatpush1.bf16.msra.mxu0 %v2878
  %3754 = vmatprep.subr.bf16.mxu0 %v2887
  %3755 = vmatpush1.bf16.msra.mxu0 %v2886
  %3756 = vmatprep.subr.bf16.mxu0 %v2895
  %3757 = vmatpush1.bf16.msra.mxu0 %v2894
  %3758 = vmatprep.subr.bf16.mxu0 %v2903
  %3759 = vmatpush1.bf16.msra.mxu0 %v2902
  %3760 = vmatprep.mubr.bf16.mxu0 %v3727
  %3761 = vmatmul.mubr.bf16.gmra.mrb[0].mxu0 %v3726
  %v3762 = vpop.f32.mrb[0].mxu0
  %v3763 = vadd.f32 0.0, %v3762
  %v3764 = vpop.f32.mrb[0].mxu0
  %v3765 = vadd.f32 0.0, %v3764
  %v3766 = vpop.f32.mrb[0].mxu0
  %v3767 = vpop.f32.mrb[0].mxu0
  %3768 = vdwg.mxu0
  %3769 = vmatprep.subr.bf16.mxu0 %v2785
  %3770 = vmatpush1.bf16.msra.mxu0 %v2784
  %3771 = vmatprep.subr.bf16.mxu0 %v2793
  %3772 = vmatpush1.bf16.msra.mxu0 %v2792
  %3773 = vmatprep.subr.bf16.mxu0 %v2801
  %3774 = vmatpush1.bf16.msra.mxu0 %v2800
  %3775 = vmatprep.subr.bf16.mxu0 %v2809
  %3776 = vmatpush1.bf16.msra.mxu0 %v2808
  %3777 = vmatprep.subr.bf16.mxu0 %v2817
  %3778 = vmatpush1.bf16.msra.mxu0 %v2816
  %3779 = vmatprep.subr.bf16.mxu0 %v2825
  %3780 = vmatpush1.bf16.msra.mxu0 %v2824
  %3781 = vmatprep.subr.bf16.mxu0 %v2833
  %3782 = vmatpush1.bf16.msra.mxu0 %v2832
  %3783 = vmatprep.subr.bf16.mxu0 %v2841
  %3784 = vmatpush1.bf16.msra.mxu0 %v2840
  %3785 = vmatprep.subr.bf16.mxu0 %v2849
  %3786 = vmatpush1.bf16.msra.mxu0 %v2848
  %3787 = vmatprep.subr.bf16.mxu0 %v2857
  %3788 = vmatpush1.bf16.msra.mxu0 %v2856
  %3789 = vmatprep.subr.bf16.mxu0 %v2865
  %3790 = vmatpush1.bf16.msra.mxu0 %v2864
  %3791 = vmatprep.subr.bf16.mxu0 %v2873
  %3792 = vmatpush1.bf16.msra.mxu0 %v2872
  %3793 = vmatprep.subr.bf16.mxu0 %v2881
  %3794 = vmatpush1.bf16.msra.mxu0 %v2880
  %3795 = vmatprep.subr.bf16.mxu0 %v2889
  %3796 = vmatpush1.bf16.msra.mxu0 %v2888
  %3797 = vmatprep.subr.bf16.mxu0 %v2897
  %3798 = vmatpush1.bf16.msra.mxu0 %v2896
  %3799 = vmatprep.subr.bf16.mxu0 %v2905
  %3800 = vmatpush1.bf16.msra.mxu0 %v2904
  %3801 = vmatprep.mubr.bf16.mxu0 %v3727
  %3802 = vmatmul.mubr.bf16.gmra.mrb[0].mxu0 %v3726
  %v3803 = vpop.f32.mrb[0].mxu0
  %v3804 = vadd.f32 0.0, %v3803
  %v3805 = vpop.f32.mrb[0].mxu0
  %v3806 = vadd.f32 0.0, %v3805
  %v3807 = vpop.f32.mrb[0].mxu0
  %v3808 = vpop.f32.mrb[0].mxu0
  %3809 = vdwg.mxu0
  %3810 = vmatprep.subr.bf16.mxu0 %v2787
  %3811 = vmatpush1.bf16.msra.mxu0 %v2786
  %3812 = vmatprep.subr.bf16.mxu0 %v2795
  %3813 = vmatpush1.bf16.msra.mxu0 %v2794
  %3814 = vmatprep.subr.bf16.mxu0 %v2803
  %3815 = vmatpush1.bf16.msra.mxu0 %v2802
  %3816 = vmatprep.subr.bf16.mxu0 %v2811
  %3817 = vmatpush1.bf16.msra.mxu0 %v2810
  %3818 = vmatprep.subr.bf16.mxu0 %v2819
  %3819 = vmatpush1.bf16.msra.mxu0 %v2818
  %3820 = vmatprep.subr.bf16.mxu0 %v2827
  %3821 = vmatpush1.bf16.msra.mxu0 %v2826
  %3822 = vmatprep.subr.bf16.mxu0 %v2835
  %3823 = vmatpush1.bf16.msra.mxu0 %v2834
  %3824 = vmatprep.subr.bf16.mxu0 %v2843
  %3825 = vmatpush1.bf16.msra.mxu0 %v2842
  %3826 = vmatprep.subr.bf16.mxu0 %v2851
  %3827 = vmatpush1.bf16.msra.mxu0 %v2850
  %3828 = vmatprep.subr.bf16.mxu0 %v2859
  %3829 = vmatpush1.bf16.msra.mxu0 %v2858
  %3830 = vmatprep.subr.bf16.mxu0 %v2867
  %3831 = vmatpush1.bf16.msra.mxu0 %v2866
  %3832 = vmatprep.subr.bf16.mxu0 %v2875
  %3833 = vmatpush1.bf16.msra.mxu0 %v2874
  %3834 = vmatprep.subr.bf16.mxu0 %v2883
  %3835 = vmatpush1.bf16.msra.mxu0 %v2882
  %3836 = vmatprep.subr.bf16.mxu0 %v2891
  %3837 = vmatpush1.bf16.msra.mxu0 %v2890
  %3838 = vmatprep.subr.bf16.mxu0 %v2899
  %3839 = vmatpush1.bf16.msra.mxu0 %v2898
  %3840 = vmatprep.subr.bf16.mxu0 %v2907
  %3841 = vmatpush1.bf16.msra.mxu0 %v2906
  %3842 = vmatprep.mubr.bf16.mxu0 %v3727
  %3843 = vmatmul.mubr.bf16.gmra.mrb[0].mxu0 %v3726
  %v3844 = vpop.f32.mrb[0].mxu0
  %v3845 = vadd.f32 0.0, %v3844
  %v3846 = vpop.f32.mrb[0].mxu0
  %v3847 = vadd.f32 0.0, %v3846
  %v3848 = vpop.f32.mrb[0].mxu0
  %v3849 = vpop.f32.mrb[0].mxu0
  %3850 = vdwg.mxu0
  %3851 = vmatprep.subr.bf16.mxu0 %v2789
  %3852 = vmatpush1.bf16.msra.mxu0 %v2788
  %3853 = vmatprep.subr.bf16.mxu0 %v2797
  %3854 = vmatpush1.bf16.msra.mxu0 %v2796
  %3855 = vmatprep.subr.bf16.mxu0 %v2805
  %3856 = vmatpush1.bf16.msra.mxu0 %v2804
  %3857 = vmatprep.subr.bf16.mxu0 %v2813
  %3858 = vmatpush1.bf16.msra.mxu0 %v2812
  %3859 = vmatprep.subr.bf16.mxu0 %v2821
  %3860 = vmatpush1.bf16.msra.mxu0 %v2820
  %3861 = vmatprep.subr.bf16.mxu0 %v2829
  %3862 = vmatpush1.bf16.msra.mxu0 %v2828
  %3863 = vmatprep.subr.bf16.mxu0 %v2837
  %3864 = vmatpush1.bf16.msra.mxu0 %v2836
  %3865 = vmatprep.subr.bf16.mxu0 %v2845
  %3866 = vmatpush1.bf16.msra.mxu0 %v2844
  %3867 = vmatprep.subr.bf16.mxu0 %v2853
  %3868 = vmatpush1.bf16.msra.mxu0 %v2852
  %3869 = vmatprep.subr.bf16.mxu0 %v2861
  %3870 = vmatpush1.bf16.msra.mxu0 %v2860
  %3871 = vmatprep.subr.bf16.mxu0 %v2869
  %3872 = vmatpush1.bf16.msra.mxu0 %v2868
  %3873 = vmatprep.subr.bf16.mxu0 %v2877
  %3874 = vmatpush1.bf16.msra.mxu0 %v2876
  %3875 = vmatprep.subr.bf16.mxu0 %v2885
  %3876 = vmatpush1.bf16.msra.mxu0 %v2884
  %3877 = vmatprep.subr.bf16.mxu0 %v2893
  %3878 = vmatpush1.bf16.msra.mxu0 %v2892
  %3879 = vmatprep.subr.bf16.mxu0 %v2901
  %3880 = vmatpush1.bf16.msra.mxu0 %v2900
  %3881 = vmatprep.subr.bf16.mxu0 %v2909
  %3882 = vmatpush1.bf16.msra.mxu0 %v2908
  %3883 = vmatprep.mubr.bf16.mxu0 %v3727
  %3884 = vmatmul.mubr.bf16.gmra.mrb[0].mxu0 %v3726
  %v3885 = vpop.f32.mrb[0].mxu0
  %v3886 = vadd.f32 0.0, %v3885
  %v3887 = vpop.f32.mrb[0].mxu0
  %v3888 = vadd.f32 0.0, %v3887
  %v3889 = vpop.f32.mrb[0].mxu0
  %v3890 = vpop.f32.mrb[0].mxu0
  %3891 = vdwg.mxu0
  %v3892 = vld [vmem:[#allocation2 + $0xc0] sm:$0xff]
  %v3893 = vld [vmem:[#allocation2 + $0xc8] sm:$0xff]
  %v3894 = vld [vmem:[#allocation2 + $0xd0] sm:$0xff]
  %v3895 = vld [vmem:[#allocation2 + $0xd8] sm:$0xff]
  %v3896 = vadd.f32 %v3892, %v3763
  %v3897 = vadd.f32 %v3893, %v3765
  %v3898 = vadd.f32 %v3894, %v3804
  %v3899 = vadd.f32 %v3895, %v3806
  %v3900 = vld [vmem:[#allocation2 + $0x120] sm:$0xff]
  %v3901 = vld [vmem:[#allocation2 + $0x128] sm:$0xff]
  %v3902 = vld [vmem:[#allocation2 + $0x130] sm:$0xff]
  %v3903 = vld [vmem:[#allocation2 + $0x138] sm:$0xff]
  %v3904 = vadd.f32 %v3900, %v3845
  %v3905 = vadd.f32 %v3901, %v3847
  %v3906 = vadd.f32 %v3902, %v3886
  %v3907 = vadd.f32 %v3903, %v3888
  %v3908 = vsub.f32 0.0, %v3896
  %v3909 = vmul.f32 %v3908, 1.442695
  %v3910 = vpow.pop %v3909
  %v3911 = vadd.f32 %v3910, 1.0
  %v3912 = vrcp.pop %v3911
  %v3913 = vmul.f32 1.0, %v3912
  %v3914 = vsub.f32 0.0, %v3897
  %v3915 = vmul.f32 %v3914, 1.442695
  %v3916 = vpow.pop %v3915
  %v3917 = vadd.f32 %v3916, 1.0
  %v3918 = vrcp.pop %v3917
  %v3919 = vmul.f32 1.0, %v3918
  %v3920 = vtanh.pop %v3898
  %v3921 = vsub.f32 0.0, %v3899
  %v3922 = vmul.f32 %v3921, 1.442695
  %v3923 = vpow.pop %v3922
  %v3924 = vadd.f32 %v3923, 1.0
  %v3925 = vrcp.pop %v3924
  %v3926 = vmul.f32 1.0, %v3925
  %v3927 = vmul.f32 %v3919, %v3699
  %v3928 = vmul.f32 %v3913, %v3920
  %v3929 = vadd.f32 %v3927, %v3928
  %v3930 = vtanh.pop %v3929
  %v3931 = vmul.f32 %v3926, %v3930
  %v3932 = vsub.f32 0.0, %v3904
  %v3933 = vmul.f32 %v3932, 1.442695
  %v3934 = vpow.pop %v3933
  %v3935 = vadd.f32 %v3934, 1.0
  %v3936 = vrcp.pop %v3935
  %v3937 = vmul.f32 1.0, %v3936
  %v3938 = vsub.f32 0.0, %v3905
  %v3939 = vmul.f32 %v3938, 1.442695
  %v3940 = vpow.pop %v3939
  %v3941 = vadd.f32 %v3940, 1.0
  %v3942 = vrcp.pop %v3941
  %v3943 = vmul.f32 1.0, %v3942
  %v3944 = vtanh.pop %v3906
  %v3945 = vsub.f32 0.0, %v3907
  %v3946 = vmul.f32 %v3945, 1.442695
  %v3947 = vpow.pop %v3946
  %v3948 = vadd.f32 %v3947, 1.0
  %v3949 = vrcp.pop %v3948
  %v3950 = vmul.f32 1.0, %v3949
  %v3951 = vmul.f32 %v3943, %v3723
  %v3952 = vmul.f32 %v3937, %v3944
  %v3953 = vadd.f32 %v3951, %v3952
  %v3954 = vtanh.pop %v3953
  %v3955 = vmul.f32 %v3950, %v3954
  %v3956 = vpack.c.bf16 %v3931, %v3931
  %v3957 = vpack.c.bf16 %v3955, %v3955
  %3958 = vmatprep.subr.bf16.mxu0 %v2783
  %3959 = vmatpush1.bf16.msra.mxu0 %v2782
  %3960 = vmatprep.subr.bf16.mxu0 %v2791
  %3961 = vmatpush1.bf16.msra.mxu0 %v2790
  %3962 = vmatprep.subr.bf16.mxu0 %v2799
  %3963 = vmatpush1.bf16.msra.mxu0 %v2798
  %3964 = vmatprep.subr.bf16.mxu0 %v2807
  %3965 = vmatpush1.bf16.msra.mxu0 %v2806
  %3966 = vmatprep.subr.bf16.mxu0 %v2815
  %3967 = vmatpush1.bf16.msra.mxu0 %v2814
  %3968 = vmatprep.subr.bf16.mxu0 %v2823
  %3969 = vmatpush1.bf16.msra.mxu0 %v2822
  %3970 = vmatprep.subr.bf16.mxu0 %v2831
  %3971 = vmatpush1.bf16.msra.mxu0 %v2830
  %3972 = vmatprep.subr.bf16.mxu0 %v2839
  %3973 = vmatpush1.bf16.msra.mxu0 %v2838
  %3974 = vmatprep.subr.bf16.mxu0 %v2847
  %3975 = vmatpush1.bf16.msra.mxu0 %v2846
  %3976 = vmatprep.subr.bf16.mxu0 %v2855
  %3977 = vmatpush1.bf16.msra.mxu0 %v2854
  %3978 = vmatprep.subr.bf16.mxu0 %v2863
  %3979 = vmatpush1.bf16.msra.mxu0 %v2862
  %3980 = vmatprep.subr.bf16.mxu0 %v2871
  %3981 = vmatpush1.bf16.msra.mxu0 %v2870
  %3982 = vmatprep.subr.bf16.mxu0 %v2879
  %3983 = vmatpush1.bf16.msra.mxu0 %v2878
  %3984 = vmatprep.subr.bf16.mxu0 %v2887
  %3985 = vmatpush1.bf16.msra.mxu0 %v2886
  %3986 = vmatprep.subr.bf16.mxu0 %v2895
  %3987 = vmatpush1.bf16.msra.mxu0 %v2894
  %3988 = vmatprep.subr.bf16.mxu0 %v2903
  %3989 = vmatpush1.bf16.msra.mxu0 %v2902
  %3990 = vmatprep.mubr.bf16.mxu0 %v3957
  %3991 = vmatmul.mubr.bf16.gmra.mrb[0].mxu0 %v3956
  %v3992 = vpop.f32.mrb[0].mxu0
  %v3993 = vadd.f32 0.0, %v3992
  %v3994 = vpop.f32.mrb[0].mxu0
  %v3995 = vadd.f32 0.0, %v3994
  %v3996 = vpop.f32.mrb[0].mxu0
  %v3997 = vpop.f32.mrb[0].mxu0
  %3998 = vdwg.mxu0
  %3999 = vmatprep.subr.bf16.mxu0 %v2785
  %4000 = vmatpush1.bf16.msra.mxu0 %v2784
  %4001 = vmatprep.subr.bf16.mxu0 %v2793
  %4002 = vmatpush1.bf16.msra.mxu0 %v2792
  %4003 = vmatprep.subr.bf16.mxu0 %v2801
  %4004 = vmatpush1.bf16.msra.mxu0 %v2800
  %4005 = vmatprep.subr.bf16.mxu0 %v2809
  %4006 = vmatpush1.bf16.msra.mxu0 %v2808
  %4007 = vmatprep.subr.bf16.mxu0 %v2817
  %4008 = vmatpush1.bf16.msra.mxu0 %v2816
  %4009 = vmatprep.subr.bf16.mxu0 %v2825
  %4010 = vmatpush1.bf16.msra.mxu0 %v2824
  %4011 = vmatprep.subr.bf16.mxu0 %v2833
  %4012 = vmatpush1.bf16.msra.mxu0 %v2832
  %4013 = vmatprep.subr.bf16.mxu0 %v2841
  %4014 = vmatpush1.bf16.msra.mxu0 %v2840
  %4015 = vmatprep.subr.bf16.mxu0 %v2849
  %4016 = vmatpush1.bf16.msra.mxu0 %v2848
  %4017 = vmatprep.subr.bf16.mxu0 %v2857
  %4018 = vmatpush1.bf16.msra.mxu0 %v2856
  %4019 = vmatprep.subr.bf16.mxu0 %v2865
  %4020 = vmatpush1.bf16.msra.mxu0 %v2864
  %4021 = vmatprep.subr.bf16.mxu0 %v2873
  %4022 = vmatpush1.bf16.msra.mxu0 %v2872
  %4023 = vmatprep.subr.bf16.mxu0 %v2881
  %4024 = vmatpush1.bf16.msra.mxu0 %v2880
  %4025 = vmatprep.subr.bf16.mxu0 %v2889
  %4026 = vmatpush1.bf16.msra.mxu0 %v2888
  %4027 = vmatprep.subr.bf16.mxu0 %v2897
  %4028 = vmatpush1.bf16.msra.mxu0 %v2896
  %4029 = vmatprep.subr.bf16.mxu0 %v2905
  %4030 = vmatpush1.bf16.msra.mxu0 %v2904
  %4031 = vmatprep.mubr.bf16.mxu0 %v3957
  %4032 = vmatmul.mubr.bf16.gmra.mrb[0].mxu0 %v3956
  %v4033 = vpop.f32.mrb[0].mxu0
  %v4034 = vadd.f32 0.0, %v4033
  %v4035 = vpop.f32.mrb[0].mxu0
  %v4036 = vadd.f32 0.0, %v4035
  %v4037 = vpop.f32.mrb[0].mxu0
  %v4038 = vpop.f32.mrb[0].mxu0
  %4039 = vdwg.mxu0
  %4040 = vmatprep.subr.bf16.mxu0 %v2787
  %4041 = vmatpush1.bf16.msra.mxu0 %v2786
  %4042 = vmatprep.subr.bf16.mxu0 %v2795
  %4043 = vmatpush1.bf16.msra.mxu0 %v2794
  %4044 = vmatprep.subr.bf16.mxu0 %v2803
  %4045 = vmatpush1.bf16.msra.mxu0 %v2802
  %4046 = vmatprep.subr.bf16.mxu0 %v2811
  %4047 = vmatpush1.bf16.msra.mxu0 %v2810
  %4048 = vmatprep.subr.bf16.mxu0 %v2819
  %4049 = vmatpush1.bf16.msra.mxu0 %v2818
  %4050 = vmatprep.subr.bf16.mxu0 %v2827
  %4051 = vmatpush1.bf16.msra.mxu0 %v2826
  %4052 = vmatprep.subr.bf16.mxu0 %v2835
  %4053 = vmatpush1.bf16.msra.mxu0 %v2834
  %4054 = vmatprep.subr.bf16.mxu0 %v2843
  %4055 = vmatpush1.bf16.msra.mxu0 %v2842
  %4056 = vmatprep.subr.bf16.mxu0 %v2851
  %4057 = vmatpush1.bf16.msra.mxu0 %v2850
  %4058 = vmatprep.subr.bf16.mxu0 %v2859
  %4059 = vmatpush1.bf16.msra.mxu0 %v2858
  %4060 = vmatprep.subr.bf16.mxu0 %v2867
  %4061 = vmatpush1.bf16.msra.mxu0 %v2866
  %4062 = vmatprep.subr.bf16.mxu0 %v2875
  %4063 = vmatpush1.bf16.msra.mxu0 %v2874
  %4064 = vmatprep.subr.bf16.mxu0 %v2883
  %4065 = vmatpush1.bf16.msra.mxu0 %v2882
  %4066 = vmatprep.subr.bf16.mxu0 %v2891
  %4067 = vmatpush1.bf16.msra.mxu0 %v2890
  %4068 = vmatprep.subr.bf16.mxu0 %v2899
  %4069 = vmatpush1.bf16.msra.mxu0 %v2898
  %4070 = vmatprep.subr.bf16.mxu0 %v2907
  %4071 = vmatpush1.bf16.msra.mxu0 %v2906
  %4072 = vmatprep.mubr.bf16.mxu0 %v3957
  %4073 = vmatmul.mubr.bf16.gmra.mrb[0].mxu0 %v3956
  %v4074 = vpop.f32.mrb[0].mxu0
  %v4075 = vadd.f32 0.0, %v4074
  %v4076 = vpop.f32.mrb[0].mxu0
  %v4077 = vadd.f32 0.0, %v4076
  %v4078 = vpop.f32.mrb[0].mxu0
  %v4079 = vpop.f32.mrb[0].mxu0
  %4080 = vdwg.mxu0
  %4081 = vmatprep.subr.bf16.mxu0 %v2789
  %4082 = vmatpush1.bf16.msra.mxu0 %v2788
  %4083 = vmatprep.subr.bf16.mxu0 %v2797
  %4084 = vmatpush1.bf16.msra.mxu0 %v2796
  %4085 = vmatprep.subr.bf16.mxu0 %v2805
  %4086 = vmatpush1.bf16.msra.mxu0 %v2804
  %4087 = vmatprep.subr.bf16.mxu0 %v2813
  %4088 = vmatpush1.bf16.msra.mxu0 %v2812
  %4089 = vmatprep.subr.bf16.mxu0 %v2821
  %4090 = vmatpush1.bf16.msra.mxu0 %v2820
  %4091 = vmatprep.subr.bf16.mxu0 %v2829
  %4092 = vmatpush1.bf16.msra.mxu0 %v2828
  %4093 = vmatprep.subr.bf16.mxu0 %v2837
  %4094 = vmatpush1.bf16.msra.mxu0 %v2836
  %4095 = vmatprep.subr.bf16.mxu0 %v2845
  %4096 = vmatpush1.bf16.msra.mxu0 %v2844
  %4097 = vmatprep.subr.bf16.mxu0 %v2853
  %4098 = vmatpush1.bf16.msra.mxu0 %v2852
  %4099 = vmatprep.subr.bf16.mxu0 %v2861
  %4100 = vmatpush1.bf16.msra.mxu0 %v2860
  %4101 = vmatprep.subr.bf16.mxu0 %v2869
  %4102 = vmatpush1.bf16.msra.mxu0 %v2868
  %4103 = vmatprep.subr.bf16.mxu0 %v2877
  %4104 = vmatpush1.bf16.msra.mxu0 %v2876
  %4105 = vmatprep.subr.bf16.mxu0 %v2885
  %4106 = vmatpush1.bf16.msra.mxu0 %v2884
  %4107 = vmatprep.subr.bf16.mxu0 %v2893
  %4108 = vmatpush1.bf16.msra.mxu0 %v2892
  %4109 = vmatprep.subr.bf16.mxu0 %v2901
  %4110 = vmatpush1.bf16.msra.mxu0 %v2900
  %4111 = vmatprep.subr.bf16.mxu0 %v2909
  %4112 = vmatpush1.bf16.msra.mxu0 %v2908
  %4113 = vmatprep.mubr.bf16.mxu0 %v3957
  %4114 = vmatmul.mubr.bf16.gmra.mrb[0].mxu0 %v3956
  %v4115 = vpop.f32.mrb[0].mxu0
  %v4116 = vadd.f32 0.0, %v4115
  %v4117 = vpop.f32.mrb[0].mxu0
  %v4118 = vadd.f32 0.0, %v4117
  %v4119 = vpop.f32.mrb[0].mxu0
  %v4120 = vpop.f32.mrb[0].mxu0
  %4121 = vdwg.mxu0
  %v4122 = vld [vmem:[#allocation2 + $0x100] sm:$0xff]
  %v4123 = vld [vmem:[#allocation2 + $0x108] sm:$0xff]
  %v4124 = vld [vmem:[#allocation2 + $0x110] sm:$0xff]
  %v4125 = vld [vmem:[#allocation2 + $0x118] sm:$0xff]
  %v4126 = vadd.f32 %v4122, %v3993
  %v4127 = vadd.f32 %v4123, %v3995
  %v4128 = vadd.f32 %v4124, %v4034
  %v4129 = vadd.f32 %v4125, %v4036
  %v4130 = vld [vmem:[#allocation2 + $0xe0] sm:$0xff]
  %v4131 = vld [vmem:[#allocation2 + $0xe8] sm:$0xff]
  %v4132 = vld [vmem:[#allocation2 + $0xf0] sm:$0xff]
  %v4133 = vld [vmem:[#allocation2 + $0xf8] sm:$0xff]
  %v4134 = vadd.f32 %v4130, %v4075
  %v4135 = vadd.f32 %v4131, %v4077
  %v4136 = vadd.f32 %v4132, %v4116
  %v4137 = vadd.f32 %v4133, %v4118
  %v4138 = vsub.f32 0.0, %v4126
  %v4139 = vmul.f32 %v4138, 1.442695
  %v4140 = vpow.pop %v4139
  %v4141 = vadd.f32 %v4140, 1.0
  %v4142 = vrcp.pop %v4141
  %v4143 = vmul.f32 1.0, %v4142
  %v4144 = vsub.f32 0.0, %v4127
  %v4145 = vmul.f32 %v4144, 1.442695
  %v4146 = vpow.pop %v4145
  %v4147 = vadd.f32 %v4146, 1.0
  %v4148 = vrcp.pop %v4147
  %v4149 = vmul.f32 1.0, %v4148
  %v4150 = vtanh.pop %v4128
  %v4151 = vsub.f32 0.0, %v4129
  %v4152 = vmul.f32 %v4151, 1.442695
  %v4153 = vpow.pop %v4152
  %v4154 = vadd.f32 %v4153, 1.0
  %v4155 = vrcp.pop %v4154
  %v4156 = vmul.f32 1.0, %v4155
  %v4157 = vmul.f32 %v4149, %v3929
  %v4158 = vmul.f32 %v4143, %v4150
  %v4159 = vadd.f32 %v4157, %v4158
  %v4160 = vtanh.pop %v4159
  %v4161 = vmul.f32 %v4156, %v4160
  %v4162 = vsub.f32 0.0, %v4134
  %v4163 = vmul.f32 %v4162, 1.442695
  %v4164 = vpow.pop %v4163
  %v4165 = vadd.f32 %v4164, 1.0
  %v4166 = vrcp.pop %v4165
  %v4167 = vmul.f32 1.0, %v4166
  %v4168 = vsub.f32 0.0, %v4135
  %v4169 = vmul.f32 %v4168, 1.442695
  %v4170 = vpow.pop %v4169
  %v4171 = vadd.f32 %v4170, 1.0
  %v4172 = vrcp.pop %v4171
  %v4173 = vmul.f32 1.0, %v4172
  %v4174 = vtanh.pop %v4136
  %v4175 = vsub.f32 0.0, %v4137
  %v4176 = vmul.f32 %v4175, 1.442695
  %v4177 = vpow.pop %v4176
  %v4178 = vadd.f32 %v4177, 1.0
  %v4179 = vrcp.pop %v4178
  %v4180 = vmul.f32 1.0, %v4179
  %v4181 = vmul.f32 %v4173, %v3953
  %v4182 = vmul.f32 %v4167, %v4174
  %v4183 = vadd.f32 %v4181, %v4182
  %v4184 = vtanh.pop %v4183
  %v4185 = vmul.f32 %v4180, %v4184
  %v4186 = vpack.c.bf16 %v4161, %v4161
  %v4187 = vpack.c.bf16 %v4185, %v4185
  %4188 = vmatprep.subr.bf16.mxu0 %v2783
  %4189 = vmatpush1.bf16.msra.mxu0 %v2782
  %4190 = vmatprep.subr.bf16.mxu0 %v2791
  %4191 = vmatpush1.bf16.msra.mxu0 %v2790
  %4192 = vmatprep.subr.bf16.mxu0 %v2799
  %4193 = vmatpush1.bf16.msra.mxu0 %v2798
  %4194 = vmatprep.subr.bf16.mxu0 %v2807
  %4195 = vmatpush1.bf16.msra.mxu0 %v2806
  %4196 = vmatprep.subr.bf16.mxu0 %v2815
  %4197 = vmatpush1.bf16.msra.mxu0 %v2814
  %4198 = vmatprep.subr.bf16.mxu0 %v2823
  %4199 = vmatpush1.bf16.msra.mxu0 %v2822
  %4200 = vmatprep.subr.bf16.mxu0 %v2831
  %4201 = vmatpush1.bf16.msra.mxu0 %v2830
  %4202 = vmatprep.subr.bf16.mxu0 %v2839
  %4203 = vmatpush1.bf16.msra.mxu0 %v2838
  %4204 = vmatprep.subr.bf16.mxu0 %v2847
  %4205 = vmatpush1.bf16.msra.mxu0 %v2846
  %4206 = vmatprep.subr.bf16.mxu0 %v2855
  %4207 = vmatpush1.bf16.msra.mxu0 %v2854
  %4208 = vmatprep.subr.bf16.mxu0 %v2863
  %4209 = vmatpush1.bf16.msra.mxu0 %v2862
  %4210 = vmatprep.subr.bf16.mxu0 %v2871
  %4211 = vmatpush1.bf16.msra.mxu0 %v2870
  %4212 = vmatprep.subr.bf16.mxu0 %v2879
  %4213 = vmatpush1.bf16.msra.mxu0 %v2878
  %4214 = vmatprep.subr.bf16.mxu0 %v2887
  %4215 = vmatpush1.bf16.msra.mxu0 %v2886
  %4216 = vmatprep.subr.bf16.mxu0 %v2895
  %4217 = vmatpush1.bf16.msra.mxu0 %v2894
  %4218 = vmatprep.subr.bf16.mxu0 %v2903
  %4219 = vmatpush1.bf16.msra.mxu0 %v2902
  %4220 = vmatprep.mubr.bf16.mxu0 %v4187
  %4221 = vmatmul.mubr.bf16.gmra.mrb[0].mxu0 %v4186
  %v4222 = vpop.f32.mrb[0].mxu0
  %v4223 = vadd.f32 0.0, %v4222
  %v4224 = vpop.f32.mrb[0].mxu0
  %v4225 = vadd.f32 0.0, %v4224
  %v4226 = vpop.f32.mrb[0].mxu0
  %v4227 = vpop.f32.mrb[0].mxu0
  %4228 = vdwg.mxu0
  %4229 = vmatprep.subr.bf16.mxu0 %v2785
  %4230 = vmatpush1.bf16.msra.mxu0 %v2784
  %4231 = vmatprep.subr.bf16.mxu0 %v2793
  %4232 = vmatpush1.bf16.msra.mxu0 %v2792
  %4233 = vmatprep.subr.bf16.mxu0 %v2801
  %4234 = vmatpush1.bf16.msra.mxu0 %v2800
  %4235 = vmatprep.subr.bf16.mxu0 %v2809
  %4236 = vmatpush1.bf16.msra.mxu0 %v2808
  %4237 = vmatprep.subr.bf16.mxu0 %v2817
  %4238 = vmatpush1.bf16.msra.mxu0 %v2816
  %4239 = vmatprep.subr.bf16.mxu0 %v2825
  %4240 = vmatpush1.bf16.msra.mxu0 %v2824
  %4241 = vmatprep.subr.bf16.mxu0 %v2833
  %4242 = vmatpush1.bf16.msra.mxu0 %v2832
  %4243 = vmatprep.subr.bf16.mxu0 %v2841
  %4244 = vmatpush1.bf16.msra.mxu0 %v2840
  %4245 = vmatprep.subr.bf16.mxu0 %v2849
  %4246 = vmatpush1.bf16.msra.mxu0 %v2848
  %4247 = vmatprep.subr.bf16.mxu0 %v2857
  %4248 = vmatpush1.bf16.msra.mxu0 %v2856
  %4249 = vmatprep.subr.bf16.mxu0 %v2865
  %4250 = vmatpush1.bf16.msra.mxu0 %v2864
  %4251 = vmatprep.subr.bf16.mxu0 %v2873
  %4252 = vmatpush1.bf16.msra.mxu0 %v2872
  %4253 = vmatprep.subr.bf16.mxu0 %v2881
  %4254 = vmatpush1.bf16.msra.mxu0 %v2880
  %4255 = vmatprep.subr.bf16.mxu0 %v2889
  %4256 = vmatpush1.bf16.msra.mxu0 %v2888
  %4257 = vmatprep.subr.bf16.mxu0 %v2897
  %4258 = vmatpush1.bf16.msra.mxu0 %v2896
  %4259 = vmatprep.subr.bf16.mxu0 %v2905
  %4260 = vmatpush1.bf16.msra.mxu0 %v2904
  %4261 = vmatprep.mubr.bf16.mxu0 %v4187
  %4262 = vmatmul.mubr.bf16.gmra.mrb[0].mxu0 %v4186
  %v4263 = vpop.f32.mrb[0].mxu0
  %v4264 = vadd.f32 0.0, %v4263
  %v4265 = vpop.f32.mrb[0].mxu0
  %v4266 = vadd.f32 0.0, %v4265
  %v4267 = vpop.f32.mrb[0].mxu0
  %v4268 = vpop.f32.mrb[0].mxu0
  %4269 = vdwg.mxu0
  %4270 = vmatprep.subr.bf16.mxu0 %v2787
  %4271 = vmatpush1.bf16.msra.mxu0 %v2786
  %4272 = vmatprep.subr.bf16.mxu0 %v2795
  %4273 = vmatpush1.bf16.msra.mxu0 %v2794
  %4274 = vmatprep.subr.bf16.mxu0 %v2803
  %4275 = vmatpush1.bf16.msra.mxu0 %v2802
  %4276 = vmatprep.subr.bf16.mxu0 %v2811
  %4277 = vmatpush1.bf16.msra.mxu0 %v2810
  %4278 = vmatprep.subr.bf16.mxu0 %v2819
  %4279 = vmatpush1.bf16.msra.mxu0 %v2818
  %4280 = vmatprep.subr.bf16.mxu0 %v2827
  %4281 = vmatpush1.bf16.msra.mxu0 %v2826
  %4282 = vmatprep.subr.bf16.mxu0 %v2835
  %4283 = vmatpush1.bf16.msra.mxu0 %v2834
  %4284 = vmatprep.subr.bf16.mxu0 %v2843
  %4285 = vmatpush1.bf16.msra.mxu0 %v2842
  %4286 = vmatprep.subr.bf16.mxu0 %v2851
  %4287 = vmatpush1.bf16.msra.mxu0 %v2850
  %4288 = vmatprep.subr.bf16.mxu0 %v2859
  %4289 = vmatpush1.bf16.msra.mxu0 %v2858
  %4290 = vmatprep.subr.bf16.mxu0 %v2867
  %4291 = vmatpush1.bf16.msra.mxu0 %v2866
  %4292 = vmatprep.subr.bf16.mxu0 %v2875
  %4293 = vmatpush1.bf16.msra.mxu0 %v2874
  %4294 = vmatprep.subr.bf16.mxu0 %v2883
  %4295 = vmatpush1.bf16.msra.mxu0 %v2882
  %4296 = vmatprep.subr.bf16.mxu0 %v2891
  %4297 = vmatpush1.bf16.msra.mxu0 %v2890
  %4298 = vmatprep.subr.bf16.mxu0 %v2899
  %4299 = vmatpush1.bf16.msra.mxu0 %v2898
  %4300 = vmatprep.subr.bf16.mxu0 %v2907
  %4301 = vmatpush1.bf16.msra.mxu0 %v2906
  %4302 = vmatprep.mubr.bf16.mxu0 %v4187
  %4303 = vmatmul.mubr.bf16.gmra.mrb[0].mxu0 %v4186
  %v4304 = vpop.f32.mrb[0].mxu0
  %v4305 = vadd.f32 0.0, %v4304
  %v4306 = vpop.f32.mrb[0].mxu0
  %v4307 = vadd.f32 0.0, %v4306
  %v4308 = vpop.f32.mrb[0].mxu0
  %v4309 = vpop.f32.mrb[0].mxu0
  %4310 = vdwg.mxu0
  %4311 = vmatprep.subr.bf16.mxu0 %v2789
  %4312 = vmatpush1.bf16.msra.mxu0 %v2788
  %4313 = vmatprep.subr.bf16.mxu0 %v2797
  %4314 = vmatpush1.bf16.msra.mxu0 %v2796
  %4315 = vmatprep.subr.bf16.mxu0 %v2805
  %4316 = vmatpush1.bf16.msra.mxu0 %v2804
  %4317 = vmatprep.subr.bf16.mxu0 %v2813
  %4318 = vmatpush1.bf16.msra.mxu0 %v2812
  %4319 = vmatprep.subr.bf16.mxu0 %v2821
  %4320 = vmatpush1.bf16.msra.mxu0 %v2820
  %4321 = vmatprep.subr.bf16.mxu0 %v2829
  %4322 = vmatpush1.bf16.msra.mxu0 %v2828
  %4323 = vmatprep.subr.bf16.mxu0 %v2837
  %4324 = vmatpush1.bf16.msra.mxu0 %v2836
  %4325 = vmatprep.subr.bf16.mxu0 %v2845
  %4326 = vmatpush1.bf16.msra.mxu0 %v2844
  %4327 = vmatprep.subr.bf16.mxu0 %v2853
  %4328 = vmatpush1.bf16.msra.mxu0 %v2852
  %4329 = vmatprep.subr.bf16.mxu0 %v2861
  %4330 = vmatpush1.bf16.msra.mxu0 %v2860
  %4331 = vmatprep.subr.bf16.mxu0 %v2869
  %4332 = vmatpush1.bf16.msra.mxu0 %v2868
  %4333 = vmatprep.subr.bf16.mxu0 %v2877
  %4334 = vmatpush1.bf16.msra.mxu0 %v2876
  %4335 = vmatprep.subr.bf16.mxu0 %v2885
  %4336 = vmatpush1.bf16.msra.mxu0 %v2884
  %4337 = vmatprep.subr.bf16.mxu0 %v2893
  %4338 = vmatpush1.bf16.msra.mxu0 %v2892
  %4339 = vmatprep.subr.bf16.mxu0 %v2901
  %4340 = vmatpush1.bf16.msra.mxu0 %v2900
  %4341 = vmatprep.subr.bf16.mxu0 %v2909
  %4342 = vmatpush1.bf16.msra.mxu0 %v2908
  %4343 = vmatprep.mubr.bf16.mxu0 %v4187
  %4344 = vmatmul.mubr.bf16.gmra.mrb[0].mxu0 %v4186
  %v4345 = vpop.f32.mrb[0].mxu0
  %v4346 = vadd.f32 0.0, %v4345
  %v4347 = vpop.f32.mrb[0].mxu0
  %v4348 = vadd.f32 0.0, %v4347
  %v4349 = vpop.f32.mrb[0].mxu0
  %v4350 = vpop.f32.mrb[0].mxu0
  %4351 = vdwg.mxu0
  %v4352 = vld [vmem:[#allocation2 + $0x140] sm:$0xff]
  %v4353 = vld [vmem:[#allocation2 + $0x148] sm:$0xff]
  %v4354 = vld [vmem:[#allocation2 + $0x150] sm:$0xff]
  %v4355 = vld [vmem:[#allocation2 + $0x158] sm:$0xff]
  %v4356 = vadd.f32 %v4352, %v4223
  %v4357 = vadd.f32 %v4353, %v4225
  %v4358 = vadd.f32 %v4354, %v4264
  %v4359 = vadd.f32 %v4355, %v4266
  %v4360 = vld [vmem:[#allocation2 + $0xa0] sm:$0xff]
  %v4361 = vld [vmem:[#allocation2 + $0xa8] sm:$0xff]
  %v4362 = vld [vmem:[#allocation2 + $0xb0] sm:$0xff]
  %v4363 = vld [vmem:[#allocation2 + $0xb8] sm:$0xff]
  %v4364 = vadd.f32 %v4360, %v4305
  %v4365 = vadd.f32 %v4361, %v4307
  %v4366 = vadd.f32 %v4362, %v4346
  %v4367 = vadd.f32 %v4363, %v4348
  %v4368 = vsub.f32 0.0, %v4356
  %v4369 = vmul.f32 %v4368, 1.442695
  %v4370 = vpow.pop %v4369
  %v4371 = vadd.f32 %v4370, 1.0
  %v4372 = vrcp.pop %v4371
  %v4373 = vmul.f32 1.0, %v4372
  %v4374 = vsub.f32 0.0, %v4357
  %v4375 = vmul.f32 %v4374, 1.442695
  %v4376 = vpow.pop %v4375
  %v4377 = vadd.f32 %v4376, 1.0
  %v4378 = vrcp.pop %v4377
  %v4379 = vmul.f32 1.0, %v4378
  %v4380 = vtanh.pop %v4358
  %v4381 = vsub.f32 0.0, %v4359
  %v4382 = vmul.f32 %v4381, 1.442695
  %v4383 = vpow.pop %v4382
  %v4384 = vadd.f32 %v4383, 1.0
  %v4385 = vrcp.pop %v4384
  %v4386 = vmul.f32 1.0, %v4385
  %v4387 = vmul.f32 %v4379, %v4159
  %v4388 = vmul.f32 %v4373, %v4380
  %v4389 = vadd.f32 %v4387, %v4388
  %v4390 = vtanh.pop %v4389
  %v4391 = vmul.f32 %v4386, %v4390
  %v4392 = vsub.f32 0.0, %v4364
  %v4393 = vmul.f32 %v4392, 1.442695
  %v4394 = vpow.pop %v4393
  %v4395 = vadd.f32 %v4394, 1.0
  %v4396 = vrcp.pop %v4395
  %v4397 = vmul.f32 1.0, %v4396
  %v4398 = vsub.f32 0.0, %v4365
  %v4399 = vmul.f32 %v4398, 1.442695
  %v4400 = vpow.pop %v4399
  %v4401 = vadd.f32 %v4400, 1.0
  %v4402 = vrcp.pop %v4401
  %v4403 = vmul.f32 1.0, %v4402
  %v4404 = vtanh.pop %v4366
  %v4405 = vsub.f32 0.0, %v4367
  %v4406 = vmul.f32 %v4405, 1.442695
  %v4407 = vpow.pop %v4406
  %v4408 = vadd.f32 %v4407, 1.0
  %v4409 = vrcp.pop %v4408
  %v4410 = vmul.f32 1.0, %v4409
  %v4411 = vmul.f32 %v4403, %v4183
  %v4412 = vmul.f32 %v4397, %v4404
  %v4413 = vadd.f32 %v4411, %v4412
  %v4414 = vtanh.pop %v4413
  %v4415 = vmul.f32 %v4410, %v4414
  %v4416 = vpack.c.bf16 %v4391, %v4391
  %v4417 = vpack.c.bf16 %v4415, %v4415
  %4418 = vmatprep.subr.bf16.mxu0 %v2783
  %4419 = vmatpush1.bf16.msra.mxu0 %v2782
  %4420 = vmatprep.subr.bf16.mxu0 %v2791
  %4421 = vmatpush1.bf16.msra.mxu0 %v2790
  %4422 = vmatprep.subr.bf16.mxu0 %v2799
  %4423 = vmatpush1.bf16.msra.mxu0 %v2798
  %4424 = vmatprep.subr.bf16.mxu0 %v2807
  %4425 = vmatpush1.bf16.msra.mxu0 %v2806
  %4426 = vmatprep.subr.bf16.mxu0 %v2815
  %4427 = vmatpush1.bf16.msra.mxu0 %v2814
  %4428 = vmatprep.subr.bf16.mxu0 %v2823
  %4429 = vmatpush1.bf16.msra.mxu0 %v2822
  %4430 = vmatprep.subr.bf16.mxu0 %v2831
  %4431 = vmatpush1.bf16.msra.mxu0 %v2830
  %4432 = vmatprep.subr.bf16.mxu0 %v2839
  %4433 = vmatpush1.bf16.msra.mxu0 %v2838
  %4434 = vmatprep.subr.bf16.mxu0 %v2847
  %4435 = vmatpush1.bf16.msra.mxu0 %v2846
  %4436 = vmatprep.subr.bf16.mxu0 %v2855
  %4437 = vmatpush1.bf16.msra.mxu0 %v2854
  %4438 = vmatprep.subr.bf16.mxu0 %v2863
  %4439 = vmatpush1.bf16.msra.mxu0 %v2862
  %4440 = vmatprep.subr.bf16.mxu0 %v2871
  %4441 = vmatpush1.bf16.msra.mxu0 %v2870
  %4442 = vmatprep.subr.bf16.mxu0 %v2879
  %4443 = vmatpush1.bf16.msra.mxu0 %v2878
  %4444 = vmatprep.subr.bf16.mxu0 %v2887
  %4445 = vmatpush1.bf16.msra.mxu0 %v2886
  %4446 = vmatprep.subr.bf16.mxu0 %v2895
  %4447 = vmatpush1.bf16.msra.mxu0 %v2894
  %4448 = vmatprep.subr.bf16.mxu0 %v2903
  %4449 = vmatpush1.bf16.msra.mxu0 %v2902
  %4450 = vmatprep.mubr.bf16.mxu0 %v4417
  %4451 = vmatmul.mubr.bf16.gmra.mrb[0].mxu0 %v4416
  %v4452 = vpop.f32.mrb[0].mxu0
  %v4453 = vadd.f32 0.0, %v4452
  %v4454 = vpop.f32.mrb[0].mxu0
  %v4455 = vadd.f32 0.0, %v4454
  %v4456 = vpop.f32.mrb[0].mxu0
  %v4457 = vpop.f32.mrb[0].mxu0
  %4458 = vdwg.mxu0
  %4459 = vmatprep.subr.bf16.mxu0 %v2785
  %4460 = vmatpush1.bf16.msra.mxu0 %v2784
  %4461 = vmatprep.subr.bf16.mxu0 %v2793
  %4462 = vmatpush1.bf16.msra.mxu0 %v2792
  %4463 = vmatprep.subr.bf16.mxu0 %v2801
  %4464 = vmatpush1.bf16.msra.mxu0 %v2800
  %4465 = vmatprep.subr.bf16.mxu0 %v2809
  %4466 = vmatpush1.bf16.msra.mxu0 %v2808
  %4467 = vmatprep.subr.bf16.mxu0 %v2817
  %4468 = vmatpush1.bf16.msra.mxu0 %v2816
  %4469 = vmatprep.subr.bf16.mxu0 %v2825
  %4470 = vmatpush1.bf16.msra.mxu0 %v2824
  %4471 = vmatprep.subr.bf16.mxu0 %v2833
  %4472 = vmatpush1.bf16.msra.mxu0 %v2832
  %4473 = vmatprep.subr.bf16.mxu0 %v2841
  %4474 = vmatpush1.bf16.msra.mxu0 %v2840
  %4475 = vmatprep.subr.bf16.mxu0 %v2849
  %4476 = vmatpush1.bf16.msra.mxu0 %v2848
  %4477 = vmatprep.subr.bf16.mxu0 %v2857
  %4478 = vmatpush1.bf16.msra.mxu0 %v2856
  %4479 = vmatprep.subr.bf16.mxu0 %v2865
  %4480 = vmatpush1.bf16.msra.mxu0 %v2864
  %4481 = vmatprep.subr.bf16.mxu0 %v2873
  %4482 = vmatpush1.bf16.msra.mxu0 %v2872
  %4483 = vmatprep.subr.bf16.mxu0 %v2881
  %4484 = vmatpush1.bf16.msra.mxu0 %v2880
  %4485 = vmatprep.subr.bf16.mxu0 %v2889
  %4486 = vmatpush1.bf16.msra.mxu0 %v2888
  %4487 = vmatprep.subr.bf16.mxu0 %v2897
  %4488 = vmatpush1.bf16.msra.mxu0 %v2896
  %4489 = vmatprep.subr.bf16.mxu0 %v2905
  %4490 = vmatpush1.bf16.msra.mxu0 %v2904
  %4491 = vmatprep.mubr.bf16.mxu0 %v4417
  %4492 = vmatmul.mubr.bf16.gmra.mrb[0].mxu0 %v4416
  %v4493 = vpop.f32.mrb[0].mxu0
  %v4494 = vadd.f32 0.0, %v4493
  %v4495 = vpop.f32.mrb[0].mxu0
  %v4496 = vadd.f32 0.0, %v4495
  %v4497 = vpop.f32.mrb[0].mxu0
  %v4498 = vpop.f32.mrb[0].mxu0
  %4499 = vdwg.mxu0
  %4500 = vmatprep.subr.bf16.mxu0 %v2787
  %4501 = vmatpush1.bf16.msra.mxu0 %v2786
  %4502 = vmatprep.subr.bf16.mxu0 %v2795
  %4503 = vmatpush1.bf16.msra.mxu0 %v2794
  %4504 = vmatprep.subr.bf16.mxu0 %v2803
  %4505 = vmatpush1.bf16.msra.mxu0 %v2802
  %4506 = vmatprep.subr.bf16.mxu0 %v2811
  %4507 = vmatpush1.bf16.msra.mxu0 %v2810
  %4508 = vmatprep.subr.bf16.mxu0 %v2819
  %4509 = vmatpush1.bf16.msra.mxu0 %v2818
  %4510 = vmatprep.subr.bf16.mxu0 %v2827
  %4511 = vmatpush1.bf16.msra.mxu0 %v2826
  %4512 = vmatprep.subr.bf16.mxu0 %v2835
  %4513 = vmatpush1.bf16.msra.mxu0 %v2834
  %4514 = vmatprep.subr.bf16.mxu0 %v2843
  %4515 = vmatpush1.bf16.msra.mxu0 %v2842
  %4516 = vmatprep.subr.bf16.mxu0 %v2851
  %4517 = vmatpush1.bf16.msra.mxu0 %v2850
  %4518 = vmatprep.subr.bf16.mxu0 %v2859
  %4519 = vmatpush1.bf16.msra.mxu0 %v2858
  %4520 = vmatprep.subr.bf16.mxu0 %v2867
  %4521 = vmatpush1.bf16.msra.mxu0 %v2866
  %4522 = vmatprep.subr.bf16.mxu0 %v2875
  %4523 = vmatpush1.bf16.msra.mxu0 %v2874
  %4524 = vmatprep.subr.bf16.mxu0 %v2883
  %4525 = vmatpush1.bf16.msra.mxu0 %v2882
  %4526 = vmatprep.subr.bf16.mxu0 %v2891
  %4527 = vmatpush1.bf16.msra.mxu0 %v2890
  %4528 = vmatprep.subr.bf16.mxu0 %v2899
  %4529 = vmatpush1.bf16.msra.mxu0 %v2898
  %4530 = vmatprep.subr.bf16.mxu0 %v2907
  %4531 = vmatpush1.bf16.msra.mxu0 %v2906
  %4532 = vmatprep.mubr.bf16.mxu0 %v4417
  %4533 = vmatmul.mubr.bf16.gmra.mrb[0].mxu0 %v4416
  %v4534 = vpop.f32.mrb[0].mxu0
  %v4535 = vadd.f32 0.0, %v4534
  %v4536 = vpop.f32.mrb[0].mxu0
  %v4537 = vadd.f32 0.0, %v4536
  %v4538 = vpop.f32.mrb[0].mxu0
  %v4539 = vpop.f32.mrb[0].mxu0
  %4540 = vdwg.mxu0
  %4541 = vmatprep.subr.bf16.mxu0 %v2789
  %4542 = vmatpush1.bf16.msra.mxu0 %v2788
  %4543 = vmatprep.subr.bf16.mxu0 %v2797
  %4544 = vmatpush1.bf16.msra.mxu0 %v2796
  %4545 = vmatprep.subr.bf16.mxu0 %v2805
  %4546 = vmatpush1.bf16.msra.mxu0 %v2804
  %4547 = vmatprep.subr.bf16.mxu0 %v2813
  %4548 = vmatpush1.bf16.msra.mxu0 %v2812
  %4549 = vmatprep.subr.bf16.mxu0 %v2821
  %4550 = vmatpush1.bf16.msra.mxu0 %v2820
  %4551 = vmatprep.subr.bf16.mxu0 %v2829
  %4552 = vmatpush1.bf16.msra.mxu0 %v2828
  %4553 = vmatprep.subr.bf16.mxu0 %v2837
  %4554 = vmatpush1.bf16.msra.mxu0 %v2836
  %4555 = vmatprep.subr.bf16.mxu0 %v2845
  %4556 = vmatpush1.bf16.msra.mxu0 %v2844
  %4557 = vmatprep.subr.bf16.mxu0 %v2853
  %4558 = vmatpush1.bf16.msra.mxu0 %v2852
  %4559 = vmatprep.subr.bf16.mxu0 %v2861
  %4560 = vmatpush1.bf16.msra.mxu0 %v2860
  %4561 = vmatprep.subr.bf16.mxu0 %v2869
  %4562 = vmatpush1.bf16.msra.mxu0 %v2868
  %4563 = vmatprep.subr.bf16.mxu0 %v2877
  %4564 = vmatpush1.bf16.msra.mxu0 %v2876
  %4565 = vmatprep.subr.bf16.mxu0 %v2885
  %4566 = vmatpush1.bf16.msra.mxu0 %v2884
  %4567 = vmatprep.subr.bf16.mxu0 %v2893
  %4568 = vmatpush1.bf16.msra.mxu0 %v2892
  %4569 = vmatprep.subr.bf16.mxu0 %v2901
  %4570 = vmatpush1.bf16.msra.mxu0 %v2900
  %4571 = vmatprep.subr.bf16.mxu0 %v2909
  %4572 = vmatpush1.bf16.msra.mxu0 %v2908
  %4573 = vmatprep.mubr.bf16.mxu0 %v4417
  %4574 = vmatmul.mubr.bf16.gmra.mrb[0].mxu0 %v4416
  %v4575 = vpop.f32.mrb[0].mxu0
  %v4576 = vadd.f32 0.0, %v4575
  %v4577 = vpop.f32.mrb[0].mxu0
  %v4578 = vadd.f32 0.0, %v4577
  %v4579 = vpop.f32.mrb[0].mxu0
  %v4580 = vpop.f32.mrb[0].mxu0
  %4581 = vdwg.mxu0
  %v4582 = vld [vmem:[#allocation2 + $0x180] sm:$0xff]
  %v4583 = vld [vmem:[#allocation2 + $0x188] sm:$0xff]
  %v4584 = vld [vmem:[#allocation2 + $0x190] sm:$0xff]
  %v4585 = vld [vmem:[#allocation2 + $0x198] sm:$0xff]
  %v4586 = vadd.f32 %v4582, %v4453
  %v4587 = vadd.f32 %v4583, %v4455
  %v4588 = vadd.f32 %v4584, %v4494
  %v4589 = vadd.f32 %v4585, %v4496
  %v4590 = vld [vmem:[#allocation2 + $0x60] sm:$0xff]
  %v4591 = vld [vmem:[#allocation2 + $0x68] sm:$0xff]
  %v4592 = vld [vmem:[#allocation2 + $0x70] sm:$0xff]
  %v4593 = vld [vmem:[#allocation2 + $0x78] sm:$0xff]
  %v4594 = vadd.f32 %v4590, %v4535
  %v4595 = vadd.f32 %v4591, %v4537
  %v4596 = vadd.f32 %v4592, %v4576
  %v4597 = vadd.f32 %v4593, %v4578
  %v4598 = vsub.f32 0.0, %v4586
  %v4599 = vmul.f32 %v4598, 1.442695
  %v4600 = vpow.pop %v4599
  %v4601 = vadd.f32 %v4600, 1.0
  %v4602 = vrcp.pop %v4601
  %v4603 = vmul.f32 1.0, %v4602
  %v4604 = vsub.f32 0.0, %v4587
  %v4605 = vmul.f32 %v4604, 1.442695
  %v4606 = vpow.pop %v4605
  %v4607 = vadd.f32 %v4606, 1.0
  %v4608 = vrcp.pop %v4607
  %v4609 = vmul.f32 1.0, %v4608
  %v4610 = vtanh.pop %v4588
  %v4611 = vsub.f32 0.0, %v4589
  %v4612 = vmul.f32 %v4611, 1.442695
  %v4613 = vpow.pop %v4612
  %v4614 = vadd.f32 %v4613, 1.0
  %v4615 = vrcp.pop %v4614
  %v4616 = vmul.f32 1.0, %v4615
  %v4617 = vmul.f32 %v4609, %v4389
  %v4618 = vmul.f32 %v4603, %v4610
  %v4619 = vadd.f32 %v4617, %v4618
  %v4620 = vtanh.pop %v4619
  %v4621 = vmul.f32 %v4616, %v4620
  %v4622 = vsub.f32 0.0, %v4594
  %v4623 = vmul.f32 %v4622, 1.442695
  %v4624 = vpow.pop %v4623
  %v4625 = vadd.f32 %v4624, 1.0
  %v4626 = vrcp.pop %v4625
  %v4627 = vmul.f32 1.0, %v4626
  %v4628 = vsub.f32 0.0, %v4595
  %v4629 = vmul.f32 %v4628, 1.442695
  %v4630 = vpow.pop %v4629
  %v4631 = vadd.f32 %v4630, 1.0
  %v4632 = vrcp.pop %v4631
  %v4633 = vmul.f32 1.0, %v4632
  %v4634 = vtanh.pop %v4596
  %v4635 = vsub.f32 0.0, %v4597
  %v4636 = vmul.f32 %v4635, 1.442695
  %v4637 = vpow.pop %v4636
  %v4638 = vadd.f32 %v4637, 1.0
  %v4639 = vrcp.pop %v4638
  %v4640 = vmul.f32 1.0, %v4639
  %v4641 = vmul.f32 %v4633, %v4413
  %v4642 = vmul.f32 %v4627, %v4634
  %v4643 = vadd.f32 %v4641, %v4642
  %v4644 = vtanh.pop %v4643
  %v4645 = vmul.f32 %v4640, %v4644
  %v4646 = vpack.c.bf16 %v4621, %v4621
  %v4647 = vpack.c.bf16 %v4645, %v4645
  %4648 = vmatprep.subr.bf16.mxu0 %v2783
  %4649 = vmatpush1.bf16.msra.mxu0 %v2782
  %4650 = vmatprep.subr.bf16.mxu0 %v2791
  %4651 = vmatpush1.bf16.msra.mxu0 %v2790
  %4652 = vmatprep.subr.bf16.mxu0 %v2799
  %4653 = vmatpush1.bf16.msra.mxu0 %v2798
  %4654 = vmatprep.subr.bf16.mxu0 %v2807
  %4655 = vmatpush1.bf16.msra.mxu0 %v2806
  %4656 = vmatprep.subr.bf16.mxu0 %v2815
  %4657 = vmatpush1.bf16.msra.mxu0 %v2814
  %4658 = vmatprep.subr.bf16.mxu0 %v2823
  %4659 = vmatpush1.bf16.msra.mxu0 %v2822
  %4660 = vmatprep.subr.bf16.mxu0 %v2831
  %4661 = vmatpush1.bf16.msra.mxu0 %v2830
  %4662 = vmatprep.subr.bf16.mxu0 %v2839
  %4663 = vmatpush1.bf16.msra.mxu0 %v2838
  %4664 = vmatprep.subr.bf16.mxu0 %v2847
  %4665 = vmatpush1.bf16.msra.mxu0 %v2846
  %4666 = vmatprep.subr.bf16.mxu0 %v2855
  %4667 = vmatpush1.bf16.msra.mxu0 %v2854
  %4668 = vmatprep.subr.bf16.mxu0 %v2863
  %4669 = vmatpush1.bf16.msra.mxu0 %v2862
  %4670 = vmatprep.subr.bf16.mxu0 %v2871
  %4671 = vmatpush1.bf16.msra.mxu0 %v2870
  %4672 = vmatprep.subr.bf16.mxu0 %v2879
  %4673 = vmatpush1.bf16.msra.mxu0 %v2878
  %4674 = vmatprep.subr.bf16.mxu0 %v2887
  %4675 = vmatpush1.bf16.msra.mxu0 %v2886
  %4676 = vmatprep.subr.bf16.mxu0 %v2895
  %4677 = vmatpush1.bf16.msra.mxu0 %v2894
  %4678 = vmatprep.subr.bf16.mxu0 %v2903
  %4679 = vmatpush1.bf16.msra.mxu0 %v2902
  %4680 = vmatprep.mubr.bf16.mxu0 %v4647
  %4681 = vmatmul.mubr.bf16.gmra.mrb[0].mxu0 %v4646
  %v4682 = vpop.f32.mrb[0].mxu0
  %v4683 = vadd.f32 0.0, %v4682
  %v4684 = vpop.f32.mrb[0].mxu0
  %v4685 = vadd.f32 0.0, %v4684
  %v4686 = vpop.f32.mrb[0].mxu0
  %v4687 = vpop.f32.mrb[0].mxu0
  %4688 = vdwg.mxu0
  %4689 = vmatprep.subr.bf16.mxu0 %v2785
  %4690 = vmatpush1.bf16.msra.mxu0 %v2784
  %4691 = vmatprep.subr.bf16.mxu0 %v2793
  %4692 = vmatpush1.bf16.msra.mxu0 %v2792
  %4693 = vmatprep.subr.bf16.mxu0 %v2801
  %4694 = vmatpush1.bf16.msra.mxu0 %v2800
  %4695 = vmatprep.subr.bf16.mxu0 %v2809
  %4696 = vmatpush1.bf16.msra.mxu0 %v2808
  %4697 = vmatprep.subr.bf16.mxu0 %v2817
  %4698 = vmatpush1.bf16.msra.mxu0 %v2816
  %4699 = vmatprep.subr.bf16.mxu0 %v2825
  %4700 = vmatpush1.bf16.msra.mxu0 %v2824
  %4701 = vmatprep.subr.bf16.mxu0 %v2833
  %4702 = vmatpush1.bf16.msra.mxu0 %v2832
  %4703 = vmatprep.subr.bf16.mxu0 %v2841
  %4704 = vmatpush1.bf16.msra.mxu0 %v2840
  %4705 = vmatprep.subr.bf16.mxu0 %v2849
  %4706 = vmatpush1.bf16.msra.mxu0 %v2848
  %4707 = vmatprep.subr.bf16.mxu0 %v2857
  %4708 = vmatpush1.bf16.msra.mxu0 %v2856
  %4709 = vmatprep.subr.bf16.mxu0 %v2865
  %4710 = vmatpush1.bf16.msra.mxu0 %v2864
  %4711 = vmatprep.subr.bf16.mxu0 %v2873
  %4712 = vmatpush1.bf16.msra.mxu0 %v2872
  %4713 = vmatprep.subr.bf16.mxu0 %v2881
  %4714 = vmatpush1.bf16.msra.mxu0 %v2880
  %4715 = vmatprep.subr.bf16.mxu0 %v2889
  %4716 = vmatpush1.bf16.msra.mxu0 %v2888
  %4717 = vmatprep.subr.bf16.mxu0 %v2897
  %4718 = vmatpush1.bf16.msra.mxu0 %v2896
  %4719 = vmatprep.subr.bf16.mxu0 %v2905
  %4720 = vmatpush1.bf16.msra.mxu0 %v2904
  %4721 = vmatprep.mubr.bf16.mxu0 %v4647
  %4722 = vmatmul.mubr.bf16.gmra.mrb[0].mxu0 %v4646
  %v4723 = vpop.f32.mrb[0].mxu0
  %v4724 = vadd.f32 0.0, %v4723
  %v4725 = vpop.f32.mrb[0].mxu0
  %v4726 = vadd.f32 0.0, %v4725
  %v4727 = vpop.f32.mrb[0].mxu0
  %v4728 = vpop.f32.mrb[0].mxu0
  %4729 = vdwg.mxu0
  %4730 = vmatprep.subr.bf16.mxu0 %v2787
  %4731 = vmatpush1.bf16.msra.mxu0 %v2786
  %4732 = vmatprep.subr.bf16.mxu0 %v2795
  %4733 = vmatpush1.bf16.msra.mxu0 %v2794
  %4734 = vmatprep.subr.bf16.mxu0 %v2803
  %4735 = vmatpush1.bf16.msra.mxu0 %v2802
  %4736 = vmatprep.subr.bf16.mxu0 %v2811
  %4737 = vmatpush1.bf16.msra.mxu0 %v2810
  %4738 = vmatprep.subr.bf16.mxu0 %v2819
  %4739 = vmatpush1.bf16.msra.mxu0 %v2818
  %4740 = vmatprep.subr.bf16.mxu0 %v2827
  %4741 = vmatpush1.bf16.msra.mxu0 %v2826
  %4742 = vmatprep.subr.bf16.mxu0 %v2835
  %4743 = vmatpush1.bf16.msra.mxu0 %v2834
  %4744 = vmatprep.subr.bf16.mxu0 %v2843
  %4745 = vmatpush1.bf16.msra.mxu0 %v2842
  %4746 = vmatprep.subr.bf16.mxu0 %v2851
  %4747 = vmatpush1.bf16.msra.mxu0 %v2850
  %4748 = vmatprep.subr.bf16.mxu0 %v2859
  %4749 = vmatpush1.bf16.msra.mxu0 %v2858
  %4750 = vmatprep.subr.bf16.mxu0 %v2867
  %4751 = vmatpush1.bf16.msra.mxu0 %v2866
  %4752 = vmatprep.subr.bf16.mxu0 %v2875
  %4753 = vmatpush1.bf16.msra.mxu0 %v2874
  %4754 = vmatprep.subr.bf16.mxu0 %v2883
  %4755 = vmatpush1.bf16.msra.mxu0 %v2882
  %4756 = vmatprep.subr.bf16.mxu0 %v2891
  %4757 = vmatpush1.bf16.msra.mxu0 %v2890
  %4758 = vmatprep.subr.bf16.mxu0 %v2899
  %4759 = vmatpush1.bf16.msra.mxu0 %v2898
  %4760 = vmatprep.subr.bf16.mxu0 %v2907
  %4761 = vmatpush1.bf16.msra.mxu0 %v2906
  %4762 = vmatprep.mubr.bf16.mxu0 %v4647
  %4763 = vmatmul.mubr.bf16.gmra.mrb[0].mxu0 %v4646
  %v4764 = vpop.f32.mrb[0].mxu0
  %v4765 = vadd.f32 0.0, %v4764
  %v4766 = vpop.f32.mrb[0].mxu0
  %v4767 = vadd.f32 0.0, %v4766
  %v4768 = vpop.f32.mrb[0].mxu0
  %v4769 = vpop.f32.mrb[0].mxu0
  %4770 = vdwg.mxu0
  %4771 = vmatprep.subr.bf16.mxu0 %v2789
  %4772 = vmatpush1.bf16.msra.mxu0 %v2788
  %4773 = vmatprep.subr.bf16.mxu0 %v2797
  %4774 = vmatpush1.bf16.msra.mxu0 %v2796
  %4775 = vmatprep.subr.bf16.mxu0 %v2805
  %4776 = vmatpush1.bf16.msra.mxu0 %v2804
  %4777 = vmatprep.subr.bf16.mxu0 %v2813
  %4778 = vmatpush1.bf16.msra.mxu0 %v2812
  %4779 = vmatprep.subr.bf16.mxu0 %v2821
  %4780 = vmatpush1.bf16.msra.mxu0 %v2820
  %4781 = vmatprep.subr.bf16.mxu0 %v2829
  %4782 = vmatpush1.bf16.msra.mxu0 %v2828
  %4783 = vmatprep.subr.bf16.mxu0 %v2837
  %4784 = vmatpush1.bf16.msra.mxu0 %v2836
  %4785 = vmatprep.subr.bf16.mxu0 %v2845
  %4786 = vmatpush1.bf16.msra.mxu0 %v2844
  %4787 = vmatprep.subr.bf16.mxu0 %v2853
  %4788 = vmatpush1.bf16.msra.mxu0 %v2852
  %4789 = vmatprep.subr.bf16.mxu0 %v2861
  %4790 = vmatpush1.bf16.msra.mxu0 %v2860
  %4791 = vmatprep.subr.bf16.mxu0 %v2869
  %4792 = vmatpush1.bf16.msra.mxu0 %v2868
  %4793 = vmatprep.subr.bf16.mxu0 %v2877
  %4794 = vmatpush1.bf16.msra.mxu0 %v2876
  %4795 = vmatprep.subr.bf16.mxu0 %v2885
  %4796 = vmatpush1.bf16.msra.mxu0 %v2884
  %4797 = vmatprep.subr.bf16.mxu0 %v2893
  %4798 = vmatpush1.bf16.msra.mxu0 %v2892
  %4799 = vmatprep.subr.bf16.mxu0 %v2901
  %4800 = vmatpush1.bf16.msra.mxu0 %v2900
  %4801 = vmatprep.subr.bf16.mxu0 %v2909
  %4802 = vmatpush1.bf16.msra.mxu0 %v2908
  %4803 = vmatprep.mubr.bf16.mxu0 %v4647
  %4804 = vmatmul.mubr.bf16.gmra.mrb[0].mxu0 %v4646
  %v4805 = vpop.f32.mrb[0].mxu0
  %v4806 = vadd.f32 0.0, %v4805
  %v4807 = vpop.f32.mrb[0].mxu0
  %v4808 = vadd.f32 0.0, %v4807
  %v4809 = vpop.f32.mrb[0].mxu0
  %v4810 = vpop.f32.mrb[0].mxu0
  %4811 = vdwg.mxu0
  %v4812 = vld [vmem:[#allocation2 + $0x1c0] sm:$0xff]
  %v4813 = vld [vmem:[#allocation2 + $0x1c8] sm:$0xff]
  %v4814 = vld [vmem:[#allocation2 + $0x1d0] sm:$0xff]
  %v4815 = vld [vmem:[#allocation2 + $0x1d8] sm:$0xff]
  %v4816 = vadd.f32 %v4812, %v4683
  %v4817 = vadd.f32 %v4813, %v4685
  %v4818 = vadd.f32 %v4814, %v4724
  %v4819 = vadd.f32 %v4815, %v4726
  %v4820 = vld [vmem:[#allocation2 + $0x20] sm:$0xff]
  %v4821 = vld [vmem:[#allocation2 + $0x28] sm:$0xff]
  %v4822 = vld [vmem:[#allocation2 + $0x30] sm:$0xff]
  %v4823 = vld [vmem:[#allocation2 + $0x38] sm:$0xff]
  %v4824 = vadd.f32 %v4820, %v4765
  %v4825 = vadd.f32 %v4821, %v4767
  %v4826 = vadd.f32 %v4822, %v4806
  %v4827 = vadd.f32 %v4823, %v4808
  %v4828 = vsub.f32 0.0, %v4816
  %v4829 = vmul.f32 %v4828, 1.442695
  %v4830 = vpow.pop %v4829
  %v4831 = vadd.f32 %v4830, 1.0
  %v4832 = vrcp.pop %v4831
  %v4833 = vmul.f32 1.0, %v4832
  %v4834 = vsub.f32 0.0, %v4817
  %v4835 = vmul.f32 %v4834, 1.442695
  %v4836 = vpow.pop %v4835
  %v4837 = vadd.f32 %v4836, 1.0
  %v4838 = vrcp.pop %v4837
  %v4839 = vmul.f32 1.0, %v4838
  %v4840 = vtanh.pop %v4818
  %v4841 = vsub.f32 0.0, %v4819
  %v4842 = vmul.f32 %v4841, 1.442695
  %v4843 = vpow.pop %v4842
  %v4844 = vadd.f32 %v4843, 1.0
  %v4845 = vrcp.pop %v4844
  %v4846 = vmul.f32 1.0, %v4845
  %v4847 = vmul.f32 %v4839, %v4619
  %v4848 = vmul.f32 %v4833, %v4840
  %v4849 = vadd.f32 %v4847, %v4848
  %v4850 = vtanh.pop %v4849
  %v4851 = vmul.f32 %v4846, %v4850
  %v4852 = vsub.f32 0.0, %v4824
  %v4853 = vmul.f32 %v4852, 1.442695
  %v4854 = vpow.pop %v4853
  %v4855 = vadd.f32 %v4854, 1.0
  %v4856 = vrcp.pop %v4855
  %v4857 = vmul.f32 1.0, %v4856
  %v4858 = vsub.f32 0.0, %v4825
  %v4859 = vmul.f32 %v4858, 1.442695
  %v4860 = vpow.pop %v4859
  %v4861 = vadd.f32 %v4860, 1.0
  %v4862 = vrcp.pop %v4861
  %v4863 = vmul.f32 1.0, %v4862
  %v4864 = vtanh.pop %v4826
  %v4865 = vsub.f32 0.0, %v4827
  %v4866 = vmul.f32 %v4865, 1.442695
  %v4867 = vpow.pop %v4866
  %v4868 = vadd.f32 %v4867, 1.0
  %v4869 = vrcp.pop %v4868
  %v4870 = vmul.f32 1.0, %v4869
  %v4871 = vmul.f32 %v4863, %v4643
  %v4872 = vmul.f32 %v4857, %v4864
  %v4873 = vadd.f32 %v4871, %v4872
  %v4874 = vtanh.pop %v4873
  %v4875 = vmul.f32 %v4870, %v4874
  %4876 = vst [vmem:[%s20] sm:$0xff] %v4851
  %4877 = vst [vmem:[%s20 + $0x8] sm:$0xff] %v4875
  %v4878 = vpack.c.bf16 %v4851, %v4851
  %v4879 = vpack.c.bf16 %v4875, %v4875
  %v4880 = vld [vmem:[%s16] sm:$0xf]
  %v4881 = vld [vmem:[%s16 + $0x4] sm:$0xf]
  %v4882 = vld [vmem:[%s16 + $0x8] sm:$0xf]
  %v4883 = vld [vmem:[%s16 + $0xc] sm:$0xf]
  %v4884 = vld [vmem:[%s16 + $0x10] sm:$0xf]
  %v4885 = vld [vmem:[%s16 + $0x14] sm:$0xf]
  %v4886 = vld [vmem:[%s16 + $0x18] sm:$0xf]
  %v4887 = vld [vmem:[%s16 + $0x1c] sm:$0xf]
  %v4888 = vld [vmem:[%s16 + $0x20] sm:$0xf]
  %v4889 = vld [vmem:[%s16 + $0x24] sm:$0xf]
  %v4890 = vld [vmem:[%s16 + $0x28] sm:$0xf]
  %v4891 = vld [vmem:[%s16 + $0x2c] sm:$0xf]
  %v4892 = vld [vmem:[%s16 + $0x30] sm:$0xf]
  %v4893 = vld [vmem:[%s16 + $0x34] sm:$0xf]
  %v4894 = vld [vmem:[%s16 + $0x38] sm:$0xf]
  %v4895 = vld [vmem:[%s16 + $0x3c] sm:$0xf]
  %v4896 = vld [vmem:[%s16 + $0x40] sm:$0xf]
  %v4897 = vld [vmem:[%s16 + $0x44] sm:$0xf]
  %v4898 = vld [vmem:[%s16 + $0x48] sm:$0xf]
  %v4899 = vld [vmem:[%s16 + $0x4c] sm:$0xf]
  %v4900 = vld [vmem:[%s16 + $0x50] sm:$0xf]
  %v4901 = vld [vmem:[%s16 + $0x54] sm:$0xf]
  %v4902 = vld [vmem:[%s16 + $0x58] sm:$0xf]
  %v4903 = vld [vmem:[%s16 + $0x5c] sm:$0xf]
  %v4904 = vld [vmem:[%s16 + $0x60] sm:$0xf]
  %v4905 = vld [vmem:[%s16 + $0x64] sm:$0xf]
  %v4906 = vld [vmem:[%s16 + $0x68] sm:$0xf]
  %v4907 = vld [vmem:[%s16 + $0x6c] sm:$0xf]
  %v4908 = vld [vmem:[%s16 + $0x70] sm:$0xf]
  %v4909 = vld [vmem:[%s16 + $0x74] sm:$0xf]
  %v4910 = vld [vmem:[%s16 + $0x78] sm:$0xf]
  %v4911 = vld [vmem:[%s16 + $0x7c] sm:$0xf]
  %v4912 = vld [vmem:[%s17] sm:$0x1]
  %v4914 = vlaneseq
  %v4915 = vshrl.u32 %v4914, 7
  %v4916 = vsub.s32 0, %v4915
  %v4917 = vrot.slane %v4912, %v4916
  %v4951 = vunpack.c.l.b16 %v4880
  %v4952 = vunpack.c.l.b16 %v4881
  %v4953 = vunpack.c.l.b16 %v4882
  %v4954 = vunpack.c.l.b16 %v4883
  %v4955 = vunpack.c.l.b16 %v4884
  %v4956 = vunpack.c.l.b16 %v4885
  %v4957 = vunpack.c.l.b16 %v4886
  %v4958 = vunpack.c.l.b16 %v4887
  %v4959 = vunpack.c.l.b16 %v4888
  %v4960 = vunpack.c.l.b16 %v4889
  %v4961 = vunpack.c.l.b16 %v4890
  %v4962 = vunpack.c.l.b16 %v4891
  %v4963 = vunpack.c.l.b16 %v4892
  %v4964 = vunpack.c.l.b16 %v4893
  %v4965 = vunpack.c.l.b16 %v4894
  %v4966 = vunpack.c.l.b16 %v4895
  %v4967 = vunpack.c.l.b16 %v4896
  %v4968 = vunpack.c.l.b16 %v4897
  %v4969 = vunpack.c.l.b16 %v4898
  %v4970 = vunpack.c.l.b16 %v4899
  %v4971 = vunpack.c.l.b16 %v4900
  %v4972 = vunpack.c.l.b16 %v4901
  %v4973 = vunpack.c.l.b16 %v4902
  %v4974 = vunpack.c.l.b16 %v4903
  %v4975 = vunpack.c.l.b16 %v4904
  %v4976 = vunpack.c.l.b16 %v4905
  %v4977 = vunpack.c.l.b16 %v4906
  %v4978 = vunpack.c.l.b16 %v4907
  %v4979 = vunpack.c.l.b16 %v4908
  %v4980 = vunpack.c.l.b16 %v4909
  %v4981 = vunpack.c.l.b16 %v4910
  %v4982 = vunpack.c.l.b16 %v4911
  %v4983 = vpack.c.b16 %v4952, %v4951
  %v4984 = vpack.c.b16 %v4954, %v4953
  %v4985 = vpack.c.b16 %v4956, %v4955
  %v4986 = vpack.c.b16 %v4958, %v4957
  %v4987 = vpack.c.b16 %v4960, %v4959
  %v4988 = vpack.c.b16 %v4962, %v4961
  %v4989 = vpack.c.b16 %v4964, %v4963
  %v4990 = vpack.c.b16 %v4966, %v4965
  %v4991 = vpack.c.b16 %v4968, %v4967
  %v4992 = vpack.c.b16 %v4970, %v4969
  %v4993 = vpack.c.b16 %v4972, %v4971
  %v4994 = vpack.c.b16 %v4974, %v4973
  %v4995 = vpack.c.b16 %v4976, %v4975
  %v4996 = vpack.c.b16 %v4978, %v4977
  %v4997 = vpack.c.b16 %v4980, %v4979
  %v4998 = vpack.c.b16 %v4982, %v4981
  %5015 = vmatprep.subr.bf16.mxu0 0
  %5016 = vmatpush1.bf16.msra.mxu0 %v4983
  %5017 = vmatprep.subr.bf16.mxu0 0
  %5018 = vmatpush1.bf16.msra.mxu0 %v4984
  %5019 = vmatprep.subr.bf16.mxu0 0
  %5020 = vmatpush1.bf16.msra.mxu0 %v4985
  %5021 = vmatprep.subr.bf16.mxu0 0
  %5022 = vmatpush1.bf16.msra.mxu0 %v4986
  %5023 = vmatprep.subr.bf16.mxu0 0
  %5024 = vmatpush1.bf16.msra.mxu0 %v4987
  %5025 = vmatprep.subr.bf16.mxu0 0
  %5026 = vmatpush1.bf16.msra.mxu0 %v4988
  %5027 = vmatprep.subr.bf16.mxu0 0
  %5028 = vmatpush1.bf16.msra.mxu0 %v4989
  %5029 = vmatprep.subr.bf16.mxu0 0
  %5030 = vmatpush1.bf16.msra.mxu0 %v4990
  %5031 = vmatprep.subr.bf16.mxu0 0
  %5032 = vmatpush1.bf16.msra.mxu0 %v4991
  %5033 = vmatprep.subr.bf16.mxu0 0
  %5034 = vmatpush1.bf16.msra.mxu0 %v4992
  %5035 = vmatprep.subr.bf16.mxu0 0
  %5036 = vmatpush1.bf16.msra.mxu0 %v4993
  %5037 = vmatprep.subr.bf16.mxu0 0
  %5038 = vmatpush1.bf16.msra.mxu0 %v4994
  %5039 = vmatprep.subr.bf16.mxu0 0
  %5040 = vmatpush1.bf16.msra.mxu0 %v4995
  %5041 = vmatprep.subr.bf16.mxu0 0
  %5042 = vmatpush1.bf16.msra.mxu0 %v4996
  %5043 = vmatprep.subr.bf16.mxu0 0
  %5044 = vmatpush1.bf16.msra.mxu0 %v4997
  %5045 = vmatprep.subr.bf16.mxu0 0
  %5046 = vmatpush1.bf16.msra.mxu0 %v4998
  %5047 = vmatprep.mubr.bf16.mxu0 %v4879
  %5048 = vmatmul.mubr.bf16.gmra.mrb[0].mxu0 %v4878
  %v5049 = vpop.f32.mrb[0].mxu0
  %v5050 = vadd.f32 %v4917, %v5049
  %v5051 = vpop.f32.mrb[0].mxu0
  %v5052 = vpop.f32.mrb[0].mxu0
  %v5053 = vpop.f32.mrb[0].mxu0
  %5054 = vdwg.mxu0
  %v5055 = vmax.f32 %v5050, 0.0
  %v5056 = vpack.c.bf16 %v5055, %v5055
  %v5057 = vld [vmem:[%s18] sm:$0xf]
  %v5058 = vld [vmem:[%s18 + $0x4] sm:$0xf]
  %v5059 = vld [vmem:[%s18 + $0x8] sm:$0xf]
  %v5060 = vld [vmem:[%s18 + $0xc] sm:$0xf]
  %v5061 = vld [vmem:[%s18 + $0x10] sm:$0xf]
  %v5062 = vld [vmem:[%s18 + $0x14] sm:$0xf]
  %v5063 = vld [vmem:[%s18 + $0x18] sm:$0xf]
  %v5064 = vld [vmem:[%s18 + $0x1c] sm:$0xf]
  %v5065 = vld [vmem:[%s18 + $0x20] sm:$0xf]
  %v5066 = vld [vmem:[%s18 + $0x24] sm:$0xf]
  %v5067 = vld [vmem:[%s18 + $0x28] sm:$0xf]
  %v5068 = vld [vmem:[%s18 + $0x2c] sm:$0xf]
  %v5069 = vld [vmem:[%s18 + $0x30] sm:$0xf]
  %v5070 = vld [vmem:[%s18 + $0x34] sm:$0xf]
  %v5071 = vld [vmem:[%s18 + $0x38] sm:$0xf]
  %v5072 = vld [vmem:[%s18 + $0x3c] sm:$0xf]
  %v5073 = vld [vmem:[%s19] sm:$0x1]
  %v5075 = vlaneseq
  %v5076 = vshrl.u32 %v5075, 7
  %v5077 = vsub.s32 0, %v5076
  %v5078 = vrot.slane %v5073, %v5077
  %v5096 = vunpack.c.l.b16 %v5057
  %v5097 = vunpack.c.l.b16 %v5058
  %v5098 = vunpack.c.l.b16 %v5059
  %v5099 = vunpack.c.l.b16 %v5060
  %v5100 = vunpack.c.l.b16 %v5061
  %v5101 = vunpack.c.l.b16 %v5062
  %v5102 = vunpack.c.l.b16 %v5063
  %v5103 = vunpack.c.l.b16 %v5064
  %v5104 = vunpack.c.l.b16 %v5065
  %v5105 = vunpack.c.l.b16 %v5066
  %v5106 = vunpack.c.l.b16 %v5067
  %v5107 = vunpack.c.l.b16 %v5068
  %v5108 = vunpack.c.l.b16 %v5069
  %v5109 = vunpack.c.l.b16 %v5070
  %v5110 = vunpack.c.l.b16 %v5071
  %v5111 = vunpack.c.l.b16 %v5072
  %v5112 = vpack.c.b16 %v5097, %v5096
  %v5113 = vpack.c.b16 %v5099, %v5098
  %v5114 = vpack.c.b16 %v5101, %v5100
  %v5115 = vpack.c.b16 %v5103, %v5102
  %v5116 = vpack.c.b16 %v5105, %v5104
  %v5117 = vpack.c.b16 %v5107, %v5106
  %v5118 = vpack.c.b16 %v5109, %v5108
  %v5119 = vpack.c.b16 %v5111, %v5110
  %5128 = vmatprep.subr.bf16.mxu0 0
  %5129 = vmatpush1.bf16.msra.mxu0 %v5112
  %5130 = vmatprep.subr.bf16.mxu0 0
  %5131 = vmatpush1.bf16.msra.mxu0 %v5113
  %5132 = vmatprep.subr.bf16.mxu0 0
  %5133 = vmatpush1.bf16.msra.mxu0 %v5114
  %5134 = vmatprep.subr.bf16.mxu0 0
  %5135 = vmatpush1.bf16.msra.mxu0 %v5115
  %5136 = vmatprep.subr.bf16.mxu0 0
  %5137 = vmatpush1.bf16.msra.mxu0 %v5116
  %5138 = vmatprep.subr.bf16.mxu0 0
  %5139 = vmatpush1.bf16.msra.mxu0 %v5117
  %5140 = vmatprep.subr.bf16.mxu0 0
  %5141 = vmatpush1.bf16.msra.mxu0 %v5118
  %5142 = vmatprep.subr.bf16.mxu0 0
  %5143 = vmatpush1.bf16.msra.mxu0 %v5119
  %5144 = vmatprep.subr.bf16.mxu0 0
  %5145 = vmatpush1.bf16.msra.mxu0 0
  %5146 = vmatprep.subr.bf16.mxu0 0
  %5147 = vmatpush1.bf16.msra.mxu0 0
  %5148 = vmatprep.subr.bf16.mxu0 0
  %5149 = vmatpush1.bf16.msra.mxu0 0
  %5150 = vmatprep.subr.bf16.mxu0 0
  %5151 = vmatpush1.bf16.msra.mxu0 0
  %5152 = vmatprep.subr.bf16.mxu0 0
  %5153 = vmatpush1.bf16.msra.mxu0 0
  %5154 = vmatprep.subr.bf16.mxu0 0
  %5155 = vmatpush1.bf16.msra.mxu0 0
  %5156 = vmatprep.subr.bf16.mxu0 0
  %5157 = vmatpush1.bf16.msra.mxu0 0
  %5158 = vmatprep.subr.bf16.mxu0 0
  %5159 = vmatpush1.bf16.msra.mxu0 0
  %5160 = vmatprep.mubr.bf16.mxu0 0
  %5161 = vmatmul.mubr.bf16.gmra.mrb[0].mxu0 %v5056
  %v5162 = vpop.f32.mrb[0].mxu0
  %v5163 = vadd.f32 %v5078, %v5162
  %v5164 = vpop.f32.mrb[0].mxu0
  %v5165 = vpop.f32.mrb[0].mxu0
  %v5166 = vpop.f32.mrb[0].mxu0
  %5167 = vdwg.mxu0
  %5168 = vmax.xlane.f32.xlu0 %v5163
  %v5169 = vpop.xlane.xlu0 %5168
  %v5170 = vsub.f32 %v5163, %v5169
  %v5171 = vmul.f32 %v5170, 1.442695
  %v5172 = vpow.pop %v5171
  %5173 = vadd.xlane.f32.xlu0 %v5172
  %v5174 = vpop.xlane.xlu0 %5173
  %v5175 = vrcp.pop %v5174
  %v5176 = vmul.f32 %v5172, %v5175
  %5177 = vst [vmem:[%s21] sm:$0xff] %v5176
  // Predicated region
  $region82: #{cnn_bilstm_forward.1} parent=0 // pred_check
    _
  $region83: #{cnn_bilstm_forward.1} parent=0 // pred_check_branch
    %5179 = sbr.rel (0) target = $region85
  $region84: #{cnn_bilstm_forward.1} parent=0 // pred_region
    _
  $region85: #{cnn_bilstm_forward.1} parent=0 // pred_fallthru
    _
  // Predicated region
  $region86: #{cnn_bilstm_forward.1} parent=0 // pred_check
    _
  $region87: #{cnn_bilstm_forward.1} parent=0 // pred_check_branch
    %5181 = sbr.rel (0) target = $region89
  $region88: #{cnn_bilstm_forward.1} parent=0 // pred_region
    _
  $region89: #{cnn_bilstm_forward.1} parent=0 // pred_fallthru
    _
  // Predicated region
  $region90: #{cnn_bilstm_forward.1} parent=0 // pred_check
    _
  $region91: #{cnn_bilstm_forward.1} parent=0 // pred_check_branch
    %5183 = sbr.rel (0) target = $region93
  $region92: #{cnn_bilstm_forward.1} parent=0 // pred_region
    _
  $region93: #{cnn_bilstm_forward.1} parent=0 // pred_fallthru
    _
  // Predicated region
  $region94: #{cnn_bilstm_forward.1} parent=0 // pred_check
    _
  $region95: #{cnn_bilstm_forward.1} parent=0 // pred_check_branch
    %5185 = sbr.rel (0) target = $region97
  $region96: #{cnn_bilstm_forward.1} parent=0 // pred_region
    _
  $region97: #{cnn_bilstm_forward.1} parent=0 // pred_fallthru
    _

</llo_original>
